<compile_context>
chip_gen: v5e
topology: v5e:2x2
jax: 0.10.0
libtpu: 0.0.40
codegen_flags: <defaults>
</compile_context>

<pallas_src>
import functools

import jax
import jax.numpy as jnp
from jax import lax
from jax.experimental import pallas as pl
from jax.experimental.pallas import tpu as pltpu


# ----------------------------- Pallas kernels -----------------------------

def _full_spec(shape):
    nd = len(shape)
    return pl.BlockSpec(shape, lambda i, _nd=nd: (0,) * _nd)


def _decoder_layer_kernel(
    x_ref, mem_ref, smask_ref, cmask_ref,
    wqkv_s_ref, bqkv_s_ref, wo_s_ref, bo_s_ref,
    wq_c_ref, bq_c_ref, wkv_c_ref, bkv_c_ref, wo_c_ref, bo_c_ref,
    w1_ref, fb1_ref, w2_ref, fb2_ref,
    ln1_g_ref, ln1_b_ref, ln2_g_ref, ln2_b_ref, ln3_g_ref, ln3_b_ref,
    o_ref, *, n_heads):
    """One whole post-norm nn.TransformerDecoderLayer on a (R, E) slab."""
    E = x_ref.shape[1]
    hd = E // n_heads
    scale = 1.0 / float(hd) ** 0.5
    w_dtype = wqkv_s_ref.dtype

    x = x_ref[...].astype(jnp.float32)            # (R, E)
    mem = mem_ref[...].astype(w_dtype)            # (Rm, E)
    smask = smask_ref[...]                        # (R, R)  additive 0 / -1e30
    cmask = cmask_ref[...]                        # (R, Rm) additive 0 / -1e30

    def layer_norm(y, g_ref, b_ref):
        mu = jnp.mean(y, axis=-1, keepdims=True)
        var = jnp.mean(jnp.square(y - mu), axis=-1, keepdims=True)
        return ((y - mu) * lax.rsqrt(var + 1e-5)
                * g_ref[...].astype(jnp.float32)
                + b_ref[...].astype(jnp.float32))

    def mha(q, k, v, mask_bias, wo_ref_, bo_ref_):
        # q: (Rq, E) f32, k/v: (Rk, E) f32. All heads + all batch elements in
        # one pass per head; the additive mask restricts each query row to key
        # rows of the same batch column ("block diagonal" attention).
        heads = []
        for h in range(n_heads):                  # H small, unrolled
            sl = slice(h * hd, (h + 1) * hd)
            qh, kh, vh = q[:, sl], k[:, sl], v[:, sl]
            s = lax.dot_general(qh, kh, (((1,), (1,)), ((), ())),
                                preferred_element_type=jnp.float32)
            s = s * scale + mask_bias
            s = s - jnp.max(s, axis=-1, keepdims=True)
            p = jnp.exp(s)
            p = p * pl.reciprocal(jnp.sum(p, axis=-1, keepdims=True),
                                  approx=True)
            heads.append(jnp.dot(p, vh, preferred_element_type=jnp.float32))
        o = jnp.concatenate(heads, axis=-1)       # (Rq, E) lane-dense
        return (jnp.dot(o.astype(w_dtype), wo_ref_[...],
                        preferred_element_type=jnp.float32)
                + bo_ref_[...].astype(jnp.float32))

    # ---- self attention (fused QKV projection) + residual + LN1
    qkv = (jnp.dot(x.astype(w_dtype), wqkv_s_ref[...],
                   preferred_element_type=jnp.float32)
           + bqkv_s_ref[...].astype(jnp.float32))            # (R, 3E)
    sa = mha(qkv[:, :E], qkv[:, E:2 * E], qkv[:, 2 * E:],
             smask, wo_s_ref, bo_s_ref)
    x = layer_norm(x + sa, ln1_g_ref, ln1_b_ref)

    # ---- cross attention (fused KV projection) + residual + LN2
    qc = (jnp.dot(x.astype(w_dtype), wq_c_ref[...],
                  preferred_element_type=jnp.float32)
          + bq_c_ref[...].astype(jnp.float32))               # (R, E)
    kv = (jnp.dot(mem, wkv_c_ref[...],
                  preferred_element_type=jnp.float32)
          + bkv_c_ref[...].astype(jnp.float32))              # (Rm, 2E)
    ca = mha(qc, kv[:, :E], kv[:, E:], cmask, wo_c_ref, bo_c_ref)
    x = layer_norm(x + ca, ln2_g_ref, ln2_b_ref)

    # ---- FFN (ReLU) + residual + LN3
    h1 = jnp.maximum(
        jnp.dot(x.astype(w_dtype), w1_ref[...],
                preferred_element_type=jnp.float32)
        + fb1_ref[...].astype(jnp.float32), 0.0)
    ff = (jnp.dot(h1.astype(w_dtype), w2_ref[...],
                  preferred_element_type=jnp.float32)
          + fb2_ref[...].astype(jnp.float32))
    x = layer_norm(x + ff, ln3_g_ref, ln3_b_ref)

    o_ref[...] = x.astype(o_ref.dtype)


def fused_decoder_layer(x2d, mem2d, smask, cmask, lp, n_heads):
    R, E = x2d.shape
    operands = [
        x2d, mem2d, smask, cmask,
        lp["wqkv_s"], lp["bqkv_s"], lp["wo_s"], lp["bo_s"],
        lp["wq_c"], lp["bq_c"], lp["wkv_c"], lp["bkv_c"], lp["wo_c"], lp["bo_c"],
        lp["w1"], lp["b1"], lp["w2"], lp["b2"],
        lp["ln1_g"], lp["ln1_b"], lp["ln2_g"], lp["ln2_b"],
        lp["ln3_g"], lp["ln3_b"],
    ]
    return pl.pallas_call(
        functools.partial(_decoder_layer_kernel, n_heads=n_heads),
        out_shape=jax.ShapeDtypeStruct((R, E), x2d.dtype),
        grid=(1,),
        in_specs=[_full_spec(a.shape) for a in operands],
        out_specs=pl.BlockSpec((R, E), lambda i: (0, 0)),
        compiler_params=pltpu.CompilerParams(
            dimension_semantics=("arbitrary",)),
    )(*operands)


def _linear_kernel(x_ref, w_ref, b_ref, o_ref):
    acc = jnp.dot(x_ref[...].astype(w_ref.dtype), w_ref[...],
                  preferred_element_type=jnp.float32)
    o_ref[...] = (acc + b_ref[...].astype(jnp.float32)).astype(o_ref.dtype)


def linear(x2d, w, b, *, block_rows=256):
    # Row-tiled ("parallel") linear; at toy sizes this is a single block.
    R, K = x2d.shape
    N = w.shape[1]
    br = min(block_rows, R)
    return pl.pallas_call(
        _linear_kernel,
        out_shape=jax.ShapeDtypeStruct((R, N), x2d.dtype),
        grid=(pl.cdiv(R, br),),
        in_specs=[pl.BlockSpec((br, K), lambda i: (i, 0)),
                  pl.BlockSpec((K, N), lambda i: (0, 0)),
                  pl.BlockSpec((1, N), lambda i: (0, 0))],
        out_specs=pl.BlockSpec((br, N), lambda i: (i, 0)),
        compiler_params=pltpu.CompilerParams(
            dimension_semantics=("parallel",)),
    )(x2d, w, b)


# --------------------------- Model (glue in JAX) ---------------------------

def _batch_mask_bias(rows, cols, n_batch):
    # Row r belongs to batch column r % n_batch (seq-major flattening).
    qb = jnp.arange(rows, dtype=jnp.int32) % n_batch
    kb = jnp.arange(cols, dtype=jnp.int32) % n_batch
    ok = qb[:, None] == kb[None, :]
    return jnp.where(ok, 0.0, -1e30).astype(jnp.float32)


def transformer_decoder_forward(tgt_tokens, memory, params, n_heads):
    B, T = tgt_tokens.shape
    E = params["embedding"].shape[1]

    # Embedding gather + positional add (glue; no clean Pallas gather needed
    # at this size).
    x = jnp.take(params["embedding"], tgt_tokens, axis=0) + params["pos"][:, :T]
    # self.dropout(...) -> identity (eval mode)

    # batch_first=False semantics: axis0 (=B) is sequence, axis1 (=T) is batch.
    # Flatten to a lane-dense 2D slab (free contiguous view); per-batch
    # attention locality is enforced inside the fused kernel by an additive
    # block-diagonal mask.
    S, Tm = memory.shape[0], memory.shape[1]
    R, Rm = B * T, S * Tm
    x2d = x.reshape(R, E)
    mem2d = memory.reshape(Rm, E)
    smask = _batch_mask_bias(R, R, T)
    cmask = _batch_mask_bias(R, Rm, Tm)

    for lp in params["layers"]:
        x2d = fused_decoder_layer(x2d, mem2d, smask, cmask, lp, n_heads)

    out = linear(x2d, params["fc_w"], params["fc_b"])
    return out.reshape(B, T, -1)


# ------------------------------ Param init --------------------------------

def init_params(key, output_dim, emb_dim, n_layers, pf_dim,
                param_dtype=jnp.float32):
    # param_dtype=jnp.bfloat16 halves weight bytes on v6e/v7x (f32 accumulate
    # in-kernel); default f32 keeps exact reference semantics.
    E = emb_dim

    def nrm(k, shape, scale=0.02):
        return (scale * jax.random.normal(k, shape, dtype=jnp.float32)
                ).astype(param_dtype)

    k_emb, k_pos, k_fc, k_layers = jax.random.split(key, 4)
    params = {
        "embedding": jax.random.normal(k_emb, (output_dim, E),
                                       dtype=jnp.float32),   # nn.Embedding ~ N(0,1)
        "pos": jax.random.normal(k_pos, (1, 1000, E),
                                 dtype=jnp.float32),          # torch.randn
        "fc_w": nrm(k_fc, (E, output_dim)),
        "fc_b": jnp.zeros((1, output_dim), jnp.float32),
        "layers": [],
    }
    for lk in jax.random.split(k_layers, n_layers):
        ks = jax.random.split(lk, 7)
        params["layers"].append({
            # self-attention: fused QKV projection
            "wqkv_s": nrm(ks[0], (E, 3 * E)),
            "bqkv_s": jnp.zeros((1, 3 * E), jnp.float32),
            "wo_s": nrm(ks[1], (E, E)),
            "bo_s": jnp.zeros((1, E), jnp.float32),
            # cross-attention: Q from x, fused KV from memory
            "wq_c": nrm(ks[2], (E, E)),
            "bq_c": jnp.zeros((1, E), jnp.float32),
            "wkv_c": nrm(ks[3], (E, 2 * E)),
            "bkv_c": jnp.zeros((1, 2 * E), jnp.float32),
            "wo_c": nrm(ks[4], (E, E)),
            "bo_c": jnp.zeros((1, E), jnp.float32),
            # FFN
            "w1": nrm(ks[5], (E, pf_dim)),
            "b1": jnp.zeros((1, pf_dim), jnp.float32),
            "w2": nrm(ks[6], (pf_dim, E)),
            "b2": jnp.zeros((1, E), jnp.float32),
            # layer norms (math kept f32)
            "ln1_g": jnp.ones((1, E), jnp.float32),
            "ln1_b": jnp.zeros((1, E), jnp.float32),
            "ln2_g": jnp.ones((1, E), jnp.float32),
            "ln2_b": jnp.zeros((1, E), jnp.float32),
            "ln3_g": jnp.ones((1, E), jnp.float32),
            "ln3_b": jnp.zeros((1, E), jnp.float32),
        })
    return params


# --------------------------------- Main ------------------------------------

if __name__ == "__main__":
    output_dim, emb_dim, n_heads, n_layers, pf_dim = 50, 32, 4, 2, 64
    B, T = 2, 8

    key = jax.random.PRNGKey(0)
    k_par, k_tok, k_mem = jax.random.split(key, 3)

    params = init_params(k_par, output_dim, emb_dim, n_layers, pf_dim)
    tgt = jax.random.randint(k_tok, (B, T), 0, output_dim, dtype=jnp.int32)
    memory = jax.random.normal(k_mem, (B, T, emb_dim), dtype=jnp.float32)

    fwd = jax.jit(functools.partial(transformer_decoder_forward,
                                    n_heads=n_heads))
    out = fwd(tgt, memory, params)
    out = jax.block_until_ready(out)

    assert out.shape == (B, T, output_dim), out.shape
    assert jnp.all(jnp.isfinite(out))
    print("KERNEL_OK")
</pallas_src>

<mosaic_0001>
module attributes {stable_mosaic.version = 11 : i64} {
  func.func @_linear_kernel(%arg0: i32, %arg1: memref<16x32xf32, #tpu.memory_space<vmem>>, %arg2: memref<32x50xf32, #tpu.memory_space<vmem>>, %arg3: memref<1x50xf32, #tpu.memory_space<vmem>>, %arg4: memref<16x50xf32, #tpu.memory_space<vmem>>) attributes {dimension_semantics = [#tpu.dimension_semantics<parallel>], iteration_bounds = array<i64: 1>, scalar_prefetch = 0 : i64, scratch_operands = 0 : i64, tpu.core_type = #tpu.core_type<tc>, window_params = [{transform_indices = @transform_0, window_bounds = array<i64: 16, 32>}, {pipeline_mode = #tpu.pipeline_mode<synchronous>, transform_indices = @transform_1, window_bounds = array<i64: 32, 50>}, {pipeline_mode = #tpu.pipeline_mode<synchronous>, transform_indices = @transform_2, window_bounds = array<i64: 1, 50>}, {transform_indices = @transform_3, window_bounds = array<i64: 16, 50>}]} {
    %c0 = arith.constant 0 : index
    %c0_0 = arith.constant 0 : index
    %0 = vector.load %arg1[%c0, %c0_0] : memref<16x32xf32, #tpu.memory_space<vmem>>, vector<16x32xf32>
    %c0_1 = arith.constant 0 : index
    %c0_2 = arith.constant 0 : index
    %1 = vector.load %arg2[%c0_1, %c0_2] : memref<32x50xf32, #tpu.memory_space<vmem>>, vector<32x50xf32>
    %cst = arith.constant dense<0.000000e+00> : vector<16x50xf32>
    %2 = tpu.matmul %0, %1, %cst {dimension_numbers = #tpu.dot_dimension_numbers<[1], [0], [0], [1], [0, 0, 1, 1], [], []>} : vector<16x32xf32>, vector<32x50xf32>, vector<16x50xf32> -> vector<16x50xf32>
    %c0_3 = arith.constant 0 : index
    %c0_4 = arith.constant 0 : index
    %3 = vector.load %arg3[%c0_3, %c0_4] : memref<1x50xf32, #tpu.memory_space<vmem>>, vector<1x50xf32>
    %4 = vector.broadcast %3 : vector<1x50xf32> to vector<16x50xf32>
    %5 = arith.addf %2, %4 : vector<16x50xf32>
    %c0_5 = arith.constant 0 : index
    %c0_6 = arith.constant 0 : index
    %6 = vector.load %arg4[%c0_5, %c0_6] : memref<16x50xf32, #tpu.memory_space<vmem>>, vector<16x50xf32>
    tpu.vector_store %arg4[%c0_5, %c0_6], %5 {strides = array<i32>} : memref<16x50xf32, #tpu.memory_space<vmem>>, vector<16x50xf32>,
    return
  }
  func.func @transform_0(%arg0: i32) -> (i32, i32) {
    %c0_i32 = arith.constant 0 : i32
    %c0_i32_0 = arith.constant 0 : i32
    return %arg0, %c0_i32 : i32, i32
  }
  func.func @transform_1(%arg0: i32) -> (i32, i32) {
    %c0_i32 = arith.constant 0 : i32
    %c0_i32_0 = arith.constant 0 : i32
    %c0_i32_1 = arith.constant 0 : i32
    return %c0_i32, %c0_i32_0 : i32, i32
  }
  func.func @transform_2(%arg0: i32) -> (i32, i32) {
    %c0_i32 = arith.constant 0 : i32
    %c0_i32_0 = arith.constant 0 : i32
    %c0_i32_1 = arith.constant 0 : i32
    return %c0_i32, %c0_i32_0 : i32, i32
  }
  func.func @transform_3(%arg0: i32) -> (i32, i32) {
    %c0_i32 = arith.constant 0 : i32
    %c0_i32_0 = arith.constant 0 : i32
    return %arg0, %c0_i32 : i32, i32
  }
}

module attributes {stable_mosaic.version = 11 : i64} {
  func.func @_decoder_layer_kernel(%arg0: i32, %arg1: memref<16x32xf32, #tpu.memory_space<vmem>>, %arg2: memref<16x32xf32, #tpu.memory_space<vmem>>, %arg3: memref<16x16xf32, #tpu.memory_space<vmem>>, %arg4: memref<16x16xf32, #tpu.memory_space<vmem>>, %arg5: memref<32x96xf32, #tpu.memory_space<vmem>>, %arg6: memref<1x96xf32, #tpu.memory_space<vmem>>, %arg7: memref<32x32xf32, #tpu.memory_space<vmem>>, %arg8: memref<1x32xf32, #tpu.memory_space<vmem>>, %arg9: memref<32x32xf32, #tpu.memory_space<vmem>>, %arg10: memref<1x32xf32, #tpu.memory_space<vmem>>, %arg11: memref<32x64xf32, #tpu.memory_space<vmem>>, %arg12: memref<1x64xf32, #tpu.memory_space<vmem>>, %arg13: memref<32x32xf32, #tpu.memory_space<vmem>>, %arg14: memref<1x32xf32, #tpu.memory_space<vmem>>, %arg15: memref<32x64xf32, #tpu.memory_space<vmem>>, %arg16: memref<1x64xf32, #tpu.memory_space<vmem>>, %arg17: memref<64x32xf32, #tpu.memory_space<vmem>>, %arg18: memref<1x32xf32, #tpu.memory_space<vmem>>, %arg19: memref<1x32xf32, #tpu.memory_space<vmem>>, %arg20: memref<1x32xf32, #tpu.memory_space<vmem>>, %arg21: memref<1x32xf32, #tpu.memory_space<vmem>>, %arg22: memref<1x32xf32, #tpu.memory_space<vmem>>, %arg23: memref<1x32xf32, #tpu.memory_space<vmem>>, %arg24: memref<1x32xf32, #tpu.memory_space<vmem>>, %arg25: memref<16x32xf32, #tpu.memory_space<vmem>>) attributes {dimension_semantics = [#tpu.dimension_semantics<arbitrary>], iteration_bounds = array<i64: 1>, scalar_prefetch = 0 : i64, scratch_operands = 0 : i64, tpu.core_type = #tpu.core_type<tc>, window_params = [{pipeline_mode = #tpu.pipeline_mode<synchronous>, transform_indices = @transform_0, window_bounds = array<i64: 16, 32>}, {pipeline_mode = #tpu.pipeline_mode<synchronous>, transform_indices = @transform_1, window_bounds = array<i64: 16, 32>}, {pipeline_mode = #tpu.pipeline_mode<synchronous>, transform_indices = @transform_2, window_bounds = array<i64: 16, 16>}, {pipeline_mode = #tpu.pipeline_mode<synchronous>, transform_indices = @transform_3, window_bounds = array<i64: 16, 16>}, {pipeline_mode = #tpu.pipeline_mode<synchronous>, transform_indices = @transform_4, window_bounds = array<i64: 32, 96>}, {pipeline_mode = #tpu.pipeline_mode<synchronous>, transform_indices = @transform_5, window_bounds = array<i64: 1, 96>}, {pipeline_mode = #tpu.pipeline_mode<synchronous>, transform_indices = @transform_6, window_bounds = array<i64: 32, 32>}, {pipeline_mode = #tpu.pipeline_mode<synchronous>, transform_indices = @transform_7, window_bounds = array<i64: 1, 32>}, {pipeline_mode = #tpu.pipeline_mode<synchronous>, transform_indices = @transform_8, window_bounds = array<i64: 32, 32>}, {pipeline_mode = #tpu.pipeline_mode<synchronous>, transform_indices = @transform_9, window_bounds = array<i64: 1, 32>}, {pipeline_mode = #tpu.pipeline_mode<synchronous>, transform_indices = @transform_10, window_bounds = array<i64: 32, 64>}, {pipeline_mode = #tpu.pipeline_mode<synchronous>, transform_indices = @transform_11, window_bounds = array<i64: 1, 64>}, {pipeline_mode = #tpu.pipeline_mode<synchronous>, transform_indices = @transform_12, window_bounds = array<i64: 32, 32>}, {pipeline_mode = #tpu.pipeline_mode<synchronous>, transform_indices = @transform_13, window_bounds = array<i64: 1, 32>}, {pipeline_mode = #tpu.pipeline_mode<synchronous>, transform_indices = @transform_14, window_bounds = array<i64: 32, 64>}, {pipeline_mode = #tpu.pipeline_mode<synchronous>, transform_indices = @transform_15, window_bounds = array<i64: 1, 64>}, {pipeline_mode = #tpu.pipeline_mode<synchronous>, transform_indices = @transform_16, window_bounds = array<i64: 64, 32>}, {pipeline_mode = #tpu.pipeline_mode<synchronous>, transform_indices = @transform_17, window_bounds = array<i64: 1, 32>}, {pipeline_mode = #tpu.pipeline_mode<synchronous>, transform_indices = @transform_18, window_bounds = array<i64: 1, 32>}, {pipeline_mode = #tpu.pipeline_mode<synchronous>, transform_indices = @transform_19, window_bounds = array<i64: 1, 32>}, {pipeline_mode = #tpu.pipeline_mode<synchronous>, transform_indices = @transform_20, window_bounds = array<i64: 1, 32>}, {pipeline_mode = #tpu.pipeline_mode<synchronous>, transform_indices = @transform_21, window_bounds = array<i64: 1, 32>}, {pipeline_mode = #tpu.pipeline_mode<synchronous>, transform_indices = @transform_22, window_bounds = array<i64: 1, 32>}, {pipeline_mode = #tpu.pipeline_mode<synchronous>, transform_indices = @transform_23, window_bounds = array<i64: 1, 32>}, {pipeline_mode = #tpu.pipeline_mode<synchronous>, transform_indices = @transform_24, window_bounds = array<i64: 16, 32>}]} {
    %c0 = arith.constant 0 : index
    %c0_0 = arith.constant 0 : index
    %0 = vector.load %arg1[%c0, %c0_0] : memref<16x32xf32, #tpu.memory_space<vmem>>, vector<16x32xf32>
    %c0_1 = arith.constant 0 : index
    %c0_2 = arith.constant 0 : index
    %1 = vector.load %arg2[%c0_1, %c0_2] : memref<16x32xf32, #tpu.memory_space<vmem>>, vector<16x32xf32>
    %c0_3 = arith.constant 0 : index
    %c0_4 = arith.constant 0 : index
    %2 = vector.load %arg3[%c0_3, %c0_4] : memref<16x16xf32, #tpu.memory_space<vmem>>, vector<16x16xf32>
    %c0_5 = arith.constant 0 : index
    %c0_6 = arith.constant 0 : index
    %3 = vector.load %arg4[%c0_5, %c0_6] : memref<16x16xf32, #tpu.memory_space<vmem>>, vector<16x16xf32>
    %c0_7 = arith.constant 0 : index
    %c0_8 = arith.constant 0 : index
    %4 = vector.load %arg5[%c0_7, %c0_8] : memref<32x96xf32, #tpu.memory_space<vmem>>, vector<32x96xf32>
    %cst = arith.constant dense<0.000000e+00> : vector<16x96xf32>
    %5 = tpu.matmul %0, %4, %cst {dimension_numbers = #tpu.dot_dimension_numbers<[1], [0], [0], [1], [0, 0, 1, 1], [], []>} : vector<16x32xf32>, vector<32x96xf32>, vector<16x96xf32> -> vector<16x96xf32>
    %c0_9 = arith.constant 0 : index
    %c0_10 = arith.constant 0 : index
    %6 = vector.load %arg6[%c0_9, %c0_10] : memref<1x96xf32, #tpu.memory_space<vmem>>, vector<1x96xf32>
    %7 = vector.broadcast %6 : vector<1x96xf32> to vector<16x96xf32>
    %8 = arith.addf %5, %7 : vector<16x96xf32>
    %9 = vector.extract_strided_slice %8 {offsets = [0, 0], sizes = [16, 32], strides = [1, 1]} : vector<16x96xf32> to vector<16x32xf32>
    %10 = vector.extract_strided_slice %8 {offsets = [0, 32], sizes = [16, 32], strides = [1, 1]} : vector<16x96xf32> to vector<16x32xf32>
    %11 = vector.extract_strided_slice %8 {offsets = [0, 64], sizes = [16, 32], strides = [1, 1]} : vector<16x96xf32> to vector<16x32xf32>
    %12 = vector.extract_strided_slice %9 {offsets = [0, 0], sizes = [16, 8], strides = [1, 1]} : vector<16x32xf32> to vector<16x8xf32>
    %13 = vector.extract_strided_slice %10 {offsets = [0, 0], sizes = [16, 8], strides = [1, 1]} : vector<16x32xf32> to vector<16x8xf32>
    %14 = vector.extract_strided_slice %11 {offsets = [0, 0], sizes = [16, 8], strides = [1, 1]} : vector<16x32xf32> to vector<16x8xf32>
    %cst_11 = arith.constant dense<0.000000e+00> : vector<16x16xf32>
    %15 = tpu.matmul %12, %13, %cst_11 {dimension_numbers = #tpu.dot_dimension_numbers<[1], [1], [0], [0], [0, 0, 1, 0], [], []>} : vector<16x8xf32>, vector<16x8xf32>, vector<16x16xf32> -> vector<16x16xf32>
    %cst_12 = arith.constant 0.353553385 : f32
    %16 = vector.broadcast %cst_12 : f32 to vector<16x16xf32>
    %17 = arith.mulf %15, %16 : vector<16x16xf32>
    %18 = arith.addf %17, %2 : vector<16x16xf32>
    %cst_13 = arith.constant dense<0xFF800000> : vector<16xf32>
    %19 = vector.multi_reduction <maximumf>, %18, %cst_13 [1] : vector<16x16xf32> to vector<16xf32>
    %20 = vector.shape_cast %19 : vector<16xf32> to vector<16x1xf32>
    %21 = vector.broadcast %20 : vector<16x1xf32> to vector<16x16xf32>
    %22 = arith.subf %18, %21 : vector<16x16xf32>
    %23 = math.exp %22 : vector<16x16xf32>
    %cst_14 = arith.constant dense<0.000000e+00> : vector<16xf32>
    %24 = vector.multi_reduction <add>, %23, %cst_14 [1] : vector<16x16xf32> to vector<16xf32>
    %25 = vector.shape_cast %24 : vector<16xf32> to vector<16x1xf32>
    %26 = tpu.reciprocal %25 {approx = true} : vector<16x1xf32> -> vector<16x1xf32>
    %27 = vector.broadcast %26 : vector<16x1xf32> to vector<16x16xf32>
    %28 = arith.mulf %23, %27 : vector<16x16xf32>
    %cst_15 = arith.constant dense<0.000000e+00> : vector<16x8xf32>
    %29 = tpu.matmul %28, %14, %cst_15 {dimension_numbers = #tpu.dot_dimension_numbers<[1], [0], [0], [1], [0, 0, 1, 1], [], []>} : vector<16x16xf32>, vector<16x8xf32>, vector<16x8xf32> -> vector<16x8xf32>
    %30 = vector.extract_strided_slice %9 {offsets = [0, 8], sizes = [16, 8], strides = [1, 1]} : vector<16x32xf32> to vector<16x8xf32>
    %31 = vector.extract_strided_slice %10 {offsets = [0, 8], sizes = [16, 8], strides = [1, 1]} : vector<16x32xf32> to vector<16x8xf32>
    %32 = vector.extract_strided_slice %11 {offsets = [0, 8], sizes = [16, 8], strides = [1, 1]} : vector<16x32xf32> to vector<16x8xf32>
    %cst_16 = arith.constant dense<0.000000e+00> : vector<16x16xf32>
    %33 = tpu.matmul %30, %31, %cst_16 {dimension_numbers = #tpu.dot_dimension_numbers<[1], [1], [0], [0], [0, 0, 1, 0], [], []>} : vector<16x8xf32>, vector<16x8xf32>, vector<16x16xf32> -> vector<16x16xf32>
    %cst_17 = arith.constant 0.353553385 : f32
    %34 = vector.broadcast %cst_17 : f32 to vector<16x16xf32>
    %35 = arith.mulf %33, %34 : vector<16x16xf32>
    %36 = arith.addf %35, %2 : vector<16x16xf32>
    %cst_18 = arith.constant dense<0xFF800000> : vector<16xf32>
    %37 = vector.multi_reduction <maximumf>, %36, %cst_18 [1] : vector<16x16xf32> to vector<16xf32>
    %38 = vector.shape_cast %37 : vector<16xf32> to vector<16x1xf32>
    %39 = vector.broadcast %38 : vector<16x1xf32> to vector<16x16xf32>
    %40 = arith.subf %36, %39 : vector<16x16xf32>
    %41 = math.exp %40 : vector<16x16xf32>
    %cst_19 = arith.constant dense<0.000000e+00> : vector<16xf32>
    %42 = vector.multi_reduction <add>, %41, %cst_19 [1] : vector<16x16xf32> to vector<16xf32>
    %43 = vector.shape_cast %42 : vector<16xf32> to vector<16x1xf32>
    %44 = tpu.reciprocal %43 {approx = true} : vector<16x1xf32> -> vector<16x1xf32>
    %45 = vector.broadcast %44 : vector<16x1xf32> to vector<16x16xf32>
    %46 = arith.mulf %41, %45 : vector<16x16xf32>
    %cst_20 = arith.constant dense<0.000000e+00> : vector<16x8xf32>
    %47 = tpu.matmul %46, %32, %cst_20 {dimension_numbers = #tpu.dot_dimension_numbers<[1], [0], [0], [1], [0, 0, 1, 1], [], []>} : vector<16x16xf32>, vector<16x8xf32>, vector<16x8xf32> -> vector<16x8xf32>
    %48 = vector.extract_strided_slice %9 {offsets = [0, 16], sizes = [16, 8], strides = [1, 1]} : vector<16x32xf32> to vector<16x8xf32>
    %49 = vector.extract_strided_slice %10 {offsets = [0, 16], sizes = [16, 8], strides = [1, 1]} : vector<16x32xf32> to vector<16x8xf32>
    %50 = vector.extract_strided_slice %11 {offsets = [0, 16], sizes = [16, 8], strides = [1, 1]} : vector<16x32xf32> to vector<16x8xf32>
    %cst_21 = arith.constant dense<0.000000e+00> : vector<16x16xf32>
    %51 = tpu.matmul %48, %49, %cst_21 {dimension_numbers = #tpu.dot_dimension_numbers<[1], [1], [0], [0], [0, 0, 1, 0], [], []>} : vector<16x8xf32>, vector<16x8xf32>, vector<16x16xf32> -> vector<16x16xf32>
    %cst_22 = arith.constant 0.353553385 : f32
    %52 = vector.broadcast %cst_22 : f32 to vector<16x16xf32>
    %53 = arith.mulf %51, %52 : vector<16x16xf32>
    %54 = arith.addf %53, %2 : vector<16x16xf32>
    %cst_23 = arith.constant dense<0xFF800000> : vector<16xf32>
    %55 = vector.multi_reduction <maximumf>, %54, %cst_23 [1] : vector<16x16xf32> to vector<16xf32>
    %56 = vector.shape_cast %55 : vector<16xf32> to vector<16x1xf32>
    %57 = vector.broadcast %56 : vector<16x1xf32> to vector<16x16xf32>
    %58 = arith.subf %54, %57 : vector<16x16xf32>
    %59 = math.exp %58 : vector<16x16xf32>
    %cst_24 = arith.constant dense<0.000000e+00> : vector<16xf32>
    %60 = vector.multi_reduction <add>, %59, %cst_24 [1] : vector<16x16xf32> to vector<16xf32>
    %61 = vector.shape_cast %60 : vector<16xf32> to vector<16x1xf32>
    %62 = tpu.reciprocal %61 {approx = true} : vector<16x1xf32> -> vector<16x1xf32>
    %63 = vector.broadcast %62 : vector<16x1xf32> to vector<16x16xf32>
    %64 = arith.mulf %59, %63 : vector<16x16xf32>
    %cst_25 = arith.constant dense<0.000000e+00> : vector<16x8xf32>
    %65 = tpu.matmul %64, %50, %cst_25 {dimension_numbers = #tpu.dot_dimension_numbers<[1], [0], [0], [1], [0, 0, 1, 1], [], []>} : vector<16x16xf32>, vector<16x8xf32>, vector<16x8xf32> -> vector<16x8xf32>
    %66 = vector.extract_strided_slice %9 {offsets = [0, 24], sizes = [16, 8], strides = [1, 1]} : vector<16x32xf32> to vector<16x8xf32>
    %67 = vector.extract_strided_slice %10 {offsets = [0, 24], sizes = [16, 8], strides = [1, 1]} : vector<16x32xf32> to vector<16x8xf32>
    %68 = vector.extract_strided_slice %11 {offsets = [0, 24], sizes = [16, 8], strides = [1, 1]} : vector<16x32xf32> to vector<16x8xf32>
    %cst_26 = arith.constant dense<0.000000e+00> : vector<16x16xf32>
    %69 = tpu.matmul %66, %67, %cst_26 {dimension_numbers = #tpu.dot_dimension_numbers<[1], [1], [0], [0], [0, 0, 1, 0], [], []>} : vector<16x8xf32>, vector<16x8xf32>, vector<16x16xf32> -> vector<16x16xf32>
    %cst_27 = arith.constant 0.353553385 : f32
    %70 = vector.broadcast %cst_27 : f32 to vector<16x16xf32>
    %71 = arith.mulf %69, %70 : vector<16x16xf32>
    %72 = arith.addf %71, %2 : vector<16x16xf32>
    %cst_28 = arith.constant dense<0xFF800000> : vector<16xf32>
    %73 = vector.multi_reduction <maximumf>, %72, %cst_28 [1] : vector<16x16xf32> to vector<16xf32>
    %74 = vector.shape_cast %73 : vector<16xf32> to vector<16x1xf32>
    %75 = vector.broadcast %74 : vector<16x1xf32> to vector<16x16xf32>
    %76 = arith.subf %72, %75 : vector<16x16xf32>
    %77 = math.exp %76 : vector<16x16xf32>
    %cst_29 = arith.constant dense<0.000000e+00> : vector<16xf32>
    %78 = vector.multi_reduction <add>, %77, %cst_29 [1] : vector<16x16xf32> to vector<16xf32>
    %79 = vector.shape_cast %78 : vector<16xf32> to vector<16x1xf32>
    %80 = tpu.reciprocal %79 {approx = true} : vector<16x1xf32> -> vector<16x1xf32>
    %81 = vector.broadcast %80 : vector<16x1xf32> to vector<16x16xf32>
    %82 = arith.mulf %77, %81 : vector<16x16xf32>
    %cst_30 = arith.constant dense<0.000000e+00> : vector<16x8xf32>
    %83 = tpu.matmul %82, %68, %cst_30 {dimension_numbers = #tpu.dot_dimension_numbers<[1], [0], [0], [1], [0, 0, 1, 1], [], []>} : vector<16x16xf32>, vector<16x8xf32>, vector<16x8xf32> -> vector<16x8xf32>
    %84 = tpu.concatenate %29, %47, %65, %83 in 1 : vector<16x8xf32>, vector<16x8xf32>, vector<16x8xf32>, vector<16x8xf32> -> vector<16x32xf32>
    %c0_31 = arith.constant 0 : index
    %c0_32 = arith.constant 0 : index
    %85 = vector.load %arg7[%c0_31, %c0_32] : memref<32x32xf32, #tpu.memory_space<vmem>>, vector<32x32xf32>
    %cst_33 = arith.constant dense<0.000000e+00> : vector<16x32xf32>
    %86 = tpu.matmul %84, %85, %cst_33 {dimension_numbers = #tpu.dot_dimension_numbers<[1], [0], [0], [1], [0, 0, 1, 1], [], []>} : vector<16x32xf32>, vector<32x32xf32>, vector<16x32xf32> -> vector<16x32xf32>
    %c0_34 = arith.constant 0 : index
    %c0_35 = arith.constant 0 : index
    %87 = vector.load %arg8[%c0_34, %c0_35] : memref<1x32xf32, #tpu.memory_space<vmem>>, vector<1x32xf32>
    %88 = vector.broadcast %87 : vector<1x32xf32> to vector<16x32xf32>
    %89 = arith.addf %86, %88 : vector<16x32xf32>
    %90 = arith.addf %0, %89 : vector<16x32xf32>
    %cst_36 = arith.constant dense<0.000000e+00> : vector<16xf32>
    %91 = vector.multi_reduction <add>, %90, %cst_36 [1] : vector<16x32xf32> to vector<16xf32>
    %92 = vector.shape_cast %91 : vector<16xf32> to vector<16x1xf32>
    %cst_37 = arith.constant 3.200000e+01 : f32
    %93 = vector.broadcast %cst_37 : f32 to vector<16x1xf32>
    %94 = arith.divf %92, %93 : vector<16x1xf32>
    %95 = vector.broadcast %94 : vector<16x1xf32> to vector<16x32xf32>
    %96 = arith.subf %90, %95 : vector<16x32xf32>
    %97 = arith.mulf %96, %96 : vector<16x32xf32>
    %cst_38 = arith.constant dense<0.000000e+00> : vector<16xf32>
    %98 = vector.multi_reduction <add>, %97, %cst_38 [1] : vector<16x32xf32> to vector<16xf32>
    %99 = vector.shape_cast %98 : vector<16xf32> to vector<16x1xf32>
    %cst_39 = arith.constant 3.200000e+01 : f32
    %100 = vector.broadcast %cst_39 : f32 to vector<16x1xf32>
    %101 = arith.divf %99, %100 : vector<16x1xf32>
    %102 = vector.broadcast %94 : vector<16x1xf32> to vector<16x32xf32>
    %103 = arith.subf %90, %102 : vector<16x32xf32>
    %cst_40 = arith.constant 9.99999974E-6 : f32
    %104 = vector.broadcast %cst_40 : f32 to vector<16x1xf32>
    %105 = arith.addf %101, %104 : vector<16x1xf32>
    %106 = math.rsqrt %105 : vector<16x1xf32>
    %107 = vector.broadcast %106 : vector<16x1xf32> to vector<16x32xf32>
    %108 = arith.mulf %103, %107 : vector<16x32xf32>
    %c0_41 = arith.constant 0 : index
    %c0_42 = arith.constant 0 : index
    %109 = vector.load %arg19[%c0_41, %c0_42] : memref<1x32xf32, #tpu.memory_space<vmem>>, vector<1x32xf32>
    %110 = vector.broadcast %109 : vector<1x32xf32> to vector<16x32xf32>
    %111 = arith.mulf %108, %110 : vector<16x32xf32>
    %c0_43 = arith.constant 0 : index
    %c0_44 = arith.constant 0 : index
    %112 = vector.load %arg20[%c0_43, %c0_44] : memref<1x32xf32, #tpu.memory_space<vmem>>, vector<1x32xf32>
    %113 = vector.broadcast %112 : vector<1x32xf32> to vector<16x32xf32>
    %114 = arith.addf %111, %113 : vector<16x32xf32>
    %c0_45 = arith.constant 0 : index
    %c0_46 = arith.constant 0 : index
    %115 = vector.load %arg9[%c0_45, %c0_46] : memref<32x32xf32, #tpu.memory_space<vmem>>, vector<32x32xf32>
    %cst_47 = arith.constant dense<0.000000e+00> : vector<16x32xf32>
    %116 = tpu.matmul %114, %115, %cst_47 {dimension_numbers = #tpu.dot_dimension_numbers<[1], [0], [0], [1], [0, 0, 1, 1], [], []>} : vector<16x32xf32>, vector<32x32xf32>, vector<16x32xf32> -> vector<16x32xf32>
    %c0_48 = arith.constant 0 : index
    %c0_49 = arith.constant 0 : index
    %117 = vector.load %arg10[%c0_48, %c0_49] : memref<1x32xf32, #tpu.memory_space<vmem>>, vector<1x32xf32>
    %118 = vector.broadcast %117 : vector<1x32xf32> to vector<16x32xf32>
    %119 = arith.addf %116, %118 : vector<16x32xf32>
    %c0_50 = arith.constant 0 : index
    %c0_51 = arith.constant 0 : index
    %120 = vector.load %arg11[%c0_50, %c0_51] : memref<32x64xf32, #tpu.memory_space<vmem>>, vector<32x64xf32>
    %cst_52 = arith.constant dense<0.000000e+00> : vector<16x64xf32>
    %121 = tpu.matmul %1, %120, %cst_52 {dimension_numbers = #tpu.dot_dimension_numbers<[1], [0], [0], [1], [0, 0, 1, 1], [], []>} : vector<16x32xf32>, vector<32x64xf32>, vector<16x64xf32> -> vector<16x64xf32>
    %c0_53 = arith.constant 0 : index
    %c0_54 = arith.constant 0 : index
    %122 = vector.load %arg12[%c0_53, %c0_54] : memref<1x64xf32, #tpu.memory_space<vmem>>, vector<1x64xf32>
    %123 = vector.broadcast %122 : vector<1x64xf32> to vector<16x64xf32>
    %124 = arith.addf %121, %123 : vector<16x64xf32>
    %125 = vector.extract_strided_slice %124 {offsets = [0, 0], sizes = [16, 32], strides = [1, 1]} : vector<16x64xf32> to vector<16x32xf32>
    %126 = vector.extract_strided_slice %124 {offsets = [0, 32], sizes = [16, 32], strides = [1, 1]} : vector<16x64xf32> to vector<16x32xf32>
    %127 = vector.extract_strided_slice %119 {offsets = [0, 0], sizes = [16, 8], strides = [1, 1]} : vector<16x32xf32> to vector<16x8xf32>
    %128 = vector.extract_strided_slice %125 {offsets = [0, 0], sizes = [16, 8], strides = [1, 1]} : vector<16x32xf32> to vector<16x8xf32>
    %129 = vector.extract_strided_slice %126 {offsets = [0, 0], sizes = [16, 8], strides = [1, 1]} : vector<16x32xf32> to vector<16x8xf32>
    %cst_55 = arith.constant dense<0.000000e+00> : vector<16x16xf32>
    %130 = tpu.matmul %127, %128, %cst_55 {dimension_numbers = #tpu.dot_dimension_numbers<[1], [1], [0], [0], [0, 0, 1, 0], [], []>} : vector<16x8xf32>, vector<16x8xf32>, vector<16x16xf32> -> vector<16x16xf32>
    %cst_56 = arith.constant 0.353553385 : f32
    %131 = vector.broadcast %cst_56 : f32 to vector<16x16xf32>
    %132 = arith.mulf %130, %131 : vector<16x16xf32>
    %133 = arith.addf %132, %3 : vector<16x16xf32>
    %cst_57 = arith.constant dense<0xFF800000> : vector<16xf32>
    %134 = vector.multi_reduction <maximumf>, %133, %cst_57 [1] : vector<16x16xf32> to vector<16xf32>
    %135 = vector.shape_cast %134 : vector<16xf32> to vector<16x1xf32>
    %136 = vector.broadcast %135 : vector<16x1xf32> to vector<16x16xf32>
    %137 = arith.subf %133, %136 : vector<16x16xf32>
    %138 = math.exp %137 : vector<16x16xf32>
    %cst_58 = arith.constant dense<0.000000e+00> : vector<16xf32>
    %139 = vector.multi_reduction <add>, %138, %cst_58 [1] : vector<16x16xf32> to vector<16xf32>
    %140 = vector.shape_cast %139 : vector<16xf32> to vector<16x1xf32>
    %141 = tpu.reciprocal %140 {approx = true} : vector<16x1xf32> -> vector<16x1xf32>
    %142 = vector.broadcast %141 : vector<16x1xf32> to vector<16x16xf32>
    %143 = arith.mulf %138, %142 : vector<16x16xf32>
    %cst_59 = arith.constant dense<0.000000e+00> : vector<16x8xf32>
    %144 = tpu.matmul %143, %129, %cst_59 {dimension_numbers = #tpu.dot_dimension_numbers<[1], [0], [0], [1], [0, 0, 1, 1], [], []>} : vector<16x16xf32>, vector<16x8xf32>, vector<16x8xf32> -> vector<16x8xf32>
    %145 = vector.extract_strided_slice %119 {offsets = [0, 8], sizes = [16, 8], strides = [1, 1]} : vector<16x32xf32> to vector<16x8xf32>
    %146 = vector.extract_strided_slice %125 {offsets = [0, 8], sizes = [16, 8], strides = [1, 1]} : vector<16x32xf32> to vector<16x8xf32>
    %147 = vector.extract_strided_slice %126 {offsets = [0, 8], sizes = [16, 8], strides = [1, 1]} : vector<16x32xf32> to vector<16x8xf32>
    %cst_60 = arith.constant dense<0.000000e+00> : vector<16x16xf32>
    %148 = tpu.matmul %145, %146, %cst_60 {dimension_numbers = #tpu.dot_dimension_numbers<[1], [1], [0], [0], [0, 0, 1, 0], [], []>} : vector<16x8xf32>, vector<16x8xf32>, vector<16x16xf32> -> vector<16x16xf32>
    %cst_61 = arith.constant 0.353553385 : f32
    %149 = vector.broadcast %cst_61 : f32 to vector<16x16xf32>
    %150 = arith.mulf %148, %149 : vector<16x16xf32>
    %151 = arith.addf %150, %3 : vector<16x16xf32>
    %cst_62 = arith.constant dense<0xFF800000> : vector<16xf32>
    %152 = vector.multi_reduction <maximumf>, %151, %cst_62 [1] : vector<16x16xf32> to vector<16xf32>
    %153 = vector.shape_cast %152 : vector<16xf32> to vector<16x1xf32>
    %154 = vector.broadcast %153 : vector<16x1xf32> to vector<16x16xf32>
    %155 = arith.subf %151, %154 : vector<16x16xf32>
    %156 = math.exp %155 : vector<16x16xf32>
    %cst_63 = arith.constant dense<0.000000e+00> : vector<16xf32>
    %157 = vector.multi_reduction <add>, %156, %cst_63 [1] : vector<16x16xf32> to vector<16xf32>
    %158 = vector.shape_cast %157 : vector<16xf32> to vector<16x1xf32>
    %159 = tpu.reciprocal %158 {approx = true} : vector<16x1xf32> -> vector<16x1xf32>
    %160 = vector.broadcast %159 : vector<16x1xf32> to vector<16x16xf32>
    %161 = arith.mulf %156, %160 : vector<16x16xf32>
    %cst_64 = arith.constant dense<0.000000e+00> : vector<16x8xf32>
    %162 = tpu.matmul %161, %147, %cst_64 {dimension_numbers = #tpu.dot_dimension_numbers<[1], [0], [0], [1], [0, 0, 1, 1], [], []>} : vector<16x16xf32>, vector<16x8xf32>, vector<16x8xf32> -> vector<16x8xf32>
    %163 = vector.extract_strided_slice %119 {offsets = [0, 16], sizes = [16, 8], strides = [1, 1]} : vector<16x32xf32> to vector<16x8xf32>
    %164 = vector.extract_strided_slice %125 {offsets = [0, 16], sizes = [16, 8], strides = [1, 1]} : vector<16x32xf32> to vector<16x8xf32>
    %165 = vector.extract_strided_slice %126 {offsets = [0, 16], sizes = [16, 8], strides = [1, 1]} : vector<16x32xf32> to vector<16x8xf32>
    %cst_65 = arith.constant dense<0.000000e+00> : vector<16x16xf32>
    %166 = tpu.matmul %163, %164, %cst_65 {dimension_numbers = #tpu.dot_dimension_numbers<[1], [1], [0], [0], [0, 0, 1, 0], [], []>} : vector<16x8xf32>, vector<16x8xf32>, vector<16x16xf32> -> vector<16x16xf32>
    %cst_66 = arith.constant 0.353553385 : f32
    %167 = vector.broadcast %cst_66 : f32 to vector<16x16xf32>
    %168 = arith.mulf %166, %167 : vector<16x16xf32>
    %169 = arith.addf %168, %3 : vector<16x16xf32>
    %cst_67 = arith.constant dense<0xFF800000> : vector<16xf32>
    %170 = vector.multi_reduction <maximumf>, %169, %cst_67 [1] : vector<16x16xf32> to vector<16xf32>
    %171 = vector.shape_cast %170 : vector<16xf32> to vector<16x1xf32>
    %172 = vector.broadcast %171 : vector<16x1xf32> to vector<16x16xf32>
    %173 = arith.subf %169, %172 : vector<16x16xf32>
    %174 = math.exp %173 : vector<16x16xf32>
    %cst_68 = arith.constant dense<0.000000e+00> : vector<16xf32>
    %175 = vector.multi_reduction <add>, %174, %cst_68 [1] : vector<16x16xf32> to vector<16xf32>
    %176 = vector.shape_cast %175 : vector<16xf32> to vector<16x1xf32>
    %177 = tpu.reciprocal %176 {approx = true} : vector<16x1xf32> -> vector<16x1xf32>
    %178 = vector.broadcast %177 : vector<16x1xf32> to vector<16x16xf32>
    %179 = arith.mulf %174, %178 : vector<16x16xf32>
    %cst_69 = arith.constant dense<0.000000e+00> : vector<16x8xf32>
    %180 = tpu.matmul %179, %165, %cst_69 {dimension_numbers = #tpu.dot_dimension_numbers<[1], [0], [0], [1], [0, 0, 1, 1], [], []>} : vector<16x16xf32>, vector<16x8xf32>, vector<16x8xf32> -> vector<16x8xf32>
    %181 = vector.extract_strided_slice %119 {offsets = [0, 24], sizes = [16, 8], strides = [1, 1]} : vector<16x32xf32> to vector<16x8xf32>
    %182 = vector.extract_strided_slice %125 {offsets = [0, 24], sizes = [16, 8], strides = [1, 1]} : vector<16x32xf32> to vector<16x8xf32>
    %183 = vector.extract_strided_slice %126 {offsets = [0, 24], sizes = [16, 8], strides = [1, 1]} : vector<16x32xf32> to vector<16x8xf32>
    %cst_70 = arith.constant dense<0.000000e+00> : vector<16x16xf32>
    %184 = tpu.matmul %181, %182, %cst_70 {dimension_numbers = #tpu.dot_dimension_numbers<[1], [1], [0], [0], [0, 0, 1, 0], [], []>} : vector<16x8xf32>, vector<16x8xf32>, vector<16x16xf32> -> vector<16x16xf32>
    %cst_71 = arith.constant 0.353553385 : f32
    %185 = vector.broadcast %cst_71 : f32 to vector<16x16xf32>
    %186 = arith.mulf %184, %185 : vector<16x16xf32>
    %187 = arith.addf %186, %3 : vector<16x16xf32>
    %cst_72 = arith.constant dense<0xFF800000> : vector<16xf32>
    %188 = vector.multi_reduction <maximumf>, %187, %cst_72 [1] : vector<16x16xf32> to vector<16xf32>
    %189 = vector.shape_cast %188 : vector<16xf32> to vector<16x1xf32>
    %190 = vector.broadcast %189 : vector<16x1xf32> to vector<16x16xf32>
    %191 = arith.subf %187, %190 : vector<16x16xf32>
    %192 = math.exp %191 : vector<16x16xf32>
    %cst_73 = arith.constant dense<0.000000e+00> : vector<16xf32>
    %193 = vector.multi_reduction <add>, %192, %cst_73 [1] : vector<16x16xf32> to vector<16xf32>
    %194 = vector.shape_cast %193 : vector<16xf32> to vector<16x1xf32>
    %195 = tpu.reciprocal %194 {approx = true} : vector<16x1xf32> -> vector<16x1xf32>
    %196 = vector.broadcast %195 : vector<16x1xf32> to vector<16x16xf32>
    %197 = arith.mulf %192, %196 : vector<16x16xf32>
    %cst_74 = arith.constant dense<0.000000e+00> : vector<16x8xf32>
    %198 = tpu.matmul %197, %183, %cst_74 {dimension_numbers = #tpu.dot_dimension_numbers<[1], [0], [0], [1], [0, 0, 1, 1], [], []>} : vector<16x16xf32>, vector<16x8xf32>, vector<16x8xf32> -> vector<16x8xf32>
    %199 = tpu.concatenate %144, %162, %180, %198 in 1 : vector<16x8xf32>, vector<16x8xf32>, vector<16x8xf32>, vector<16x8xf32> -> vector<16x32xf32>
    %c0_75 = arith.constant 0 : index
    %c0_76 = arith.constant 0 : index
    %200 = vector.load %arg13[%c0_75, %c0_76] : memref<32x32xf32, #tpu.memory_space<vmem>>, vector<32x32xf32>
    %cst_77 = arith.constant dense<0.000000e+00> : vector<16x32xf32>
    %201 = tpu.matmul %199, %200, %cst_77 {dimension_numbers = #tpu.dot_dimension_numbers<[1], [0], [0], [1], [0, 0, 1, 1], [], []>} : vector<16x32xf32>, vector<32x32xf32>, vector<16x32xf32> -> vector<16x32xf32>
    %c0_78 = arith.constant 0 : index
    %c0_79 = arith.constant 0 : index
    %202 = vector.load %arg14[%c0_78, %c0_79] : memref<1x32xf32, #tpu.memory_space<vmem>>, vector<1x32xf32>
    %203 = vector.broadcast %202 : vector<1x32xf32> to vector<16x32xf32>
    %204 = arith.addf %201, %203 : vector<16x32xf32>
    %205 = arith.addf %114, %204 : vector<16x32xf32>
    %cst_80 = arith.constant dense<0.000000e+00> : vector<16xf32>
    %206 = vector.multi_reduction <add>, %205, %cst_80 [1] : vector<16x32xf32> to vector<16xf32>
    %207 = vector.shape_cast %206 : vector<16xf32> to vector<16x1xf32>
    %cst_81 = arith.constant 3.200000e+01 : f32
    %208 = vector.broadcast %cst_81 : f32 to vector<16x1xf32>
    %209 = arith.divf %207, %208 : vector<16x1xf32>
    %210 = vector.broadcast %209 : vector<16x1xf32> to vector<16x32xf32>
    %211 = arith.subf %205, %210 : vector<16x32xf32>
    %212 = arith.mulf %211, %211 : vector<16x32xf32>
    %cst_82 = arith.constant dense<0.000000e+00> : vector<16xf32>
    %213 = vector.multi_reduction <add>, %212, %cst_82 [1] : vector<16x32xf32> to vector<16xf32>
    %214 = vector.shape_cast %213 : vector<16xf32> to vector<16x1xf32>
    %cst_83 = arith.constant 3.200000e+01 : f32
    %215 = vector.broadcast %cst_83 : f32 to vector<16x1xf32>
    %216 = arith.divf %214, %215 : vector<16x1xf32>
    %217 = vector.broadcast %209 : vector<16x1xf32> to vector<16x32xf32>
    %218 = arith.subf %205, %217 : vector<16x32xf32>
    %cst_84 = arith.constant 9.99999974E-6 : f32
    %219 = vector.broadcast %cst_84 : f32 to vector<16x1xf32>
    %220 = arith.addf %216, %219 : vector<16x1xf32>
    %221 = math.rsqrt %220 : vector<16x1xf32>
    %222 = vector.broadcast %221 : vector<16x1xf32> to vector<16x32xf32>
    %223 = arith.mulf %218, %222 : vector<16x32xf32>
    %c0_85 = arith.constant 0 : index
    %c0_86 = arith.constant 0 : index
    %224 = vector.load %arg21[%c0_85, %c0_86] : memref<1x32xf32, #tpu.memory_space<vmem>>, vector<1x32xf32>
    %225 = vector.broadcast %224 : vector<1x32xf32> to vector<16x32xf32>
    %226 = arith.mulf %223, %225 : vector<16x32xf32>
    %c0_87 = arith.constant 0 : index
    %c0_88 = arith.constant 0 : index
    %227 = vector.load %arg22[%c0_87, %c0_88] : memref<1x32xf32, #tpu.memory_space<vmem>>, vector<1x32xf32>
    %228 = vector.broadcast %227 : vector<1x32xf32> to vector<16x32xf32>
    %229 = arith.addf %226, %228 : vector<16x32xf32>
    %c0_89 = arith.constant 0 : index
    %c0_90 = arith.constant 0 : index
    %230 = vector.load %arg15[%c0_89, %c0_90] : memref<32x64xf32, #tpu.memory_space<vmem>>, vector<32x64xf32>
    %cst_91 = arith.constant dense<0.000000e+00> : vector<16x64xf32>
    %231 = tpu.matmul %229, %230, %cst_91 {dimension_numbers = #tpu.dot_dimension_numbers<[1], [0], [0], [1], [0, 0, 1, 1], [], []>} : vector<16x32xf32>, vector<32x64xf32>, vector<16x64xf32> -> vector<16x64xf32>
    %c0_92 = arith.constant 0 : index
    %c0_93 = arith.constant 0 : index
    %232 = vector.load %arg16[%c0_92, %c0_93] : memref<1x64xf32, #tpu.memory_space<vmem>>, vector<1x64xf32>
    %233 = vector.broadcast %232 : vector<1x64xf32> to vector<16x64xf32>
    %234 = arith.addf %231, %233 : vector<16x64xf32>
    %cst_94 = arith.constant 0.000000e+00 : f32
    %235 = vector.broadcast %cst_94 : f32 to vector<16x64xf32>
    %236 = arith.maximumf %234, %235 : vector<16x64xf32>
    %c0_95 = arith.constant 0 : index
    %c0_96 = arith.constant 0 : index
    %237 = vector.load %arg17[%c0_95, %c0_96] : memref<64x32xf32, #tpu.memory_space<vmem>>, vector<64x32xf32>
    %cst_97 = arith.constant dense<0.000000e+00> : vector<16x32xf32>
    %238 = tpu.matmul %236, %237, %cst_97 {dimension_numbers = #tpu.dot_dimension_numbers<[1], [0], [0], [1], [0, 0, 1, 1], [], []>} : vector<16x64xf32>, vector<64x32xf32>, vector<16x32xf32> -> vector<16x32xf32>
    %c0_98 = arith.constant 0 : index
    %c0_99 = arith.constant 0 : index
    %239 = vector.load %arg18[%c0_98, %c0_99] : memref<1x32xf32, #tpu.memory_space<vmem>>, vector<1x32xf32>
    %240 = vector.broadcast %239 : vector<1x32xf32> to vector<16x32xf32>
    %241 = arith.addf %238, %240 : vector<16x32xf32>
    %242 = arith.addf %229, %241 : vector<16x32xf32>
    %cst_100 = arith.constant dense<0.000000e+00> : vector<16xf32>
    %243 = vector.multi_reduction <add>, %242, %cst_100 [1] : vector<16x32xf32> to vector<16xf32>
    %244 = vector.shape_cast %243 : vector<16xf32> to vector<16x1xf32>
    %cst_101 = arith.constant 3.200000e+01 : f32
    %245 = vector.broadcast %cst_101 : f32 to vector<16x1xf32>
    %246 = arith.divf %244, %245 : vector<16x1xf32>
    %247 = vector.broadcast %246 : vector<16x1xf32> to vector<16x32xf32>
    %248 = arith.subf %242, %247 : vector<16x32xf32>
    %249 = arith.mulf %248, %248 : vector<16x32xf32>
    %cst_102 = arith.constant dense<0.000000e+00> : vector<16xf32>
    %250 = vector.multi_reduction <add>, %249, %cst_102 [1] : vector<16x32xf32> to vector<16xf32>
    %251 = vector.shape_cast %250 : vector<16xf32> to vector<16x1xf32>
    %cst_103 = arith.constant 3.200000e+01 : f32
    %252 = vector.broadcast %cst_103 : f32 to vector<16x1xf32>
    %253 = arith.divf %251, %252 : vector<16x1xf32>
    %254 = vector.broadcast %246 : vector<16x1xf32> to vector<16x32xf32>
    %255 = arith.subf %242, %254 : vector<16x32xf32>
    %cst_104 = arith.constant 9.99999974E-6 : f32
    %256 = vector.broadcast %cst_104 : f32 to vector<16x1xf32>
    %257 = arith.addf %253, %256 : vector<16x1xf32>
    %258 = math.rsqrt %257 : vector<16x1xf32>
    %259 = vector.broadcast %258 : vector<16x1xf32> to vector<16x32xf32>
    %260 = arith.mulf %255, %259 : vector<16x32xf32>
    %c0_105 = arith.constant 0 : index
    %c0_106 = arith.constant 0 : index
    %261 = vector.load %arg23[%c0_105, %c0_106] : memref<1x32xf32, #tpu.memory_space<vmem>>, vector<1x32xf32>
    %262 = vector.broadcast %261 : vector<1x32xf32> to vector<16x32xf32>
    %263 = arith.mulf %260, %262 : vector<16x32xf32>
    %c0_107 = arith.constant 0 : index
    %c0_108 = arith.constant 0 : index
    %264 = vector.load %arg24[%c0_107, %c0_108] : memref<1x32xf32, #tpu.memory_space<vmem>>, vector<1x32xf32>
    %265 = vector.broadcast %264 : vector<1x32xf32> to vector<16x32xf32>
    %266 = arith.addf %263, %265 : vector<16x32xf32>
    %c0_109 = arith.constant 0 : index
    %c0_110 = arith.constant 0 : index
    %267 = vector.load %arg25[%c0_109, %c0_110] : memref<16x32xf32, #tpu.memory_space<vmem>>, vector<16x32xf32>
    tpu.vector_store %arg25[%c0_109, %c0_110], %266 {strides = array<i32>} : memref<16x32xf32, #tpu.memory_space<vmem>>, vector<16x32xf32>,
    return
  }
  func.func @transform_0(%arg0: i32) -> (i32, i32) {
    %c0_i32 = arith.constant 0 : i32
    %c0_i32_0 = arith.constant 0 : i32
    %c0_i32_1 = arith.constant 0 : i32
    return %c0_i32, %c0_i32_0 : i32, i32
  }
  func.func @transform_1(%arg0: i32) -> (i32, i32) {
    %c0_i32 = arith.constant 0 : i32
    %c0_i32_0 = arith.constant 0 : i32
    %c0_i32_1 = arith.constant 0 : i32
    return %c0_i32, %c0_i32_0 : i32, i32
  }
  func.func @transform_2(%arg0: i32) -> (i32, i32) {
    %c0_i32 = arith.constant 0 : i32
    %c0_i32_0 = arith.constant 0 : i32
    %c0_i32_1 = arith.constant 0 : i32
    return %c0_i32, %c0_i32_0 : i32, i32
  }
  func.func @transform_3(%arg0: i32) -> (i32, i32) {
    %c0_i32 = arith.constant 0 : i32
    %c0_i32_0 = arith.constant 0 : i32
    %c0_i32_1 = arith.constant 0 : i32
    return %c0_i32, %c0_i32_0 : i32, i32
  }
  func.func @transform_4(%arg0: i32) -> (i32, i32) {
    %c0_i32 = arith.constant 0 : i32
    %c0_i32_0 = arith.constant 0 : i32
    %c0_i32_1 = arith.constant 0 : i32
    return %c0_i32, %c0_i32_0 : i32, i32
  }
  func.func @transform_5(%arg0: i32) -> (i32, i32) {
    %c0_i32 = arith.constant 0 : i32
    %c0_i32_0 = arith.constant 0 : i32
    %c0_i32_1 = arith.constant 0 : i32
    return %c0_i32, %c0_i32_0 : i32, i32
  }
  func.func @transform_6(%arg0: i32) -> (i32, i32) {
    %c0_i32 = arith.constant 0 : i32
    %c0_i32_0 = arith.constant 0 : i32
    %c0_i32_1 = arith.constant 0 : i32
    return %c0_i32, %c0_i32_0 : i32, i32
  }
  func.func @transform_7(%arg0: i32) -> (i32, i32) {
    %c0_i32 = arith.constant 0 : i32
    %c0_i32_0 = arith.constant 0 : i32
    %c0_i32_1 = arith.constant 0 : i32
    return %c0_i32, %c0_i32_0 : i32, i32
  }
  func.func @transform_8(%arg0: i32) -> (i32, i32) {
    %c0_i32 = arith.constant 0 : i32
    %c0_i32_0 = arith.constant 0 : i32
    %c0_i32_1 = arith.constant 0 : i32
    return %c0_i32, %c0_i32_0 : i32, i32
  }
  func.func @transform_9(%arg0: i32) -> (i32, i32) {
    %c0_i32 = arith.constant 0 : i32
    %c0_i32_0 = arith.constant 0 : i32
    %c0_i32_1 = arith.constant 0 : i32
    return %c0_i32, %c0_i32_0 : i32, i32
  }
  func.func @transform_10(%arg0: i32) -> (i32, i32) {
    %c0_i32 = arith.constant 0 : i32
    %c0_i32_0 = arith.constant 0 : i32
    %c0_i32_1 = arith.constant 0 : i32
    return %c0_i32, %c0_i32_0 : i32, i32
  }
  func.func @transform_11(%arg0: i32) -> (i32, i32) {
    %c0_i32 = arith.constant 0 : i32
    %c0_i32_0 = arith.constant 0 : i32
    %c0_i32_1 = arith.constant 0 : i32
    return %c0_i32, %c0_i32_0 : i32, i32
  }
  func.func @transform_12(%arg0: i32) -> (i32, i32) {
    %c0_i32 = arith.constant 0 : i32
    %c0_i32_0 = arith.constant 0 : i32
    %c0_i32_1 = arith.constant 0 : i32
    return %c0_i32, %c0_i32_0 : i32, i32
  }
  func.func @transform_13(%arg0: i32) -> (i32, i32) {
    %c0_i32 = arith.constant 0 : i32
    %c0_i32_0 = arith.constant 0 : i32
    %c0_i32_1 = arith.constant 0 : i32
    return %c0_i32, %c0_i32_0 : i32, i32
  }
  func.func @transform_14(%arg0: i32) -> (i32, i32) {
    %c0_i32 = arith.constant 0 : i32
    %c0_i32_0 = arith.constant 0 : i32
    %c0_i32_1 = arith.constant 0 : i32
    return %c0_i32, %c0_i32_0 : i32, i32
  }
  func.func @transform_15(%arg0: i32) -> (i32, i32) {
    %c0_i32 = arith.constant 0 : i32
    %c0_i32_0 = arith.constant 0 : i32
    %c0_i32_1 = arith.constant 0 : i32
    return %c0_i32, %c0_i32_0 : i32, i32
  }
  func.func @transform_16(%arg0: i32) -> (i32, i32) {
    %c0_i32 = arith.constant 0 : i32
    %c0_i32_0 = arith.constant 0 : i32
    %c0_i32_1 = arith.constant 0 : i32
    return %c0_i32, %c0_i32_0 : i32, i32
  }
  func.func @transform_17(%arg0: i32) -> (i32, i32) {
    %c0_i32 = arith.constant 0 : i32
    %c0_i32_0 = arith.constant 0 : i32
    %c0_i32_1 = arith.constant 0 : i32
    return %c0_i32, %c0_i32_0 : i32, i32
  }
  func.func @transform_18(%arg0: i32) -> (i32, i32) {
    %c0_i32 = arith.constant 0 : i32
    %c0_i32_0 = arith.constant 0 : i32
    %c0_i32_1 = arith.constant 0 : i32
    return %c0_i32, %c0_i32_0 : i32, i32
  }
  func.func @transform_19(%arg0: i32) -> (i32, i32) {
    %c0_i32 = arith.constant 0 : i32
    %c0_i32_0 = arith.constant 0 : i32
    %c0_i32_1 = arith.constant 0 : i32
    return %c0_i32, %c0_i32_0 : i32, i32
  }
  func.func @transform_20(%arg0: i32) -> (i32, i32) {
    %c0_i32 = arith.constant 0 : i32
    %c0_i32_0 = arith.constant 0 : i32
    %c0_i32_1 = arith.constant 0 : i32
    return %c0_i32, %c0_i32_0 : i32, i32
  }
  func.func @transform_21(%arg0: i32) -> (i32, i32) {
    %c0_i32 = arith.constant 0 : i32
    %c0_i32_0 = arith.constant 0 : i32
    %c0_i32_1 = arith.constant 0 : i32
    return %c0_i32, %c0_i32_0 : i32, i32
  }
  func.func @transform_22(%arg0: i32) -> (i32, i32) {
    %c0_i32 = arith.constant 0 : i32
    %c0_i32_0 = arith.constant 0 : i32
    %c0_i32_1 = arith.constant 0 : i32
    return %c0_i32, %c0_i32_0 : i32, i32
  }
  func.func @transform_23(%arg0: i32) -> (i32, i32) {
    %c0_i32 = arith.constant 0 : i32
    %c0_i32_0 = arith.constant 0 : i32
    %c0_i32_1 = arith.constant 0 : i32
    return %c0_i32, %c0_i32_0 : i32, i32
  }
  func.func @transform_24(%arg0: i32) -> (i32, i32) {
    %c0_i32 = arith.constant 0 : i32
    %c0_i32_0 = arith.constant 0 : i32
    %c0_i32_1 = arith.constant 0 : i32
    return %c0_i32, %c0_i32_0 : i32, i32
  }
}

module attributes {stable_mosaic.version = 11 : i64} {
  func.func @_decoder_layer_kernel(%arg0: i32, %arg1: memref<16x32xf32, #tpu.memory_space<vmem>>, %arg2: memref<16x32xf32, #tpu.memory_space<vmem>>, %arg3: memref<16x16xf32, #tpu.memory_space<vmem>>, %arg4: memref<16x16xf32, #tpu.memory_space<vmem>>, %arg5: memref<32x96xf32, #tpu.memory_space<vmem>>, %arg6: memref<1x96xf32, #tpu.memory_space<vmem>>, %arg7: memref<32x32xf32, #tpu.memory_space<vmem>>, %arg8: memref<1x32xf32, #tpu.memory_space<vmem>>, %arg9: memref<32x32xf32, #tpu.memory_space<vmem>>, %arg10: memref<1x32xf32, #tpu.memory_space<vmem>>, %arg11: memref<32x64xf32, #tpu.memory_space<vmem>>, %arg12: memref<1x64xf32, #tpu.memory_space<vmem>>, %arg13: memref<32x32xf32, #tpu.memory_space<vmem>>, %arg14: memref<1x32xf32, #tpu.memory_space<vmem>>, %arg15: memref<32x64xf32, #tpu.memory_space<vmem>>, %arg16: memref<1x64xf32, #tpu.memory_space<vmem>>, %arg17: memref<64x32xf32, #tpu.memory_space<vmem>>, %arg18: memref<1x32xf32, #tpu.memory_space<vmem>>, %arg19: memref<1x32xf32, #tpu.memory_space<vmem>>, %arg20: memref<1x32xf32, #tpu.memory_space<vmem>>, %arg21: memref<1x32xf32, #tpu.memory_space<vmem>>, %arg22: memref<1x32xf32, #tpu.memory_space<vmem>>, %arg23: memref<1x32xf32, #tpu.memory_space<vmem>>, %arg24: memref<1x32xf32, #tpu.memory_space<vmem>>, %arg25: memref<16x32xf32, #tpu.memory_space<vmem>>) attributes {dimension_semantics = [#tpu.dimension_semantics<arbitrary>], iteration_bounds = array<i64: 1>, scalar_prefetch = 0 : i64, scratch_operands = 0 : i64, tpu.core_type = #tpu.core_type<tc>, window_params = [{pipeline_mode = #tpu.pipeline_mode<synchronous>, transform_indices = @transform_0, window_bounds = array<i64: 16, 32>}, {pipeline_mode = #tpu.pipeline_mode<synchronous>, transform_indices = @transform_1, window_bounds = array<i64: 16, 32>}, {pipeline_mode = #tpu.pipeline_mode<synchronous>, transform_indices = @transform_2, window_bounds = array<i64: 16, 16>}, {pipeline_mode = #tpu.pipeline_mode<synchronous>, transform_indices = @transform_3, window_bounds = array<i64: 16, 16>}, {pipeline_mode = #tpu.pipeline_mode<synchronous>, transform_indices = @transform_4, window_bounds = array<i64: 32, 96>}, {pipeline_mode = #tpu.pipeline_mode<synchronous>, transform_indices = @transform_5, window_bounds = array<i64: 1, 96>}, {pipeline_mode = #tpu.pipeline_mode<synchronous>, transform_indices = @transform_6, window_bounds = array<i64: 32, 32>}, {pipeline_mode = #tpu.pipeline_mode<synchronous>, transform_indices = @transform_7, window_bounds = array<i64: 1, 32>}, {pipeline_mode = #tpu.pipeline_mode<synchronous>, transform_indices = @transform_8, window_bounds = array<i64: 32, 32>}, {pipeline_mode = #tpu.pipeline_mode<synchronous>, transform_indices = @transform_9, window_bounds = array<i64: 1, 32>}, {pipeline_mode = #tpu.pipeline_mode<synchronous>, transform_indices = @transform_10, window_bounds = array<i64: 32, 64>}, {pipeline_mode = #tpu.pipeline_mode<synchronous>, transform_indices = @transform_11, window_bounds = array<i64: 1, 64>}, {pipeline_mode = #tpu.pipeline_mode<synchronous>, transform_indices = @transform_12, window_bounds = array<i64: 32, 32>}, {pipeline_mode = #tpu.pipeline_mode<synchronous>, transform_indices = @transform_13, window_bounds = array<i64: 1, 32>}, {pipeline_mode = #tpu.pipeline_mode<synchronous>, transform_indices = @transform_14, window_bounds = array<i64: 32, 64>}, {pipeline_mode = #tpu.pipeline_mode<synchronous>, transform_indices = @transform_15, window_bounds = array<i64: 1, 64>}, {pipeline_mode = #tpu.pipeline_mode<synchronous>, transform_indices = @transform_16, window_bounds = array<i64: 64, 32>}, {pipeline_mode = #tpu.pipeline_mode<synchronous>, transform_indices = @transform_17, window_bounds = array<i64: 1, 32>}, {pipeline_mode = #tpu.pipeline_mode<synchronous>, transform_indices = @transform_18, window_bounds = array<i64: 1, 32>}, {pipeline_mode = #tpu.pipeline_mode<synchronous>, transform_indices = @transform_19, window_bounds = array<i64: 1, 32>}, {pipeline_mode = #tpu.pipeline_mode<synchronous>, transform_indices = @transform_20, window_bounds = array<i64: 1, 32>}, {pipeline_mode = #tpu.pipeline_mode<synchronous>, transform_indices = @transform_21, window_bounds = array<i64: 1, 32>}, {pipeline_mode = #tpu.pipeline_mode<synchronous>, transform_indices = @transform_22, window_bounds = array<i64: 1, 32>}, {pipeline_mode = #tpu.pipeline_mode<synchronous>, transform_indices = @transform_23, window_bounds = array<i64: 1, 32>}, {pipeline_mode = #tpu.pipeline_mode<synchronous>, transform_indices = @transform_24, window_bounds = array<i64: 16, 32>}]} {
    %c0 = arith.constant 0 : index
    %c0_0 = arith.constant 0 : index
    %0 = vector.load %arg1[%c0, %c0_0] : memref<16x32xf32, #tpu.memory_space<vmem>>, vector<16x32xf32>
    %c0_1 = arith.constant 0 : index
    %c0_2 = arith.constant 0 : index
    %1 = vector.load %arg2[%c0_1, %c0_2] : memref<16x32xf32, #tpu.memory_space<vmem>>, vector<16x32xf32>
    %c0_3 = arith.constant 0 : index
    %c0_4 = arith.constant 0 : index
    %2 = vector.load %arg3[%c0_3, %c0_4] : memref<16x16xf32, #tpu.memory_space<vmem>>, vector<16x16xf32>
    %c0_5 = arith.constant 0 : index
    %c0_6 = arith.constant 0 : index
    %3 = vector.load %arg4[%c0_5, %c0_6] : memref<16x16xf32, #tpu.memory_space<vmem>>, vector<16x16xf32>
    %c0_7 = arith.constant 0 : index
    %c0_8 = arith.constant 0 : index
    %4 = vector.load %arg5[%c0_7, %c0_8] : memref<32x96xf32, #tpu.memory_space<vmem>>, vector<32x96xf32>
    %cst = arith.constant dense<0.000000e+00> : vector<16x96xf32>
    %5 = tpu.matmul %0, %4, %cst {dimension_numbers = #tpu.dot_dimension_numbers<[1], [0], [0], [1], [0, 0, 1, 1], [], []>} : vector<16x32xf32>, vector<32x96xf32>, vector<16x96xf32> -> vector<16x96xf32>
    %c0_9 = arith.constant 0 : index
    %c0_10 = arith.constant 0 : index
    %6 = vector.load %arg6[%c0_9, %c0_10] : memref<1x96xf32, #tpu.memory_space<vmem>>, vector<1x96xf32>
    %7 = vector.broadcast %6 : vector<1x96xf32> to vector<16x96xf32>
    %8 = arith.addf %5, %7 : vector<16x96xf32>
    %9 = vector.extract_strided_slice %8 {offsets = [0, 0], sizes = [16, 32], strides = [1, 1]} : vector<16x96xf32> to vector<16x32xf32>
    %10 = vector.extract_strided_slice %8 {offsets = [0, 32], sizes = [16, 32], strides = [1, 1]} : vector<16x96xf32> to vector<16x32xf32>
    %11 = vector.extract_strided_slice %8 {offsets = [0, 64], sizes = [16, 32], strides = [1, 1]} : vector<16x96xf32> to vector<16x32xf32>
    %12 = vector.extract_strided_slice %9 {offsets = [0, 0], sizes = [16, 8], strides = [1, 1]} : vector<16x32xf32> to vector<16x8xf32>
    %13 = vector.extract_strided_slice %10 {offsets = [0, 0], sizes = [16, 8], strides = [1, 1]} : vector<16x32xf32> to vector<16x8xf32>
    %14 = vector.extract_strided_slice %11 {offsets = [0, 0], sizes = [16, 8], strides = [1, 1]} : vector<16x32xf32> to vector<16x8xf32>
    %cst_11 = arith.constant dense<0.000000e+00> : vector<16x16xf32>
    %15 = tpu.matmul %12, %13, %cst_11 {dimension_numbers = #tpu.dot_dimension_numbers<[1], [1], [0], [0], [0, 0, 1, 0], [], []>} : vector<16x8xf32>, vector<16x8xf32>, vector<16x16xf32> -> vector<16x16xf32>
    %cst_12 = arith.constant 0.353553385 : f32
    %16 = vector.broadcast %cst_12 : f32 to vector<16x16xf32>
    %17 = arith.mulf %15, %16 : vector<16x16xf32>
    %18 = arith.addf %17, %2 : vector<16x16xf32>
    %cst_13 = arith.constant dense<0xFF800000> : vector<16xf32>
    %19 = vector.multi_reduction <maximumf>, %18, %cst_13 [1] : vector<16x16xf32> to vector<16xf32>
    %20 = vector.shape_cast %19 : vector<16xf32> to vector<16x1xf32>
    %21 = vector.broadcast %20 : vector<16x1xf32> to vector<16x16xf32>
    %22 = arith.subf %18, %21 : vector<16x16xf32>
    %23 = math.exp %22 : vector<16x16xf32>
    %cst_14 = arith.constant dense<0.000000e+00> : vector<16xf32>
    %24 = vector.multi_reduction <add>, %23, %cst_14 [1] : vector<16x16xf32> to vector<16xf32>
    %25 = vector.shape_cast %24 : vector<16xf32> to vector<16x1xf32>
    %26 = tpu.reciprocal %25 {approx = true} : vector<16x1xf32> -> vector<16x1xf32>
    %27 = vector.broadcast %26 : vector<16x1xf32> to vector<16x16xf32>
    %28 = arith.mulf %23, %27 : vector<16x16xf32>
    %cst_15 = arith.constant dense<0.000000e+00> : vector<16x8xf32>
    %29 = tpu.matmul %28, %14, %cst_15 {dimension_numbers = #tpu.dot_dimension_numbers<[1], [0], [0], [1], [0, 0, 1, 1], [], []>} : vector<16x16xf32>, vector<16x8xf32>, vector<16x8xf32> -> vector<16x8xf32>
    %30 = vector.extract_strided_slice %9 {offsets = [0, 8], sizes = [16, 8], strides = [1, 1]} : vector<16x32xf32> to vector<16x8xf32>
    %31 = vector.extract_strided_slice %10 {offsets = [0, 8], sizes = [16, 8], strides = [1, 1]} : vector<16x32xf32> to vector<16x8xf32>
    %32 = vector.extract_strided_slice %11 {offsets = [0, 8], sizes = [16, 8], strides = [1, 1]} : vector<16x32xf32> to vector<16x8xf32>
    %cst_16 = arith.constant dense<0.000000e+00> : vector<16x16xf32>
    %33 = tpu.matmul %30, %31, %cst_16 {dimension_numbers = #tpu.dot_dimension_numbers<[1], [1], [0], [0], [0, 0, 1, 0], [], []>} : vector<16x8xf32>, vector<16x8xf32>, vector<16x16xf32> -> vector<16x16xf32>
    %cst_17 = arith.constant 0.353553385 : f32
    %34 = vector.broadcast %cst_17 : f32 to vector<16x16xf32>
    %35 = arith.mulf %33, %34 : vector<16x16xf32>
    %36 = arith.addf %35, %2 : vector<16x16xf32>
    %cst_18 = arith.constant dense<0xFF800000> : vector<16xf32>
    %37 = vector.multi_reduction <maximumf>, %36, %cst_18 [1] : vector<16x16xf32> to vector<16xf32>
    %38 = vector.shape_cast %37 : vector<16xf32> to vector<16x1xf32>
    %39 = vector.broadcast %38 : vector<16x1xf32> to vector<16x16xf32>
    %40 = arith.subf %36, %39 : vector<16x16xf32>
    %41 = math.exp %40 : vector<16x16xf32>
    %cst_19 = arith.constant dense<0.000000e+00> : vector<16xf32>
    %42 = vector.multi_reduction <add>, %41, %cst_19 [1] : vector<16x16xf32> to vector<16xf32>
    %43 = vector.shape_cast %42 : vector<16xf32> to vector<16x1xf32>
    %44 = tpu.reciprocal %43 {approx = true} : vector<16x1xf32> -> vector<16x1xf32>
    %45 = vector.broadcast %44 : vector<16x1xf32> to vector<16x16xf32>
    %46 = arith.mulf %41, %45 : vector<16x16xf32>
    %cst_20 = arith.constant dense<0.000000e+00> : vector<16x8xf32>
    %47 = tpu.matmul %46, %32, %cst_20 {dimension_numbers = #tpu.dot_dimension_numbers<[1], [0], [0], [1], [0, 0, 1, 1], [], []>} : vector<16x16xf32>, vector<16x8xf32>, vector<16x8xf32> -> vector<16x8xf32>
    %48 = vector.extract_strided_slice %9 {offsets = [0, 16], sizes = [16, 8], strides = [1, 1]} : vector<16x32xf32> to vector<16x8xf32>
    %49 = vector.extract_strided_slice %10 {offsets = [0, 16], sizes = [16, 8], strides = [1, 1]} : vector<16x32xf32> to vector<16x8xf32>
    %50 = vector.extract_strided_slice %11 {offsets = [0, 16], sizes = [16, 8], strides = [1, 1]} : vector<16x32xf32> to vector<16x8xf32>
    %cst_21 = arith.constant dense<0.000000e+00> : vector<16x16xf32>
    %51 = tpu.matmul %48, %49, %cst_21 {dimension_numbers = #tpu.dot_dimension_numbers<[1], [1], [0], [0], [0, 0, 1, 0], [], []>} : vector<16x8xf32>, vector<16x8xf32>, vector<16x16xf32> -> vector<16x16xf32>
    %cst_22 = arith.constant 0.353553385 : f32
    %52 = vector.broadcast %cst_22 : f32 to vector<16x16xf32>
    %53 = arith.mulf %51, %52 : vector<16x16xf32>
    %54 = arith.addf %53, %2 : vector<16x16xf32>
    %cst_23 = arith.constant dense<0xFF800000> : vector<16xf32>
    %55 = vector.multi_reduction <maximumf>, %54, %cst_23 [1] : vector<16x16xf32> to vector<16xf32>
    %56 = vector.shape_cast %55 : vector<16xf32> to vector<16x1xf32>
    %57 = vector.broadcast %56 : vector<16x1xf32> to vector<16x16xf32>
    %58 = arith.subf %54, %57 : vector<16x16xf32>
    %59 = math.exp %58 : vector<16x16xf32>
    %cst_24 = arith.constant dense<0.000000e+00> : vector<16xf32>
    %60 = vector.multi_reduction <add>, %59, %cst_24 [1] : vector<16x16xf32> to vector<16xf32>
    %61 = vector.shape_cast %60 : vector<16xf32> to vector<16x1xf32>
    %62 = tpu.reciprocal %61 {approx = true} : vector<16x1xf32> -> vector<16x1xf32>
    %63 = vector.broadcast %62 : vector<16x1xf32> to vector<16x16xf32>
    %64 = arith.mulf %59, %63 : vector<16x16xf32>
    %cst_25 = arith.constant dense<0.000000e+00> : vector<16x8xf32>
    %65 = tpu.matmul %64, %50, %cst_25 {dimension_numbers = #tpu.dot_dimension_numbers<[1], [0], [0], [1], [0, 0, 1, 1], [], []>} : vector<16x16xf32>, vector<16x8xf32>, vector<16x8xf32> -> vector<16x8xf32>
    %66 = vector.extract_strided_slice %9 {offsets = [0, 24], sizes = [16, 8], strides = [1, 1]} : vector<16x32xf32> to vector<16x8xf32>
    %67 = vector.extract_strided_slice %10 {offsets = [0, 24], sizes = [16, 8], strides = [1, 1]} : vector<16x32xf32> to vector<16x8xf32>
    %68 = vector.extract_strided_slice %11 {offsets = [0, 24], sizes = [16, 8], strides = [1, 1]} : vector<16x32xf32> to vector<16x8xf32>
    %cst_26 = arith.constant dense<0.000000e+00> : vector<16x16xf32>
    %69 = tpu.matmul %66, %67, %cst_26 {dimension_numbers = #tpu.dot_dimension_numbers<[1], [1], [0], [0], [0, 0, 1, 0], [], []>} : vector<16x8xf32>, vector<16x8xf32>, vector<16x16xf32> -> vector<16x16xf32>
    %cst_27 = arith.constant 0.353553385 : f32
    %70 = vector.broadcast %cst_27 : f32 to vector<16x16xf32>
    %71 = arith.mulf %69, %70 : vector<16x16xf32>
    %72 = arith.addf %71, %2 : vector<16x16xf32>
    %cst_28 = arith.constant dense<0xFF800000> : vector<16xf32>
    %73 = vector.multi_reduction <maximumf>, %72, %cst_28 [1] : vector<16x16xf32> to vector<16xf32>
    %74 = vector.shape_cast %73 : vector<16xf32> to vector<16x1xf32>
    %75 = vector.broadcast %74 : vector<16x1xf32> to vector<16x16xf32>
    %76 = arith.subf %72, %75 : vector<16x16xf32>
    %77 = math.exp %76 : vector<16x16xf32>
    %cst_29 = arith.constant dense<0.000000e+00> : vector<16xf32>
    %78 = vector.multi_reduction <add>, %77, %cst_29 [1] : vector<16x16xf32> to vector<16xf32>
    %79 = vector.shape_cast %78 : vector<16xf32> to vector<16x1xf32>
    %80 = tpu.reciprocal %79 {approx = true} : vector<16x1xf32> -> vector<16x1xf32>
    %81 = vector.broadcast %80 : vector<16x1xf32> to vector<16x16xf32>
    %82 = arith.mulf %77, %81 : vector<16x16xf32>
    %cst_30 = arith.constant dense<0.000000e+00> : vector<16x8xf32>
    %83 = tpu.matmul %82, %68, %cst_30 {dimension_numbers = #tpu.dot_dimension_numbers<[1], [0], [0], [1], [0, 0, 1, 1], [], []>} : vector<16x16xf32>, vector<16x8xf32>, vector<16x8xf32> -> vector<16x8xf32>
    %84 = tpu.concatenate %29, %47, %65, %83 in 1 : vector<16x8xf32>, vector<16x8xf32>, vector<16x8xf32>, vector<16x8xf32> -> vector<16x32xf32>
    %c0_31 = arith.constant 0 : index
    %c0_32 = arith.constant 0 : index
    %85 = vector.load %arg7[%c0_31, %c0_32] : memref<32x32xf32, #tpu.memory_space<vmem>>, vector<32x32xf32>
    %cst_33 = arith.constant dense<0.000000e+00> : vector<16x32xf32>
    %86 = tpu.matmul %84, %85, %cst_33 {dimension_numbers = #tpu.dot_dimension_numbers<[1], [0], [0], [1], [0, 0, 1, 1], [], []>} : vector<16x32xf32>, vector<32x32xf32>, vector<16x32xf32> -> vector<16x32xf32>
    %c0_34 = arith.constant 0 : index
    %c0_35 = arith.constant 0 : index
    %87 = vector.load %arg8[%c0_34, %c0_35] : memref<1x32xf32, #tpu.memory_space<vmem>>, vector<1x32xf32>
    %88 = vector.broadcast %87 : vector<1x32xf32> to vector<16x32xf32>
    %89 = arith.addf %86, %88 : vector<16x32xf32>
    %90 = arith.addf %0, %89 : vector<16x32xf32>
    %cst_36 = arith.constant dense<0.000000e+00> : vector<16xf32>
    %91 = vector.multi_reduction <add>, %90, %cst_36 [1] : vector<16x32xf32> to vector<16xf32>
    %92 = vector.shape_cast %91 : vector<16xf32> to vector<16x1xf32>
    %cst_37 = arith.constant 3.200000e+01 : f32
    %93 = vector.broadcast %cst_37 : f32 to vector<16x1xf32>
    %94 = arith.divf %92, %93 : vector<16x1xf32>
    %95 = vector.broadcast %94 : vector<16x1xf32> to vector<16x32xf32>
    %96 = arith.subf %90, %95 : vector<16x32xf32>
    %97 = arith.mulf %96, %96 : vector<16x32xf32>
    %cst_38 = arith.constant dense<0.000000e+00> : vector<16xf32>
    %98 = vector.multi_reduction <add>, %97, %cst_38 [1] : vector<16x32xf32> to vector<16xf32>
    %99 = vector.shape_cast %98 : vector<16xf32> to vector<16x1xf32>
    %cst_39 = arith.constant 3.200000e+01 : f32
    %100 = vector.broadcast %cst_39 : f32 to vector<16x1xf32>
    %101 = arith.divf %99, %100 : vector<16x1xf32>
    %102 = vector.broadcast %94 : vector<16x1xf32> to vector<16x32xf32>
    %103 = arith.subf %90, %102 : vector<16x32xf32>
    %cst_40 = arith.constant 9.99999974E-6 : f32
    %104 = vector.broadcast %cst_40 : f32 to vector<16x1xf32>
    %105 = arith.addf %101, %104 : vector<16x1xf32>
    %106 = math.rsqrt %105 : vector<16x1xf32>
    %107 = vector.broadcast %106 : vector<16x1xf32> to vector<16x32xf32>
    %108 = arith.mulf %103, %107 : vector<16x32xf32>
    %c0_41 = arith.constant 0 : index
    %c0_42 = arith.constant 0 : index
    %109 = vector.load %arg19[%c0_41, %c0_42] : memref<1x32xf32, #tpu.memory_space<vmem>>, vector<1x32xf32>
    %110 = vector.broadcast %109 : vector<1x32xf32> to vector<16x32xf32>
    %111 = arith.mulf %108, %110 : vector<16x32xf32>
    %c0_43 = arith.constant 0 : index
    %c0_44 = arith.constant 0 : index
    %112 = vector.load %arg20[%c0_43, %c0_44] : memref<1x32xf32, #tpu.memory_space<vmem>>, vector<1x32xf32>
    %113 = vector.broadcast %112 : vector<1x32xf32> to vector<16x32xf32>
    %114 = arith.addf %111, %113 : vector<16x32xf32>
    %c0_45 = arith.constant 0 : index
    %c0_46 = arith.constant 0 : index
    %115 = vector.load %arg9[%c0_45, %c0_46] : memref<32x32xf32, #tpu.memory_space<vmem>>, vector<32x32xf32>
    %cst_47 = arith.constant dense<0.000000e+00> : vector<16x32xf32>
    %116 = tpu.matmul %114, %115, %cst_47 {dimension_numbers = #tpu.dot_dimension_numbers<[1], [0], [0], [1], [0, 0, 1, 1], [], []>} : vector<16x32xf32>, vector<32x32xf32>, vector<16x32xf32> -> vector<16x32xf32>
    %c0_48 = arith.constant 0 : index
    %c0_49 = arith.constant 0 : index
    %117 = vector.load %arg10[%c0_48, %c0_49] : memref<1x32xf32, #tpu.memory_space<vmem>>, vector<1x32xf32>
    %118 = vector.broadcast %117 : vector<1x32xf32> to vector<16x32xf32>
    %119 = arith.addf %116, %118 : vector<16x32xf32>
    %c0_50 = arith.constant 0 : index
    %c0_51 = arith.constant 0 : index
    %120 = vector.load %arg11[%c0_50, %c0_51] : memref<32x64xf32, #tpu.memory_space<vmem>>, vector<32x64xf32>
    %cst_52 = arith.constant dense<0.000000e+00> : vector<16x64xf32>
    %121 = tpu.matmul %1, %120, %cst_52 {dimension_numbers = #tpu.dot_dimension_numbers<[1], [0], [0], [1], [0, 0, 1, 1], [], []>} : vector<16x32xf32>, vector<32x64xf32>, vector<16x64xf32> -> vector<16x64xf32>
    %c0_53 = arith.constant 0 : index
    %c0_54 = arith.constant 0 : index
    %122 = vector.load %arg12[%c0_53, %c0_54] : memref<1x64xf32, #tpu.memory_space<vmem>>, vector<1x64xf32>
    %123 = vector.broadcast %122 : vector<1x64xf32> to vector<16x64xf32>
    %124 = arith.addf %121, %123 : vector<16x64xf32>
    %125 = vector.extract_strided_slice %124 {offsets = [0, 0], sizes = [16, 32], strides = [1, 1]} : vector<16x64xf32> to vector<16x32xf32>
    %126 = vector.extract_strided_slice %124 {offsets = [0, 32], sizes = [16, 32], strides = [1, 1]} : vector<16x64xf32> to vector<16x32xf32>
    %127 = vector.extract_strided_slice %119 {offsets = [0, 0], sizes = [16, 8], strides = [1, 1]} : vector<16x32xf32> to vector<16x8xf32>
    %128 = vector.extract_strided_slice %125 {offsets = [0, 0], sizes = [16, 8], strides = [1, 1]} : vector<16x32xf32> to vector<16x8xf32>
    %129 = vector.extract_strided_slice %126 {offsets = [0, 0], sizes = [16, 8], strides = [1, 1]} : vector<16x32xf32> to vector<16x8xf32>
    %cst_55 = arith.constant dense<0.000000e+00> : vector<16x16xf32>
    %130 = tpu.matmul %127, %128, %cst_55 {dimension_numbers = #tpu.dot_dimension_numbers<[1], [1], [0], [0], [0, 0, 1, 0], [], []>} : vector<16x8xf32>, vector<16x8xf32>, vector<16x16xf32> -> vector<16x16xf32>
    %cst_56 = arith.constant 0.353553385 : f32
    %131 = vector.broadcast %cst_56 : f32 to vector<16x16xf32>
    %132 = arith.mulf %130, %131 : vector<16x16xf32>
    %133 = arith.addf %132, %3 : vector<16x16xf32>
    %cst_57 = arith.constant dense<0xFF800000> : vector<16xf32>
    %134 = vector.multi_reduction <maximumf>, %133, %cst_57 [1] : vector<16x16xf32> to vector<16xf32>
    %135 = vector.shape_cast %134 : vector<16xf32> to vector<16x1xf32>
    %136 = vector.broadcast %135 : vector<16x1xf32> to vector<16x16xf32>
    %137 = arith.subf %133, %136 : vector<16x16xf32>
    %138 = math.exp %137 : vector<16x16xf32>
    %cst_58 = arith.constant dense<0.000000e+00> : vector<16xf32>
    %139 = vector.multi_reduction <add>, %138, %cst_58 [1] : vector<16x16xf32> to vector<16xf32>
    %140 = vector.shape_cast %139 : vector<16xf32> to vector<16x1xf32>
    %141 = tpu.reciprocal %140 {approx = true} : vector<16x1xf32> -> vector<16x1xf32>
    %142 = vector.broadcast %141 : vector<16x1xf32> to vector<16x16xf32>
    %143 = arith.mulf %138, %142 : vector<16x16xf32>
    %cst_59 = arith.constant dense<0.000000e+00> : vector<16x8xf32>
    %144 = tpu.matmul %143, %129, %cst_59 {dimension_numbers = #tpu.dot_dimension_numbers<[1], [0], [0], [1], [0, 0, 1, 1], [], []>} : vector<16x16xf32>, vector<16x8xf32>, vector<16x8xf32> -> vector<16x8xf32>
    %145 = vector.extract_strided_slice %119 {offsets = [0, 8], sizes = [16, 8], strides = [1, 1]} : vector<16x32xf32> to vector<16x8xf32>
    %146 = vector.extract_strided_slice %125 {offsets = [0, 8], sizes = [16, 8], strides = [1, 1]} : vector<16x32xf32> to vector<16x8xf32>
    %147 = vector.extract_strided_slice %126 {offsets = [0, 8], sizes = [16, 8], strides = [1, 1]} : vector<16x32xf32> to vector<16x8xf32>
    %cst_60 = arith.constant dense<0.000000e+00> : vector<16x16xf32>
    %148 = tpu.matmul %145, %146, %cst_60 {dimension_numbers = #tpu.dot_dimension_numbers<[1], [1], [0], [0], [0, 0, 1, 0], [], []>} : vector<16x8xf32>, vector<16x8xf32>, vector<16x16xf32> -> vector<16x16xf32>
    %cst_61 = arith.constant 0.353553385 : f32
    %149 = vector.broadcast %cst_61 : f32 to vector<16x16xf32>
    %150 = arith.mulf %148, %149 : vector<16x16xf32>
    %151 = arith.addf %150, %3 : vector<16x16xf32>
    %cst_62 = arith.constant dense<0xFF800000> : vector<16xf32>
    %152 = vector.multi_reduction <maximumf>, %151, %cst_62 [1] : vector<16x16xf32> to vector<16xf32>
    %153 = vector.shape_cast %152 : vector<16xf32> to vector<16x1xf32>
    %154 = vector.broadcast %153 : vector<16x1xf32> to vector<16x16xf32>
    %155 = arith.subf %151, %154 : vector<16x16xf32>
    %156 = math.exp %155 : vector<16x16xf32>
    %cst_63 = arith.constant dense<0.000000e+00> : vector<16xf32>
    %157 = vector.multi_reduction <add>, %156, %cst_63 [1] : vector<16x16xf32> to vector<16xf32>
    %158 = vector.shape_cast %157 : vector<16xf32> to vector<16x1xf32>
    %159 = tpu.reciprocal %158 {approx = true} : vector<16x1xf32> -> vector<16x1xf32>
    %160 = vector.broadcast %159 : vector<16x1xf32> to vector<16x16xf32>
    %161 = arith.mulf %156, %160 : vector<16x16xf32>
    %cst_64 = arith.constant dense<0.000000e+00> : vector<16x8xf32>
    %162 = tpu.matmul %161, %147, %cst_64 {dimension_numbers = #tpu.dot_dimension_numbers<[1], [0], [0], [1], [0, 0, 1, 1], [], []>} : vector<16x16xf32>, vector<16x8xf32>, vector<16x8xf32> -> vector<16x8xf32>
    %163 = vector.extract_strided_slice %119 {offsets = [0, 16], sizes = [16, 8], strides = [1, 1]} : vector<16x32xf32> to vector<16x8xf32>
    %164 = vector.extract_strided_slice %125 {offsets = [0, 16], sizes = [16, 8], strides = [1, 1]} : vector<16x32xf32> to vector<16x8xf32>
    %165 = vector.extract_strided_slice %126 {offsets = [0, 16], sizes = [16, 8], strides = [1, 1]} : vector<16x32xf32> to vector<16x8xf32>
    %cst_65 = arith.constant dense<0.000000e+00> : vector<16x16xf32>
    %166 = tpu.matmul %163, %164, %cst_65 {dimension_numbers = #tpu.dot_dimension_numbers<[1], [1], [0], [0], [0, 0, 1, 0], [], []>} : vector<16x8xf32>, vector<16x8xf32>, vector<16x16xf32> -> vector<16x16xf32>
    %cst_66 = arith.constant 0.353553385 : f32
    %167 = vector.broadcast %cst_66 : f32 to vector<16x16xf32>
    %168 = arith.mulf %166, %167 : vector<16x16xf32>
    %169 = arith.addf %168, %3 : vector<16x16xf32>
    %cst_67 = arith.constant dense<0xFF800000> : vector<16xf32>
    %170 = vector.multi_reduction <maximumf>, %169, %cst_67 [1] : vector<16x16xf32> to vector<16xf32>
    %171 = vector.shape_cast %170 : vector<16xf32> to vector<16x1xf32>
    %172 = vector.broadcast %171 : vector<16x1xf32> to vector<16x16xf32>
    %173 = arith.subf %169, %172 : vector<16x16xf32>
    %174 = math.exp %173 : vector<16x16xf32>
    %cst_68 = arith.constant dense<0.000000e+00> : vector<16xf32>
    %175 = vector.multi_reduction <add>, %174, %cst_68 [1] : vector<16x16xf32> to vector<16xf32>
    %176 = vector.shape_cast %175 : vector<16xf32> to vector<16x1xf32>
    %177 = tpu.reciprocal %176 {approx = true} : vector<16x1xf32> -> vector<16x1xf32>
    %178 = vector.broadcast %177 : vector<16x1xf32> to vector<16x16xf32>
    %179 = arith.mulf %174, %178 : vector<16x16xf32>
    %cst_69 = arith.constant dense<0.000000e+00> : vector<16x8xf32>
    %180 = tpu.matmul %179, %165, %cst_69 {dimension_numbers = #tpu.dot_dimension_numbers<[1], [0], [0], [1], [0, 0, 1, 1], [], []>} : vector<16x16xf32>, vector<16x8xf32>, vector<16x8xf32> -> vector<16x8xf32>
    %181 = vector.extract_strided_slice %119 {offsets = [0, 24], sizes = [16, 8], strides = [1, 1]} : vector<16x32xf32> to vector<16x8xf32>
    %182 = vector.extract_strided_slice %125 {offsets = [0, 24], sizes = [16, 8], strides = [1, 1]} : vector<16x32xf32> to vector<16x8xf32>
    %183 = vector.extract_strided_slice %126 {offsets = [0, 24], sizes = [16, 8], strides = [1, 1]} : vector<16x32xf32> to vector<16x8xf32>
    %cst_70 = arith.constant dense<0.000000e+00> : vector<16x16xf32>
    %184 = tpu.matmul %181, %182, %cst_70 {dimension_numbers = #tpu.dot_dimension_numbers<[1], [1], [0], [0], [0, 0, 1, 0], [], []>} : vector<16x8xf32>, vector<16x8xf32>, vector<16x16xf32> -> vector<16x16xf32>
    %cst_71 = arith.constant 0.353553385 : f32
    %185 = vector.broadcast %cst_71 : f32 to vector<16x16xf32>
    %186 = arith.mulf %184, %185 : vector<16x16xf32>
    %187 = arith.addf %186, %3 : vector<16x16xf32>
    %cst_72 = arith.constant dense<0xFF800000> : vector<16xf32>
    %188 = vector.multi_reduction <maximumf>, %187, %cst_72 [1] : vector<16x16xf32> to vector<16xf32>
    %189 = vector.shape_cast %188 : vector<16xf32> to vector<16x1xf32>
    %190 = vector.broadcast %189 : vector<16x1xf32> to vector<16x16xf32>
    %191 = arith.subf %187, %190 : vector<16x16xf32>
    %192 = math.exp %191 : vector<16x16xf32>
    %cst_73 = arith.constant dense<0.000000e+00> : vector<16xf32>
    %193 = vector.multi_reduction <add>, %192, %cst_73 [1] : vector<16x16xf32> to vector<16xf32>
    %194 = vector.shape_cast %193 : vector<16xf32> to vector<16x1xf32>
    %195 = tpu.reciprocal %194 {approx = true} : vector<16x1xf32> -> vector<16x1xf32>
    %196 = vector.broadcast %195 : vector<16x1xf32> to vector<16x16xf32>
    %197 = arith.mulf %192, %196 : vector<16x16xf32>
    %cst_74 = arith.constant dense<0.000000e+00> : vector<16x8xf32>
    %198 = tpu.matmul %197, %183, %cst_74 {dimension_numbers = #tpu.dot_dimension_numbers<[1], [0], [0], [1], [0, 0, 1, 1], [], []>} : vector<16x16xf32>, vector<16x8xf32>, vector<16x8xf32> -> vector<16x8xf32>
    %199 = tpu.concatenate %144, %162, %180, %198 in 1 : vector<16x8xf32>, vector<16x8xf32>, vector<16x8xf32>, vector<16x8xf32> -> vector<16x32xf32>
    %c0_75 = arith.constant 0 : index
    %c0_76 = arith.constant 0 : index
    %200 = vector.load %arg13[%c0_75, %c0_76] : memref<32x32xf32, #tpu.memory_space<vmem>>, vector<32x32xf32>
    %cst_77 = arith.constant dense<0.000000e+00> : vector<16x32xf32>
    %201 = tpu.matmul %199, %200, %cst_77 {dimension_numbers = #tpu.dot_dimension_numbers<[1], [0], [0], [1], [0, 0, 1, 1], [], []>} : vector<16x32xf32>, vector<32x32xf32>, vector<16x32xf32> -> vector<16x32xf32>
    %c0_78 = arith.constant 0 : index
    %c0_79 = arith.constant 0 : index
    %202 = vector.load %arg14[%c0_78, %c0_79] : memref<1x32xf32, #tpu.memory_space<vmem>>, vector<1x32xf32>
    %203 = vector.broadcast %202 : vector<1x32xf32> to vector<16x32xf32>
    %204 = arith.addf %201, %203 : vector<16x32xf32>
    %205 = arith.addf %114, %204 : vector<16x32xf32>
    %cst_80 = arith.constant dense<0.000000e+00> : vector<16xf32>
    %206 = vector.multi_reduction <add>, %205, %cst_80 [1] : vector<16x32xf32> to vector<16xf32>
    %207 = vector.shape_cast %206 : vector<16xf32> to vector<16x1xf32>
    %cst_81 = arith.constant 3.200000e+01 : f32
    %208 = vector.broadcast %cst_81 : f32 to vector<16x1xf32>
    %209 = arith.divf %207, %208 : vector<16x1xf32>
    %210 = vector.broadcast %209 : vector<16x1xf32> to vector<16x32xf32>
    %211 = arith.subf %205, %210 : vector<16x32xf32>
    %212 = arith.mulf %211, %211 : vector<16x32xf32>
    %cst_82 = arith.constant dense<0.000000e+00> : vector<16xf32>
    %213 = vector.multi_reduction <add>, %212, %cst_82 [1] : vector<16x32xf32> to vector<16xf32>
    %214 = vector.shape_cast %213 : vector<16xf32> to vector<16x1xf32>
    %cst_83 = arith.constant 3.200000e+01 : f32
    %215 = vector.broadcast %cst_83 : f32 to vector<16x1xf32>
    %216 = arith.divf %214, %215 : vector<16x1xf32>
    %217 = vector.broadcast %209 : vector<16x1xf32> to vector<16x32xf32>
    %218 = arith.subf %205, %217 : vector<16x32xf32>
    %cst_84 = arith.constant 9.99999974E-6 : f32
    %219 = vector.broadcast %cst_84 : f32 to vector<16x1xf32>
    %220 = arith.addf %216, %219 : vector<16x1xf32>
    %221 = math.rsqrt %220 : vector<16x1xf32>
    %222 = vector.broadcast %221 : vector<16x1xf32> to vector<16x32xf32>
    %223 = arith.mulf %218, %222 : vector<16x32xf32>
    %c0_85 = arith.constant 0 : index
    %c0_86 = arith.constant 0 : index
    %224 = vector.load %arg21[%c0_85, %c0_86] : memref<1x32xf32, #tpu.memory_space<vmem>>, vector<1x32xf32>
    %225 = vector.broadcast %224 : vector<1x32xf32> to vector<16x32xf32>
    %226 = arith.mulf %223, %225 : vector<16x32xf32>
    %c0_87 = arith.constant 0 : index
    %c0_88 = arith.constant 0 : index
    %227 = vector.load %arg22[%c0_87, %c0_88] : memref<1x32xf32, #tpu.memory_space<vmem>>, vector<1x32xf32>
    %228 = vector.broadcast %227 : vector<1x32xf32> to vector<16x32xf32>
    %229 = arith.addf %226, %228 : vector<16x32xf32>
    %c0_89 = arith.constant 0 : index
    %c0_90 = arith.constant 0 : index
    %230 = vector.load %arg15[%c0_89, %c0_90] : memref<32x64xf32, #tpu.memory_space<vmem>>, vector<32x64xf32>
    %cst_91 = arith.constant dense<0.000000e+00> : vector<16x64xf32>
    %231 = tpu.matmul %229, %230, %cst_91 {dimension_numbers = #tpu.dot_dimension_numbers<[1], [0], [0], [1], [0, 0, 1, 1], [], []>} : vector<16x32xf32>, vector<32x64xf32>, vector<16x64xf32> -> vector<16x64xf32>
    %c0_92 = arith.constant 0 : index
    %c0_93 = arith.constant 0 : index
    %232 = vector.load %arg16[%c0_92, %c0_93] : memref<1x64xf32, #tpu.memory_space<vmem>>, vector<1x64xf32>
    %233 = vector.broadcast %232 : vector<1x64xf32> to vector<16x64xf32>
    %234 = arith.addf %231, %233 : vector<16x64xf32>
    %cst_94 = arith.constant 0.000000e+00 : f32
    %235 = vector.broadcast %cst_94 : f32 to vector<16x64xf32>
    %236 = arith.maximumf %234, %235 : vector<16x64xf32>
    %c0_95 = arith.constant 0 : index
    %c0_96 = arith.constant 0 : index
    %237 = vector.load %arg17[%c0_95, %c0_96] : memref<64x32xf32, #tpu.memory_space<vmem>>, vector<64x32xf32>
    %cst_97 = arith.constant dense<0.000000e+00> : vector<16x32xf32>
    %238 = tpu.matmul %236, %237, %cst_97 {dimension_numbers = #tpu.dot_dimension_numbers<[1], [0], [0], [1], [0, 0, 1, 1], [], []>} : vector<16x64xf32>, vector<64x32xf32>, vector<16x32xf32> -> vector<16x32xf32>
    %c0_98 = arith.constant 0 : index
    %c0_99 = arith.constant 0 : index
    %239 = vector.load %arg18[%c0_98, %c0_99] : memref<1x32xf32, #tpu.memory_space<vmem>>, vector<1x32xf32>
    %240 = vector.broadcast %239 : vector<1x32xf32> to vector<16x32xf32>
    %241 = arith.addf %238, %240 : vector<16x32xf32>
    %242 = arith.addf %229, %241 : vector<16x32xf32>
    %cst_100 = arith.constant dense<0.000000e+00> : vector<16xf32>
    %243 = vector.multi_reduction <add>, %242, %cst_100 [1] : vector<16x32xf32> to vector<16xf32>
    %244 = vector.shape_cast %243 : vector<16xf32> to vector<16x1xf32>
    %cst_101 = arith.constant 3.200000e+01 : f32
    %245 = vector.broadcast %cst_101 : f32 to vector<16x1xf32>
    %246 = arith.divf %244, %245 : vector<16x1xf32>
    %247 = vector.broadcast %246 : vector<16x1xf32> to vector<16x32xf32>
    %248 = arith.subf %242, %247 : vector<16x32xf32>
    %249 = arith.mulf %248, %248 : vector<16x32xf32>
    %cst_102 = arith.constant dense<0.000000e+00> : vector<16xf32>
    %250 = vector.multi_reduction <add>, %249, %cst_102 [1] : vector<16x32xf32> to vector<16xf32>
    %251 = vector.shape_cast %250 : vector<16xf32> to vector<16x1xf32>
    %cst_103 = arith.constant 3.200000e+01 : f32
    %252 = vector.broadcast %cst_103 : f32 to vector<16x1xf32>
    %253 = arith.divf %251, %252 : vector<16x1xf32>
    %254 = vector.broadcast %246 : vector<16x1xf32> to vector<16x32xf32>
    %255 = arith.subf %242, %254 : vector<16x32xf32>
    %cst_104 = arith.constant 9.99999974E-6 : f32
    %256 = vector.broadcast %cst_104 : f32 to vector<16x1xf32>
    %257 = arith.addf %253, %256 : vector<16x1xf32>
    %258 = math.rsqrt %257 : vector<16x1xf32>
    %259 = vector.broadcast %258 : vector<16x1xf32> to vector<16x32xf32>
    %260 = arith.mulf %255, %259 : vector<16x32xf32>
    %c0_105 = arith.constant 0 : index
    %c0_106 = arith.constant 0 : index
    %261 = vector.load %arg23[%c0_105, %c0_106] : memref<1x32xf32, #tpu.memory_space<vmem>>, vector<1x32xf32>
    %262 = vector.broadcast %261 : vector<1x32xf32> to vector<16x32xf32>
    %263 = arith.mulf %260, %262 : vector<16x32xf32>
    %c0_107 = arith.constant 0 : index
    %c0_108 = arith.constant 0 : index
    %264 = vector.load %arg24[%c0_107, %c0_108] : memref<1x32xf32, #tpu.memory_space<vmem>>, vector<1x32xf32>
    %265 = vector.broadcast %264 : vector<1x32xf32> to vector<16x32xf32>
    %266 = arith.addf %263, %265 : vector<16x32xf32>
    %c0_109 = arith.constant 0 : index
    %c0_110 = arith.constant 0 : index
    %267 = vector.load %arg25[%c0_109, %c0_110] : memref<16x32xf32, #tpu.memory_space<vmem>>, vector<16x32xf32>
    tpu.vector_store %arg25[%c0_109, %c0_110], %266 {strides = array<i32>} : memref<16x32xf32, #tpu.memory_space<vmem>>, vector<16x32xf32>,
    return
  }
  func.func @transform_0(%arg0: i32) -> (i32, i32) {
    %c0_i32 = arith.constant 0 : i32
    %c0_i32_0 = arith.constant 0 : i32
    %c0_i32_1 = arith.constant 0 : i32
    return %c0_i32, %c0_i32_0 : i32, i32
  }
  func.func @transform_1(%arg0: i32) -> (i32, i32) {
    %c0_i32 = arith.constant 0 : i32
    %c0_i32_0 = arith.constant 0 : i32
    %c0_i32_1 = arith.constant 0 : i32
    return %c0_i32, %c0_i32_0 : i32, i32
  }
  func.func @transform_2(%arg0: i32) -> (i32, i32) {
    %c0_i32 = arith.constant 0 : i32
    %c0_i32_0 = arith.constant 0 : i32
    %c0_i32_1 = arith.constant 0 : i32
    return %c0_i32, %c0_i32_0 : i32, i32
  }
  func.func @transform_3(%arg0: i32) -> (i32, i32) {
    %c0_i32 = arith.constant 0 : i32
    %c0_i32_0 = arith.constant 0 : i32
    %c0_i32_1 = arith.constant 0 : i32
    return %c0_i32, %c0_i32_0 : i32, i32
  }
  func.func @transform_4(%arg0: i32) -> (i32, i32) {
    %c0_i32 = arith.constant 0 : i32
    %c0_i32_0 = arith.constant 0 : i32
    %c0_i32_1 = arith.constant 0 : i32
    return %c0_i32, %c0_i32_0 : i32, i32
  }
  func.func @transform_5(%arg0: i32) -> (i32, i32) {
    %c0_i32 = arith.constant 0 : i32
    %c0_i32_0 = arith.constant 0 : i32
    %c0_i32_1 = arith.constant 0 : i32
    return %c0_i32, %c0_i32_0 : i32, i32
  }
  func.func @transform_6(%arg0: i32) -> (i32, i32) {
    %c0_i32 = arith.constant 0 : i32
    %c0_i32_0 = arith.constant 0 : i32
    %c0_i32_1 = arith.constant 0 : i32
    return %c0_i32, %c0_i32_0 : i32, i32
  }
  func.func @transform_7(%arg0: i32) -> (i32, i32) {
    %c0_i32 = arith.constant 0 : i32
    %c0_i32_0 = arith.constant 0 : i32
    %c0_i32_1 = arith.constant 0 : i32
    return %c0_i32, %c0_i32_0 : i32, i32
  }
  func.func @transform_8(%arg0: i32) -> (i32, i32) {
    %c0_i32 = arith.constant 0 : i32
    %c0_i32_0 = arith.constant 0 : i32
    %c0_i32_1 = arith.constant 0 : i32
    return %c0_i32, %c0_i32_0 : i32, i32
  }
  func.func @transform_9(%arg0: i32) -> (i32, i32) {
    %c0_i32 = arith.constant 0 : i32
    %c0_i32_0 = arith.constant 0 : i32
    %c0_i32_1 = arith.constant 0 : i32
    return %c0_i32, %c0_i32_0 : i32, i32
  }
  func.func @transform_10(%arg0: i32) -> (i32, i32) {
    %c0_i32 = arith.constant 0 : i32
    %c0_i32_0 = arith.constant 0 : i32
    %c0_i32_1 = arith.constant 0 : i32
    return %c0_i32, %c0_i32_0 : i32, i32
  }
  func.func @transform_11(%arg0: i32) -> (i32, i32) {
    %c0_i32 = arith.constant 0 : i32
    %c0_i32_0 = arith.constant 0 : i32
    %c0_i32_1 = arith.constant 0 : i32
    return %c0_i32, %c0_i32_0 : i32, i32
  }
  func.func @transform_12(%arg0: i32) -> (i32, i32) {
    %c0_i32 = arith.constant 0 : i32
    %c0_i32_0 = arith.constant 0 : i32
    %c0_i32_1 = arith.constant 0 : i32
    return %c0_i32, %c0_i32_0 : i32, i32
  }
  func.func @transform_13(%arg0: i32) -> (i32, i32) {
    %c0_i32 = arith.constant 0 : i32
    %c0_i32_0 = arith.constant 0 : i32
    %c0_i32_1 = arith.constant 0 : i32
    return %c0_i32, %c0_i32_0 : i32, i32
  }
  func.func @transform_14(%arg0: i32) -> (i32, i32) {
    %c0_i32 = arith.constant 0 : i32
    %c0_i32_0 = arith.constant 0 : i32
    %c0_i32_1 = arith.constant 0 : i32
    return %c0_i32, %c0_i32_0 : i32, i32
  }
  func.func @transform_15(%arg0: i32) -> (i32, i32) {
    %c0_i32 = arith.constant 0 : i32
    %c0_i32_0 = arith.constant 0 : i32
    %c0_i32_1 = arith.constant 0 : i32
    return %c0_i32, %c0_i32_0 : i32, i32
  }
  func.func @transform_16(%arg0: i32) -> (i32, i32) {
    %c0_i32 = arith.constant 0 : i32
    %c0_i32_0 = arith.constant 0 : i32
    %c0_i32_1 = arith.constant 0 : i32
    return %c0_i32, %c0_i32_0 : i32, i32
  }
  func.func @transform_17(%arg0: i32) -> (i32, i32) {
    %c0_i32 = arith.constant 0 : i32
    %c0_i32_0 = arith.constant 0 : i32
    %c0_i32_1 = arith.constant 0 : i32
    return %c0_i32, %c0_i32_0 : i32, i32
  }
  func.func @transform_18(%arg0: i32) -> (i32, i32) {
    %c0_i32 = arith.constant 0 : i32
    %c0_i32_0 = arith.constant 0 : i32
    %c0_i32_1 = arith.constant 0 : i32
    return %c0_i32, %c0_i32_0 : i32, i32
  }
  func.func @transform_19(%arg0: i32) -> (i32, i32) {
    %c0_i32 = arith.constant 0 : i32
    %c0_i32_0 = arith.constant 0 : i32
    %c0_i32_1 = arith.constant 0 : i32
    return %c0_i32, %c0_i32_0 : i32, i32
  }
  func.func @transform_20(%arg0: i32) -> (i32, i32) {
    %c0_i32 = arith.constant 0 : i32
    %c0_i32_0 = arith.constant 0 : i32
    %c0_i32_1 = arith.constant 0 : i32
    return %c0_i32, %c0_i32_0 : i32, i32
  }
  func.func @transform_21(%arg0: i32) -> (i32, i32) {
    %c0_i32 = arith.constant 0 : i32
    %c0_i32_0 = arith.constant 0 : i32
    %c0_i32_1 = arith.constant 0 : i32
    return %c0_i32, %c0_i32_0 : i32, i32
  }
  func.func @transform_22(%arg0: i32) -> (i32, i32) {
    %c0_i32 = arith.constant 0 : i32
    %c0_i32_0 = arith.constant 0 : i32
    %c0_i32_1 = arith.constant 0 : i32
    return %c0_i32, %c0_i32_0 : i32, i32
  }
  func.func @transform_23(%arg0: i32) -> (i32, i32) {
    %c0_i32 = arith.constant 0 : i32
    %c0_i32_0 = arith.constant 0 : i32
    %c0_i32_1 = arith.constant 0 : i32
    return %c0_i32, %c0_i32_0 : i32, i32
  }
  func.func @transform_24(%arg0: i32) -> (i32, i32) {
    %c0_i32 = arith.constant 0 : i32
    %c0_i32_0 = arith.constant 0 : i32
    %c0_i32_1 = arith.constant 0 : i32
    return %c0_i32, %c0_i32_0 : i32, i32
  }
}

</mosaic_0001>

<llo_original>
// kernel: transformer_decoder_forward.5
$region0: #{transformer_decoder_forward.5}
  #allocation0 [shape = 'u32[]', space=smem, size = 0x4, offset = 0x4, fixed_abs, tag = 'smem constant byte address 0x4 - core index']
  #allocation1 [shape = 'u32[72,128]{1,0:T(1,128)}', space=vmem, size = 0x9000, scoped, tag = 'internal scratch']
  %s0 = inlined_call_operand.vmem [shape: f32[16,32], index: 0, kind: input, shape index: {}]
  %s1 = inlined_call_operand.vmem [shape: f32[32,50], index: 1, kind: input, shape index: {}]
  %s2 = inlined_call_operand.hbm [shape: f32[1,50], index: 2, kind: input, shape index: {}]
  %s3 = inlined_call_operand.hbm [shape: f32[16,50], index: 3, kind: output, shape index: {}]
  %s4 = sld [smem:[#allocation0]]
  $region26: #{transformer_decoder_forward.5} parent=0
    _
  %s6 = ssub.s32 1, %s4
  %s7 = scalar_select 0, %s6, %s4
  $region1: #{transformer_decoder_forward.5} parent=0
    #allocation2 [shape = 'u8[512]{0}', space=vmem, size = 0x400, scoped, tag = 'input window, operand 2, single buffered']
    #allocation3 [shape = 's32[1]{0}', space=sflag, size = 0x4, scoped, tag = 'scoped memory for transformer_decoder_forward.5']
    #allocation4 [shape = 's32[1]{0}', space=sflag, size = 0x4, scoped, tag = 'scoped memory for transformer_decoder_forward.5']
    #allocation5 [shape = 'u8[8192]{0}', space=vmem, size = 0x2000, scoped, tag = 'output window, operand 0, single buffered']
    %8 = vsyncpa [#allocation3], 0
    %9 = vsyncpa [#allocation4], 0
    // Predicated region
    $region2: #{transformer_decoder_forward.5} parent=1 // pred_check
      _
    $region3: #{transformer_decoder_forward.5} parent=1 // pred_check_branch
      %11 = sbr.rel (0) target = $region5
    $region4: #{transformer_decoder_forward.5} parent=1 // pred_region
      _
    $region5: #{transformer_decoder_forward.5} parent=1 // pred_fallthru
      _
    // Predicated region
    $region6: #{transformer_decoder_forward.5} parent=1 // pred_check
      _
    $region7: #{transformer_decoder_forward.5} parent=1 // pred_check_branch
      %13 = sbr.rel (0) target = $region9
    $region8: #{transformer_decoder_forward.5} parent=1 // pred_region
      _
    $region9: #{transformer_decoder_forward.5} parent=1 // pred_fallthru
      _
    // Predicated region
    $region10: #{transformer_decoder_forward.5} parent=1 // pred_check
      _
    $region11: #{transformer_decoder_forward.5} parent=1 // pred_check_branch
      %15 = sbr.rel (0) target = $region13
    $region12: #{transformer_decoder_forward.5} parent=1 // pred_region
      %17 = vsyncadd [#allocation3], 0
      %s19 = sshll.u32 %s2, 4
      %s20 = int_to_ptr.hbm [resolvable:$true] %s19
      %s21 = sshll.u32 [#allocation2], 4
      %s22 = int_to_ptr.vmem [resolvable:$true] %s21
      %24 = dma.hbm_to_vmem [thread:$0]  %s20, 16, %s22, [#allocation3]
    $region13: #{transformer_decoder_forward.5} parent=1 // pred_fallthru
      _
    // Predicated region
    $region14: #{transformer_decoder_forward.5} parent=1 // pred_check
      _
    $region15: #{transformer_decoder_forward.5} parent=1 // pred_check_branch
      %26 = sbr.rel (0) target = $region17
    $region16: #{transformer_decoder_forward.5} parent=1 // pred_region
      %28 = dma.done [#allocation3], 16
    $region17: #{transformer_decoder_forward.5} parent=1 // pred_fallthru
      _
    %v29 = vld [vmem:[%s0] sm:$0xff]
    %v30 = vld [vmem:[%s0 + $0x8] sm:$0xff]
    %v31 = vld [vmem:[%s1] sm:$0xff]
    %v32 = vld [vmem:[%s1 + $0x8] sm:$0xff]
    %v33 = vld [vmem:[%s1 + $0x10] sm:$0xff]
    %v34 = vld [vmem:[%s1 + $0x18] sm:$0xff]
    %v35 = vld [vmem:[#allocation2] sm:$0x1]
    %v37 = vperm.slane %v35, 0
    %vm39 = vcmask 261120
    %v41 = vsel %vm39, %v29, 0
    %v44 = vsel %vm39, %v30, 0
    %46 = vmatpush.msra.mxu0 0.0
    %47 = vmatpush.msra.mxu0 0.0
    %48 = vmatpush.msra.mxu0 0.0
    %49 = vmatpush.msra.mxu0 0.0
    %50 = vmatpush.msra.mxu0 0.0
    %51 = vmatpush.msra.mxu0 0.0
    %52 = vmatpush.msra.mxu0 0.0
    %53 = vmatpush.msra.mxu0 0.0
    %54 = vmatpush.msra.mxu0 0.0
    %55 = vmatpush.msra.mxu0 0.0
    %56 = vmatpush.msra.mxu0 0.0
    %57 = vmatpush.msra.mxu0 0.0
    %58 = vmatpush.msra.mxu0 %v34
    %59 = vmatpush.msra.mxu0 %v33
    %60 = vmatpush.msra.mxu0 %v32
    %61 = vmatpush.msra.mxu0 %v31
    %62 = vmatmul.f32.gmra.mxu0 %v41
    %v63 = vpop.f32.mrf.mxu0
    %v64 = vadd.f32 %v37, %v63
    %65 = vmatmul.f32.gmra.mxu0 %v44
    %v66 = vpop.f32.mrf.mxu0
    %v67 = vadd.f32 %v37, %v66
    %68 = vdwg.mxu0
    %vm69 = vcmask 408576
    %70 = vst.msk [vmem:[#allocation5] sm:$0xff] %vm69, %v64
    %71 = vst.msk [vmem:[#allocation5 + $0x8] sm:$0xff] %vm69, %v67
    // Predicated region
    $region18: #{transformer_decoder_forward.5} parent=1 // pred_check
      _
    $region19: #{transformer_decoder_forward.5} parent=1 // pred_check_branch
      %73 = sbr.rel (0) target = $region21
    $region20: #{transformer_decoder_forward.5} parent=1 // pred_region
      %75 = vsyncadd [#allocation4], 0
      %s76 = sshll.u32 [#allocation5], 4
      %s77 = int_to_ptr.vmem [resolvable:$true] %s76
      %s78 = sshll.u32 %s3, 4
      %s79 = int_to_ptr.hbm [resolvable:$true] %s78
      %84 = dma.vmem_to_hbm [thread:$0]  %s77, 256, %s79, [#allocation4], 128, 128, 8
    $region21: #{transformer_decoder_forward.5} parent=1 // pred_fallthru
      _
    // Predicated region
    $region22: #{transformer_decoder_forward.5} parent=1 // pred_check
      _
    $region23: #{transformer_decoder_forward.5} parent=1 // pred_check_branch
      %86 = sbr.rel (0) target = $region25
    $region24: #{transformer_decoder_forward.5} parent=1 // pred_region
      %88 = dma.done [#allocation4], 256
    $region25: #{transformer_decoder_forward.5} parent=1 // pred_fallthru
      _
    %89 = vsyncpa [#allocation3], 1
    %90 = vsyncpa [#allocation4], 1

// kernel: transformer_decoder_forward.3
$region0: #{transformer_decoder_forward.3}
  #allocation0 [shape = 'u32[]', space=smem, size = 0x4, offset = 0x4, fixed_abs, tag = 'smem constant byte address 0x4 - core index']
  #allocation1 [shape = 'u32[72,128]{1,0:T(1,128)}', space=vmem, size = 0x9000, scoped, tag = 'internal scratch']
  %s0 = inlined_call_operand.vmem [shape: f32[16,32], index: 0, kind: input, shape index: {}]
  %s1 = inlined_call_operand.vmem [shape: f32[16,32], index: 1, kind: input, shape index: {}]
  %s2 = inlined_call_operand.vmem [shape: f32[16,16], index: 2, kind: input, shape index: {}, may-alias: {2,3}]
  %s3 = inlined_call_operand.vmem [shape: f32[16,16], index: 3, kind: input, shape index: {}, may-alias: {2,3}]
  %s4 = inlined_call_operand.vmem [shape: f32[32,96], index: 4, kind: input, shape index: {}]
  %s5 = inlined_call_operand.vmem [shape: f32[1,96], index: 5, kind: input, shape index: {}]
  %s6 = inlined_call_operand.vmem [shape: f32[32,32], index: 6, kind: input, shape index: {}]
  %s7 = inlined_call_operand.vmem [shape: f32[1,32], index: 7, kind: input, shape index: {}]
  %s8 = inlined_call_operand.vmem [shape: f32[32,32], index: 8, kind: input, shape index: {}]
  %s9 = inlined_call_operand.vmem [shape: f32[1,32], index: 9, kind: input, shape index: {}]
  %s10 = inlined_call_operand.vmem [shape: f32[32,64], index: 10, kind: input, shape index: {}]
  %s11 = inlined_call_operand.vmem [shape: f32[1,64], index: 11, kind: input, shape index: {}]
  %s12 = inlined_call_operand.vmem [shape: f32[32,32], index: 12, kind: input, shape index: {}]
  %s13 = inlined_call_operand.vmem [shape: f32[1,32], index: 13, kind: input, shape index: {}]
  %s14 = inlined_call_operand.vmem [shape: f32[32,64], index: 14, kind: input, shape index: {}]
  %s15 = inlined_call_operand.vmem [shape: f32[1,64], index: 15, kind: input, shape index: {}]
  %s16 = inlined_call_operand.vmem [shape: f32[64,32], index: 16, kind: input, shape index: {}]
  %s17 = inlined_call_operand.vmem [shape: f32[1,32], index: 17, kind: input, shape index: {}]
  %s18 = inlined_call_operand.vmem [shape: f32[1,32], index: 18, kind: input, shape index: {}]
  %s19 = inlined_call_operand.vmem [shape: f32[1,32], index: 19, kind: input, shape index: {}]
  %s20 = inlined_call_operand.vmem [shape: f32[1,32], index: 20, kind: input, shape index: {}]
  %s21 = inlined_call_operand.vmem [shape: f32[1,32], index: 21, kind: input, shape index: {}]
  %s22 = inlined_call_operand.vmem [shape: f32[1,32], index: 22, kind: input, shape index: {}]
  %s23 = inlined_call_operand.vmem [shape: f32[1,32], index: 23, kind: input, shape index: {}]
  %s24 = inlined_call_operand.vmem [shape: f32[16,32], index: 24, kind: output, shape index: {}]
  %s25 = sld [smem:[#allocation0]]
  $region106: #{transformer_decoder_forward.3} parent=0
    _
  %s27 = ssub.s32 1, %s25
  %s28 = scalar_select 0, %s27, %s25
  // Predicated region
  $region2: #{transformer_decoder_forward.3} parent=0 // pred_check
    _
  $region3: #{transformer_decoder_forward.3} parent=0 // pred_check_branch
    %30 = sbr.rel (0) target = $region5
  $region4: #{transformer_decoder_forward.3} parent=0 // pred_region
    _
  $region5: #{transformer_decoder_forward.3} parent=0 // pred_fallthru
    _
  // Predicated region
  $region6: #{transformer_decoder_forward.3} parent=0 // pred_check
    _
  $region7: #{transformer_decoder_forward.3} parent=0 // pred_check_branch
    %32 = sbr.rel (0) target = $region9
  $region8: #{transformer_decoder_forward.3} parent=0 // pred_region
    _
  $region9: #{transformer_decoder_forward.3} parent=0 // pred_fallthru
    _
  // Predicated region
  $region10: #{transformer_decoder_forward.3} parent=0 // pred_check
    _
  $region11: #{transformer_decoder_forward.3} parent=0 // pred_check_branch
    %34 = sbr.rel (0) target = $region13
  $region12: #{transformer_decoder_forward.3} parent=0 // pred_region
    _
  $region13: #{transformer_decoder_forward.3} parent=0 // pred_fallthru
    _
  // Predicated region
  $region14: #{transformer_decoder_forward.3} parent=0 // pred_check
    _
  $region15: #{transformer_decoder_forward.3} parent=0 // pred_check_branch
    %36 = sbr.rel (0) target = $region17
  $region16: #{transformer_decoder_forward.3} parent=0 // pred_region
    _
  $region17: #{transformer_decoder_forward.3} parent=0 // pred_fallthru
    _
  // Predicated region
  $region18: #{transformer_decoder_forward.3} parent=0 // pred_check
    _
  $region19: #{transformer_decoder_forward.3} parent=0 // pred_check_branch
    %38 = sbr.rel (0) target = $region21
  $region20: #{transformer_decoder_forward.3} parent=0 // pred_region
    _
  $region21: #{transformer_decoder_forward.3} parent=0 // pred_fallthru
    _
  // Predicated region
  $region22: #{transformer_decoder_forward.3} parent=0 // pred_check
    _
  $region23: #{transformer_decoder_forward.3} parent=0 // pred_check_branch
    %40 = sbr.rel (0) target = $region25
  $region24: #{transformer_decoder_forward.3} parent=0 // pred_region
    _
  $region25: #{transformer_decoder_forward.3} parent=0 // pred_fallthru
    _
  // Predicated region
  $region26: #{transformer_decoder_forward.3} parent=0 // pred_check
    _
  $region27: #{transformer_decoder_forward.3} parent=0 // pred_check_branch
    %42 = sbr.rel (0) target = $region29
  $region28: #{transformer_decoder_forward.3} parent=0 // pred_region
    _
  $region29: #{transformer_decoder_forward.3} parent=0 // pred_fallthru
    _
  // Predicated region
  $region30: #{transformer_decoder_forward.3} parent=0 // pred_check
    _
  $region31: #{transformer_decoder_forward.3} parent=0 // pred_check_branch
    %44 = sbr.rel (0) target = $region33
  $region32: #{transformer_decoder_forward.3} parent=0 // pred_region
    _
  $region33: #{transformer_decoder_forward.3} parent=0 // pred_fallthru
    _
  // Predicated region
  $region34: #{transformer_decoder_forward.3} parent=0 // pred_check
    _
  $region35: #{transformer_decoder_forward.3} parent=0 // pred_check_branch
    %46 = sbr.rel (0) target = $region37
  $region36: #{transformer_decoder_forward.3} parent=0 // pred_region
    _
  $region37: #{transformer_decoder_forward.3} parent=0 // pred_fallthru
    _
  // Predicated region
  $region38: #{transformer_decoder_forward.3} parent=0 // pred_check
    _
  $region39: #{transformer_decoder_forward.3} parent=0 // pred_check_branch
    %48 = sbr.rel (0) target = $region41
  $region40: #{transformer_decoder_forward.3} parent=0 // pred_region
    _
  $region41: #{transformer_decoder_forward.3} parent=0 // pred_fallthru
    _
  // Predicated region
  $region42: #{transformer_decoder_forward.3} parent=0 // pred_check
    _
  $region43: #{transformer_decoder_forward.3} parent=0 // pred_check_branch
    %50 = sbr.rel (0) target = $region45
  $region44: #{transformer_decoder_forward.3} parent=0 // pred_region
    _
  $region45: #{transformer_decoder_forward.3} parent=0 // pred_fallthru
    _
  // Predicated region
  $region46: #{transformer_decoder_forward.3} parent=0 // pred_check
    _
  $region47: #{transformer_decoder_forward.3} parent=0 // pred_check_branch
    %52 = sbr.rel (0) target = $region49
  $region48: #{transformer_decoder_forward.3} parent=0 // pred_region
    _
  $region49: #{transformer_decoder_forward.3} parent=0 // pred_fallthru
    _
  // Predicated region
  $region50: #{transformer_decoder_forward.3} parent=0 // pred_check
    _
  $region51: #{transformer_decoder_forward.3} parent=0 // pred_check_branch
    %54 = sbr.rel (0) target = $region53
  $region52: #{transformer_decoder_forward.3} parent=0 // pred_region
    _
  $region53: #{transformer_decoder_forward.3} parent=0 // pred_fallthru
    _
  // Predicated region
  $region54: #{transformer_decoder_forward.3} parent=0 // pred_check
    _
  $region55: #{transformer_decoder_forward.3} parent=0 // pred_check_branch
    %56 = sbr.rel (0) target = $region57
  $region56: #{transformer_decoder_forward.3} parent=0 // pred_region
    _
  $region57: #{transformer_decoder_forward.3} parent=0 // pred_fallthru
    _
  // Predicated region
  $region58: #{transformer_decoder_forward.3} parent=0 // pred_check
    _
  $region59: #{transformer_decoder_forward.3} parent=0 // pred_check_branch
    %58 = sbr.rel (0) target = $region61
  $region60: #{transformer_decoder_forward.3} parent=0 // pred_region
    _
  $region61: #{transformer_decoder_forward.3} parent=0 // pred_fallthru
    _
  // Predicated region
  $region62: #{transformer_decoder_forward.3} parent=0 // pred_check
    _
  $region63: #{transformer_decoder_forward.3} parent=0 // pred_check_branch
    %60 = sbr.rel (0) target = $region65
  $region64: #{transformer_decoder_forward.3} parent=0 // pred_region
    _
  $region65: #{transformer_decoder_forward.3} parent=0 // pred_fallthru
    _
  // Predicated region
  $region66: #{transformer_decoder_forward.3} parent=0 // pred_check
    _
  $region67: #{transformer_decoder_forward.3} parent=0 // pred_check_branch
    %62 = sbr.rel (0) target = $region69
  $region68: #{transformer_decoder_forward.3} parent=0 // pred_region
    _
  $region69: #{transformer_decoder_forward.3} parent=0 // pred_fallthru
    _
  // Predicated region
  $region70: #{transformer_decoder_forward.3} parent=0 // pred_check
    _
  $region71: #{transformer_decoder_forward.3} parent=0 // pred_check_branch
    %64 = sbr.rel (0) target = $region73
  $region72: #{transformer_decoder_forward.3} parent=0 // pred_region
    _
  $region73: #{transformer_decoder_forward.3} parent=0 // pred_fallthru
    _
  // Predicated region
  $region74: #{transformer_decoder_forward.3} parent=0 // pred_check
    _
  $region75: #{transformer_decoder_forward.3} parent=0 // pred_check_branch
    %66 = sbr.rel (0) target = $region77
  $region76: #{transformer_decoder_forward.3} parent=0 // pred_region
    _
  $region77: #{transformer_decoder_forward.3} parent=0 // pred_fallthru
    _
  // Predicated region
  $region78: #{transformer_decoder_forward.3} parent=0 // pred_check
    _
  $region79: #{transformer_decoder_forward.3} parent=0 // pred_check_branch
    %68 = sbr.rel (0) target = $region81
  $region80: #{transformer_decoder_forward.3} parent=0 // pred_region
    _
  $region81: #{transformer_decoder_forward.3} parent=0 // pred_fallthru
    _
  // Predicated region
  $region82: #{transformer_decoder_forward.3} parent=0 // pred_check
    _
  $region83: #{transformer_decoder_forward.3} parent=0 // pred_check_branch
    %70 = sbr.rel (0) target = $region85
  $region84: #{transformer_decoder_forward.3} parent=0 // pred_region
    _
  $region85: #{transformer_decoder_forward.3} parent=0 // pred_fallthru
    _
  // Predicated region
  $region86: #{transformer_decoder_forward.3} parent=0 // pred_check
    _
  $region87: #{transformer_decoder_forward.3} parent=0 // pred_check_branch
    %72 = sbr.rel (0) target = $region89
  $region88: #{transformer_decoder_forward.3} parent=0 // pred_region
    _
  $region89: #{transformer_decoder_forward.3} parent=0 // pred_fallthru
    _
  // Predicated region
  $region90: #{transformer_decoder_forward.3} parent=0 // pred_check
    _
  $region91: #{transformer_decoder_forward.3} parent=0 // pred_check_branch
    %74 = sbr.rel (0) target = $region93
  $region92: #{transformer_decoder_forward.3} parent=0 // pred_region
    _
  $region93: #{transformer_decoder_forward.3} parent=0 // pred_fallthru
    _
  // Predicated region
  $region94: #{transformer_decoder_forward.3} parent=0 // pred_check
    _
  $region95: #{transformer_decoder_forward.3} parent=0 // pred_check_branch
    %76 = sbr.rel (0) target = $region97
  $region96: #{transformer_decoder_forward.3} parent=0 // pred_region
    _
  $region97: #{transformer_decoder_forward.3} parent=0 // pred_fallthru
    _
  %v77 = vld [vmem:[%s0] sm:$0xff]
  %v78 = vld [vmem:[%s0 + $0x8] sm:$0xff]
  %v79 = vld [vmem:[%s1] sm:$0xff]
  %v80 = vld [vmem:[%s1 + $0x8] sm:$0xff]
  %v81 = vld [vmem:[%s2] sm:$0xff]
  %v82 = vld [vmem:[%s2 + $0x8] sm:$0xff]
  %v83 = vld [vmem:[%s3] sm:$0xff]
  %v84 = vld [vmem:[%s3 + $0x8] sm:$0xff]
  %v85 = vld [vmem:[%s4] sm:$0xff]
  %v86 = vld [vmem:[%s4 + $0x8] sm:$0xff]
  %v87 = vld [vmem:[%s4 + $0x10] sm:$0xff]
  %v88 = vld [vmem:[%s4 + $0x18] sm:$0xff]
  %v89 = vld [vmem:[%s5] sm:$0x1]
  %v91 = vperm.slane %v89, 0
  %vm93 = vcmask 261120
  %v95 = vsel %vm93, %v77, 0
  %v98 = vsel %vm93, %v78, 0
  %100 = vmatpush.msra.mxu0 0.0
  %101 = vmatpush.msra.mxu0 0.0
  %102 = vmatpush.msra.mxu0 0.0
  %103 = vmatpush.msra.mxu0 0.0
  %104 = vmatpush.msra.mxu0 0.0
  %105 = vmatpush.msra.mxu0 0.0
  %106 = vmatpush.msra.mxu0 0.0
  %107 = vmatpush.msra.mxu0 0.0
  %108 = vmatpush.msra.mxu0 0.0
  %109 = vmatpush.msra.mxu0 0.0
  %110 = vmatpush.msra.mxu0 0.0
  %111 = vmatpush.msra.mxu0 0.0
  %112 = vmatpush.msra.mxu0 %v88
  %113 = vmatpush.msra.mxu0 %v87
  %114 = vmatpush.msra.mxu0 %v86
  %115 = vmatpush.msra.mxu0 %v85
  %116 = vmatmul.f32.gmra.mxu0 %v95
  %v117 = vpop.f32.mrf.mxu0
  %v118 = vadd.f32 %v91, %v117
  %119 = vmatmul.f32.gmra.mxu0 %v98
  %v120 = vpop.f32.mrf.mxu0
  %v121 = vadd.f32 %v91, %v120
  %122 = vdwg.mxu0
  %125 = vrot.lane.b32.xlu0 %v118, 96
  %v126 = vpop.permute.xlu0 %125
  %127 = vrot.lane.b32.xlu0 %v121, 96
  %v128 = vpop.permute.xlu0 %127
  %vm129 = vcmask 64512
  %v130 = vsel %vm129, %v118, 0
  %v132 = vsel %vm129, %v121, 0
  %v134 = vsel %vm129, %v126, 0
  %v136 = vsel %vm129, %v128, 0
  %138 = vmatpush.xpose.msra.mxu0 0.0
  %139 = vmatpush.xpose.msra.mxu0 0.0
  %140 = vmatpush.xpose.msra.mxu0 0.0
  %141 = vmatpush.xpose.msra.mxu0 0.0
  %142 = vmatpush.xpose.msra.mxu0 0.0
  %143 = vmatpush.xpose.msra.mxu0 0.0
  %144 = vmatpush.xpose.msra.mxu0 0.0
  %145 = vmatpush.xpose.msra.mxu0 0.0
  %146 = vmatpush.xpose.msra.mxu0 0.0
  %147 = vmatpush.xpose.msra.mxu0 0.0
  %148 = vmatpush.xpose.msra.mxu0 0.0
  %149 = vmatpush.xpose.msra.mxu0 0.0
  %150 = vmatpush.xpose.msra.mxu0 0.0
  %151 = vmatpush.xpose.msra.mxu0 0.0
  %152 = vmatpush.xpose.msra.mxu0 %v136
  %153 = vmatpush.xpose.msra.mxu0 %v134
  %154 = vmatmul.f32.gmra.mxu0 %v130
  %v155 = vpop.f32.mrf.mxu0
  %v156 = vadd.f32 0.0, %v155
  %157 = vmatmul.f32.gmra.mxu0 %v132
  %v158 = vpop.f32.mrf.mxu0
  %v159 = vadd.f32 0.0, %v158
  %160 = vdwg.mxu0
  %v161 = vmul.f32 %v156, 0.35355338
  %v162 = vmul.f32 %v159, 0.35355338
  %v163 = vadd.f32 %v161, %v81
  %v164 = vadd.f32 %v162, %v82
  %vm165 = vcmask 130048
  %v166 = vsel %vm165, %v163, -inf
  %167 = vmax.xlane.f32.xlu0 %v166
  %v168 = vpop.xlane.xlu0 %167
  %v169 = vsel %vm165, %v164, -inf
  %170 = vmax.xlane.f32.xlu0 %v169
  %v171 = vpop.xlane.xlu0 %170
  %v172 = vsub.f32 %v163, %v168
  %v173 = vsub.f32 %v164, %v171
  %v174 = vmul.f32 %v172, 1.442695
  %v175 = vpow.pop %v174
  %v176 = vmul.f32 %v173, 1.442695
  %v177 = vpow.pop %v176
  %v178 = vsel %vm165, %v175, 0.0
  %179 = vadd.xlane.f32.xlu0 %v178
  %v180 = vpop.xlane.xlu0 %179
  %v181 = vsel %vm165, %v177, 0.0
  %182 = vadd.xlane.f32.xlu0 %v181
  %v183 = vpop.xlane.xlu0 %182
  %v184 = vrcp.pop %v180
  %v185 = vrcp.pop %v183
  %v186 = vmul.f32 %v175, %v184
  %v187 = vmul.f32 %v177, %v185
  %188 = vrot.lane.b32.xlu0 %v118, 64
  %v189 = vpop.permute.xlu0 %188
  %190 = vrot.lane.b32.xlu0 %v121, 64
  %v191 = vpop.permute.xlu0 %190
  %v195 = vsel %vm165, %v186, 0
  %v198 = vsel %vm165, %v187, 0
  %200 = vmatpush.msra.mxu0 0.0
  %201 = vmatpush.msra.mxu0 0.0
  %202 = vmatpush.msra.mxu0 0.0
  %203 = vmatpush.msra.mxu0 0.0
  %204 = vmatpush.msra.mxu0 0.0
  %205 = vmatpush.msra.mxu0 0.0
  %206 = vmatpush.msra.mxu0 0.0
  %207 = vmatpush.msra.mxu0 0.0
  %208 = vmatpush.msra.mxu0 0.0
  %209 = vmatpush.msra.mxu0 0.0
  %210 = vmatpush.msra.mxu0 0.0
  %211 = vmatpush.msra.mxu0 0.0
  %212 = vmatpush.msra.mxu0 0.0
  %213 = vmatpush.msra.mxu0 0.0
  %214 = vmatpush.msra.mxu0 %v191
  %215 = vmatpush.msra.mxu0 %v189
  %216 = vmatmul.f32.gmra.mxu0 %v195
  %v217 = vpop.f32.mrf.mxu0
  %v218 = vadd.f32 0.0, %v217
  %219 = vmatmul.f32.gmra.mxu0 %v198
  %v220 = vpop.f32.mrf.mxu0
  %v221 = vadd.f32 0.0, %v220
  %222 = vdwg.mxu0
  %223 = vrot.lane.b32.xlu0 %v118, 120
  %v224 = vpop.permute.xlu0 %223
  %225 = vrot.lane.b32.xlu0 %v121, 120
  %v226 = vpop.permute.xlu0 %225
  %227 = vrot.lane.b32.xlu0 %v118, 88
  %v228 = vpop.permute.xlu0 %227
  %229 = vrot.lane.b32.xlu0 %v121, 88
  %v230 = vpop.permute.xlu0 %229
  %v231 = vsel %vm129, %v224, 0
  %v233 = vsel %vm129, %v226, 0
  %v235 = vsel %vm129, %v228, 0
  %v237 = vsel %vm129, %v230, 0
  %239 = vmatpush.xpose.msra.mxu0 0.0
  %240 = vmatpush.xpose.msra.mxu0 0.0
  %241 = vmatpush.xpose.msra.mxu0 0.0
  %242 = vmatpush.xpose.msra.mxu0 0.0
  %243 = vmatpush.xpose.msra.mxu0 0.0
  %244 = vmatpush.xpose.msra.mxu0 0.0
  %245 = vmatpush.xpose.msra.mxu0 0.0
  %246 = vmatpush.xpose.msra.mxu0 0.0
  %247 = vmatpush.xpose.msra.mxu0 0.0
  %248 = vmatpush.xpose.msra.mxu0 0.0
  %249 = vmatpush.xpose.msra.mxu0 0.0
  %250 = vmatpush.xpose.msra.mxu0 0.0
  %251 = vmatpush.xpose.msra.mxu0 0.0
  %252 = vmatpush.xpose.msra.mxu0 0.0
  %253 = vmatpush.xpose.msra.mxu0 %v237
  %254 = vmatpush.xpose.msra.mxu0 %v235
  %255 = vmatmul.f32.gmra.mxu0 %v231
  %v256 = vpop.f32.mrf.mxu0
  %v257 = vadd.f32 0.0, %v256
  %258 = vmatmul.f32.gmra.mxu0 %v233
  %v259 = vpop.f32.mrf.mxu0
  %v260 = vadd.f32 0.0, %v259
  %261 = vdwg.mxu0
  %v262 = vmul.f32 %v257, 0.35355338
  %v263 = vmul.f32 %v260, 0.35355338
  %v264 = vadd.f32 %v262, %v81
  %v265 = vadd.f32 %v263, %v82
  %v266 = vsel %vm165, %v264, -inf
  %267 = vmax.xlane.f32.xlu0 %v266
  %v268 = vpop.xlane.xlu0 %267
  %v269 = vsel %vm165, %v265, -inf
  %270 = vmax.xlane.f32.xlu0 %v269
  %v271 = vpop.xlane.xlu0 %270
  %v272 = vsub.f32 %v264, %v268
  %v273 = vsub.f32 %v265, %v271
  %v274 = vmul.f32 %v272, 1.442695
  %v275 = vpow.pop %v274
  %v276 = vmul.f32 %v273, 1.442695
  %v277 = vpow.pop %v276
  %v278 = vsel %vm165, %v275, 0.0
  %279 = vadd.xlane.f32.xlu0 %v278
  %v280 = vpop.xlane.xlu0 %279
  %v281 = vsel %vm165, %v277, 0.0
  %282 = vadd.xlane.f32.xlu0 %v281
  %v283 = vpop.xlane.xlu0 %282
  %v284 = vrcp.pop %v280
  %v285 = vrcp.pop %v283
  %v286 = vmul.f32 %v275, %v284
  %v287 = vmul.f32 %v277, %v285
  %288 = vrot.lane.b32.xlu0 %v118, 56
  %v289 = vpop.permute.xlu0 %288
  %290 = vrot.lane.b32.xlu0 %v121, 56
  %v291 = vpop.permute.xlu0 %290
  %v295 = vsel %vm165, %v286, 0
  %v298 = vsel %vm165, %v287, 0
  %300 = vmatpush.msra.mxu0 0.0
  %301 = vmatpush.msra.mxu0 0.0
  %302 = vmatpush.msra.mxu0 0.0
  %303 = vmatpush.msra.mxu0 0.0
  %304 = vmatpush.msra.mxu0 0.0
  %305 = vmatpush.msra.mxu0 0.0
  %306 = vmatpush.msra.mxu0 0.0
  %307 = vmatpush.msra.mxu0 0.0
  %308 = vmatpush.msra.mxu0 0.0
  %309 = vmatpush.msra.mxu0 0.0
  %310 = vmatpush.msra.mxu0 0.0
  %311 = vmatpush.msra.mxu0 0.0
  %312 = vmatpush.msra.mxu0 0.0
  %313 = vmatpush.msra.mxu0 0.0
  %314 = vmatpush.msra.mxu0 %v291
  %315 = vmatpush.msra.mxu0 %v289
  %316 = vmatmul.f32.gmra.mxu0 %v295
  %v317 = vpop.f32.mrf.mxu0
  %v318 = vadd.f32 0.0, %v317
  %319 = vmatmul.f32.gmra.mxu0 %v298
  %v320 = vpop.f32.mrf.mxu0
  %v321 = vadd.f32 0.0, %v320
  %322 = vdwg.mxu0
  %323 = vrot.lane.b32.xlu0 %v118, 112
  %v324 = vpop.permute.xlu0 %323
  %325 = vrot.lane.b32.xlu0 %v121, 112
  %v326 = vpop.permute.xlu0 %325
  %327 = vrot.lane.b32.xlu0 %v118, 80
  %v328 = vpop.permute.xlu0 %327
  %329 = vrot.lane.b32.xlu0 %v121, 80
  %v330 = vpop.permute.xlu0 %329
  %v331 = vsel %vm129, %v324, 0
  %v333 = vsel %vm129, %v326, 0
  %v335 = vsel %vm129, %v328, 0
  %v337 = vsel %vm129, %v330, 0
  %339 = vmatpush.xpose.msra.mxu0 0.0
  %340 = vmatpush.xpose.msra.mxu0 0.0
  %341 = vmatpush.xpose.msra.mxu0 0.0
  %342 = vmatpush.xpose.msra.mxu0 0.0
  %343 = vmatpush.xpose.msra.mxu0 0.0
  %344 = vmatpush.xpose.msra.mxu0 0.0
  %345 = vmatpush.xpose.msra.mxu0 0.0
  %346 = vmatpush.xpose.msra.mxu0 0.0
  %347 = vmatpush.xpose.msra.mxu0 0.0
  %348 = vmatpush.xpose.msra.mxu0 0.0
  %349 = vmatpush.xpose.msra.mxu0 0.0
  %350 = vmatpush.xpose.msra.mxu0 0.0
  %351 = vmatpush.xpose.msra.mxu0 0.0
  %352 = vmatpush.xpose.msra.mxu0 0.0
  %353 = vmatpush.xpose.msra.mxu0 %v337
  %354 = vmatpush.xpose.msra.mxu0 %v335
  %355 = vmatmul.f32.gmra.mxu0 %v331
  %v356 = vpop.f32.mrf.mxu0
  %v357 = vadd.f32 0.0, %v356
  %358 = vmatmul.f32.gmra.mxu0 %v333
  %v359 = vpop.f32.mrf.mxu0
  %v360 = vadd.f32 0.0, %v359
  %361 = vdwg.mxu0
  %v362 = vmul.f32 %v357, 0.35355338
  %v363 = vmul.f32 %v360, 0.35355338
  %v364 = vadd.f32 %v362, %v81
  %v365 = vadd.f32 %v363, %v82
  %v366 = vsel %vm165, %v364, -inf
  %367 = vmax.xlane.f32.xlu0 %v366
  %v368 = vpop.xlane.xlu0 %367
  %v369 = vsel %vm165, %v365, -inf
  %370 = vmax.xlane.f32.xlu0 %v369
  %v371 = vpop.xlane.xlu0 %370
  %v372 = vsub.f32 %v364, %v368
  %v373 = vsub.f32 %v365, %v371
  %v374 = vmul.f32 %v372, 1.442695
  %v375 = vpow.pop %v374
  %v376 = vmul.f32 %v373, 1.442695
  %v377 = vpow.pop %v376
  %v378 = vsel %vm165, %v375, 0.0
  %379 = vadd.xlane.f32.xlu0 %v378
  %v380 = vpop.xlane.xlu0 %379
  %v381 = vsel %vm165, %v377, 0.0
  %382 = vadd.xlane.f32.xlu0 %v381
  %v383 = vpop.xlane.xlu0 %382
  %v384 = vrcp.pop %v380
  %v385 = vrcp.pop %v383
  %v386 = vmul.f32 %v375, %v384
  %v387 = vmul.f32 %v377, %v385
  %388 = vrot.lane.b32.xlu0 %v118, 48
  %v389 = vpop.permute.xlu0 %388
  %390 = vrot.lane.b32.xlu0 %v121, 48
  %v391 = vpop.permute.xlu0 %390
  %v395 = vsel %vm165, %v386, 0
  %v398 = vsel %vm165, %v387, 0
  %400 = vmatpush.msra.mxu0 0.0
  %401 = vmatpush.msra.mxu0 0.0
  %402 = vmatpush.msra.mxu0 0.0
  %403 = vmatpush.msra.mxu0 0.0
  %404 = vmatpush.msra.mxu0 0.0
  %405 = vmatpush.msra.mxu0 0.0
  %406 = vmatpush.msra.mxu0 0.0
  %407 = vmatpush.msra.mxu0 0.0
  %408 = vmatpush.msra.mxu0 0.0
  %409 = vmatpush.msra.mxu0 0.0
  %410 = vmatpush.msra.mxu0 0.0
  %411 = vmatpush.msra.mxu0 0.0
  %412 = vmatpush.msra.mxu0 0.0
  %413 = vmatpush.msra.mxu0 0.0
  %414 = vmatpush.msra.mxu0 %v391
  %415 = vmatpush.msra.mxu0 %v389
  %416 = vmatmul.f32.gmra.mxu0 %v395
  %v417 = vpop.f32.mrf.mxu0
  %v418 = vadd.f32 0.0, %v417
  %419 = vmatmul.f32.gmra.mxu0 %v398
  %v420 = vpop.f32.mrf.mxu0
  %v421 = vadd.f32 0.0, %v420
  %422 = vdwg.mxu0
  %423 = vrot.lane.b32.xlu0 %v118, 104
  %v424 = vpop.permute.xlu0 %423
  %425 = vrot.lane.b32.xlu0 %v121, 104
  %v426 = vpop.permute.xlu0 %425
  %427 = vrot.lane.b32.xlu0 %v118, 72
  %v428 = vpop.permute.xlu0 %427
  %429 = vrot.lane.b32.xlu0 %v121, 72
  %v430 = vpop.permute.xlu0 %429
  %v431 = vsel %vm129, %v424, 0
  %v433 = vsel %vm129, %v426, 0
  %v435 = vsel %vm129, %v428, 0
  %v437 = vsel %vm129, %v430, 0
  %439 = vmatpush.xpose.msra.mxu0 0.0
  %440 = vmatpush.xpose.msra.mxu0 0.0
  %441 = vmatpush.xpose.msra.mxu0 0.0
  %442 = vmatpush.xpose.msra.mxu0 0.0
  %443 = vmatpush.xpose.msra.mxu0 0.0
  %444 = vmatpush.xpose.msra.mxu0 0.0
  %445 = vmatpush.xpose.msra.mxu0 0.0
  %446 = vmatpush.xpose.msra.mxu0 0.0
  %447 = vmatpush.xpose.msra.mxu0 0.0
  %448 = vmatpush.xpose.msra.mxu0 0.0
  %449 = vmatpush.xpose.msra.mxu0 0.0
  %450 = vmatpush.xpose.msra.mxu0 0.0
  %451 = vmatpush.xpose.msra.mxu0 0.0
  %452 = vmatpush.xpose.msra.mxu0 0.0
  %453 = vmatpush.xpose.msra.mxu0 %v437
  %454 = vmatpush.xpose.msra.mxu0 %v435
  %455 = vmatmul.f32.gmra.mxu0 %v431
  %v456 = vpop.f32.mrf.mxu0
  %v457 = vadd.f32 0.0, %v456
  %458 = vmatmul.f32.gmra.mxu0 %v433
  %v459 = vpop.f32.mrf.mxu0
  %v460 = vadd.f32 0.0, %v459
  %461 = vdwg.mxu0
  %v462 = vmul.f32 %v457, 0.35355338
  %v463 = vmul.f32 %v460, 0.35355338
  %v464 = vadd.f32 %v462, %v81
  %v465 = vadd.f32 %v463, %v82
  %v466 = vsel %vm165, %v464, -inf
  %467 = vmax.xlane.f32.xlu0 %v466
  %v468 = vpop.xlane.xlu0 %467
  %v469 = vsel %vm165, %v465, -inf
  %470 = vmax.xlane.f32.xlu0 %v469
  %v471 = vpop.xlane.xlu0 %470
  %v472 = vsub.f32 %v464, %v468
  %v473 = vsub.f32 %v465, %v471
  %v474 = vmul.f32 %v472, 1.442695
  %v475 = vpow.pop %v474
  %v476 = vmul.f32 %v473, 1.442695
  %v477 = vpow.pop %v476
  %v478 = vsel %vm165, %v475, 0.0
  %479 = vadd.xlane.f32.xlu0 %v478
  %v480 = vpop.xlane.xlu0 %479
  %v481 = vsel %vm165, %v477, 0.0
  %482 = vadd.xlane.f32.xlu0 %v481
  %v483 = vpop.xlane.xlu0 %482
  %v484 = vrcp.pop %v480
  %v485 = vrcp.pop %v483
  %v486 = vmul.f32 %v475, %v484
  %v487 = vmul.f32 %v477, %v485
  %488 = vrot.lane.b32.xlu0 %v118, 40
  %v489 = vpop.permute.xlu0 %488
  %490 = vrot.lane.b32.xlu0 %v121, 40
  %v491 = vpop.permute.xlu0 %490
  %v495 = vsel %vm165, %v486, 0
  %v498 = vsel %vm165, %v487, 0
  %500 = vmatpush.msra.mxu0 0.0
  %501 = vmatpush.msra.mxu0 0.0
  %502 = vmatpush.msra.mxu0 0.0
  %503 = vmatpush.msra.mxu0 0.0
  %504 = vmatpush.msra.mxu0 0.0
  %505 = vmatpush.msra.mxu0 0.0
  %506 = vmatpush.msra.mxu0 0.0
  %507 = vmatpush.msra.mxu0 0.0
  %508 = vmatpush.msra.mxu0 0.0
  %509 = vmatpush.msra.mxu0 0.0
  %510 = vmatpush.msra.mxu0 0.0
  %511 = vmatpush.msra.mxu0 0.0
  %512 = vmatpush.msra.mxu0 0.0
  %513 = vmatpush.msra.mxu0 0.0
  %514 = vmatpush.msra.mxu0 %v491
  %515 = vmatpush.msra.mxu0 %v489
  %516 = vmatmul.f32.gmra.mxu0 %v495
  %v517 = vpop.f32.mrf.mxu0
  %v518 = vadd.f32 0.0, %v517
  %519 = vmatmul.f32.gmra.mxu0 %v498
  %v520 = vpop.f32.mrf.mxu0
  %v521 = vadd.f32 0.0, %v520
  %522 = vdwg.mxu0
  %525 = vrot.lane.b32.xlu0 %v318, 8
  %v526 = vpop.permute.xlu0 %525
  %527 = vrot.lane.b32.xlu0 %v321, 8
  %v528 = vpop.permute.xlu0 %527
  %533 = vrot.lane.b32.xlu0 %v418, 16
  %v534 = vpop.permute.xlu0 %533
  %535 = vrot.lane.b32.xlu0 %v421, 16
  %v536 = vpop.permute.xlu0 %535
  %541 = vrot.lane.b32.xlu0 %v518, 24
  %v542 = vpop.permute.xlu0 %541
  %543 = vrot.lane.b32.xlu0 %v521, 24
  %v544 = vpop.permute.xlu0 %543
  %v547 = vsel %vm129, %v218, %v526
  %v548 = vsel %vm129, %v221, %v528
  %v549 = vsel %vm165, %v547, %v534
  %v550 = vsel %vm165, %v548, %v536
  %vm551 = vcmask 195584
  %v552 = vsel %vm551, %v549, %v542
  %v553 = vsel %vm551, %v550, %v544
  %v554 = vld [vmem:[%s6] sm:$0xff]
  %v555 = vld [vmem:[%s6 + $0x8] sm:$0xff]
  %v556 = vld [vmem:[%s6 + $0x10] sm:$0xff]
  %v557 = vld [vmem:[%s6 + $0x18] sm:$0xff]
  %v558 = vld [vmem:[%s7] sm:$0x1]
  %v560 = vperm.slane %v558, 0
  %v563 = vsel %vm93, %v552, 0
  %v566 = vsel %vm93, %v553, 0
  %568 = vmatpush.msra.mxu0 0.0
  %569 = vmatpush.msra.mxu0 0.0
  %570 = vmatpush.msra.mxu0 0.0
  %571 = vmatpush.msra.mxu0 0.0
  %572 = vmatpush.msra.mxu0 0.0
  %573 = vmatpush.msra.mxu0 0.0
  %574 = vmatpush.msra.mxu0 0.0
  %575 = vmatpush.msra.mxu0 0.0
  %576 = vmatpush.msra.mxu0 0.0
  %577 = vmatpush.msra.mxu0 0.0
  %578 = vmatpush.msra.mxu0 0.0
  %579 = vmatpush.msra.mxu0 0.0
  %580 = vmatpush.msra.mxu0 %v557
  %581 = vmatpush.msra.mxu0 %v556
  %582 = vmatpush.msra.mxu0 %v555
  %583 = vmatpush.msra.mxu0 %v554
  %584 = vmatmul.f32.gmra.mxu0 %v563
  %v585 = vpop.f32.mrf.mxu0
  %v586 = vadd.f32 %v560, %v585
  %587 = vmatmul.f32.gmra.mxu0 %v566
  %v588 = vpop.f32.mrf.mxu0
  %v589 = vadd.f32 %v560, %v588
  %590 = vdwg.mxu0
  %v591 = vadd.f32 %v77, %v586
  %v592 = vadd.f32 %v78, %v589
  %v593 = vsel %vm93, %v591, 0.0
  %594 = vadd.xlane.f32.xlu0 %v593
  %v595 = vpop.xlane.xlu0 %594
  %v596 = vsel %vm93, %v592, 0.0
  %597 = vadd.xlane.f32.xlu0 %v596
  %v598 = vpop.xlane.xlu0 %597
  %v599 = vrcp.pop 32.0
  %v600 = vmul.f32 32.0, %v599
  %v601 = vsub.f32 1.0, %v600
  %v602 = vmul.f32 %v599, %v601
  %v603 = vadd.f32 %v599, %v602
  %vm604 = vweird.f32 %v599
  %v605 = vsel %vm604, %v599, %v603
  %v606 = vmul.f32 %v595, %v605
  %v607 = vmul.f32 %v598, %v605
  %v608 = vsub.f32 %v591, %v606
  %v609 = vsub.f32 %v592, %v607
  %v610 = vmul.f32 %v608, %v608
  %v611 = vmul.f32 %v609, %v609
  %v612 = vsel %vm93, %v610, 0.0
  %613 = vadd.xlane.f32.xlu0 %v612
  %v614 = vpop.xlane.xlu0 %613
  %v615 = vsel %vm93, %v611, 0.0
  %616 = vadd.xlane.f32.xlu0 %v615
  %v617 = vpop.xlane.xlu0 %616
  %v618 = vmul.f32 %v614, %v605
  %v619 = vmul.f32 %v617, %v605
  %v620 = vadd.f32 %v618, 1e-05
  %v621 = vadd.f32 %v619, 1e-05
  %v622 = vrsqrt.pop %v620
  %v623 = vmul.f32 %v622, %v620
  %v624 = vmul.f32 %v623, %v622
  %v625 = vmul.f32 0.5, %v624
  %v626 = vsub.f32 1.5, %v625
  %v627 = vmul.f32 %v622, %v626
  %vm628 = vweird.f32 %v620
  %vm629 = vweird.f32 %v622
  %vm630 = vmor %vm628, %vm629
  %v631 = vsel %vm630, %v622, %v627
  %v632 = vrsqrt.pop %v621
  %v633 = vmul.f32 %v632, %v621
  %v634 = vmul.f32 %v633, %v632
  %v635 = vmul.f32 0.5, %v634
  %v636 = vsub.f32 1.5, %v635
  %v637 = vmul.f32 %v632, %v636
  %vm638 = vweird.f32 %v621
  %vm639 = vweird.f32 %v632
  %vm640 = vmor %vm638, %vm639
  %v641 = vsel %vm640, %v632, %v637
  %v642 = vmul.f32 %v608, %v631
  %v643 = vmul.f32 %v609, %v641
  %v644 = vld [vmem:[%s18] sm:$0x1]
  %v646 = vperm.slane %v644, 0
  %v648 = vmul.f32 %v642, %v646
  %v649 = vmul.f32 %v643, %v646
  %v650 = vld [vmem:[%s19] sm:$0x1]
  %v652 = vperm.slane %v650, 0
  %v654 = vadd.f32 %v648, %v652
  %v655 = vadd.f32 %v649, %v652
  %v656 = vld [vmem:[%s8] sm:$0xff]
  %v657 = vld [vmem:[%s8 + $0x8] sm:$0xff]
  %v658 = vld [vmem:[%s8 + $0x10] sm:$0xff]
  %v659 = vld [vmem:[%s8 + $0x18] sm:$0xff]
  %v660 = vld [vmem:[%s9] sm:$0x1]
  %v662 = vperm.slane %v660, 0
  %v665 = vsel %vm93, %v654, 0
  %v668 = vsel %vm93, %v655, 0
  %670 = vmatpush.msra.mxu0 0.0
  %671 = vmatpush.msra.mxu0 0.0
  %672 = vmatpush.msra.mxu0 0.0
  %673 = vmatpush.msra.mxu0 0.0
  %674 = vmatpush.msra.mxu0 0.0
  %675 = vmatpush.msra.mxu0 0.0
  %676 = vmatpush.msra.mxu0 0.0
  %677 = vmatpush.msra.mxu0 0.0
  %678 = vmatpush.msra.mxu0 0.0
  %679 = vmatpush.msra.mxu0 0.0
  %680 = vmatpush.msra.mxu0 0.0
  %681 = vmatpush.msra.mxu0 0.0
  %682 = vmatpush.msra.mxu0 %v659
  %683 = vmatpush.msra.mxu0 %v658
  %684 = vmatpush.msra.mxu0 %v657
  %685 = vmatpush.msra.mxu0 %v656
  %686 = vmatmul.f32.gmra.mxu0 %v665
  %v687 = vpop.f32.mrf.mxu0
  %v688 = vadd.f32 %v662, %v687
  %689 = vmatmul.f32.gmra.mxu0 %v668
  %v690 = vpop.f32.mrf.mxu0
  %v691 = vadd.f32 %v662, %v690
  %692 = vdwg.mxu0
  %v693 = vld [vmem:[%s10] sm:$0xff]
  %v694 = vld [vmem:[%s10 + $0x8] sm:$0xff]
  %v695 = vld [vmem:[%s10 + $0x10] sm:$0xff]
  %v696 = vld [vmem:[%s10 + $0x18] sm:$0xff]
  %v697 = vld [vmem:[%s11] sm:$0x1]
  %v699 = vperm.slane %v697, 0
  %v702 = vsel %vm93, %v79, 0
  %v705 = vsel %vm93, %v80, 0
  %707 = vmatpush.msra.mxu0 0.0
  %708 = vmatpush.msra.mxu0 0.0
  %709 = vmatpush.msra.mxu0 0.0
  %710 = vmatpush.msra.mxu0 0.0
  %711 = vmatpush.msra.mxu0 0.0
  %712 = vmatpush.msra.mxu0 0.0
  %713 = vmatpush.msra.mxu0 0.0
  %714 = vmatpush.msra.mxu0 0.0
  %715 = vmatpush.msra.mxu0 0.0
  %716 = vmatpush.msra.mxu0 0.0
  %717 = vmatpush.msra.mxu0 0.0
  %718 = vmatpush.msra.mxu0 0.0
  %719 = vmatpush.msra.mxu0 %v696
  %720 = vmatpush.msra.mxu0 %v695
  %721 = vmatpush.msra.mxu0 %v694
  %722 = vmatpush.msra.mxu0 %v693
  %723 = vmatmul.f32.gmra.mxu0 %v702
  %v724 = vpop.f32.mrf.mxu0
  %v725 = vadd.f32 %v699, %v724
  %726 = vmatmul.f32.gmra.mxu0 %v705
  %v727 = vpop.f32.mrf.mxu0
  %v728 = vadd.f32 %v699, %v727
  %729 = vdwg.mxu0
  %v731 = vsel %vm129, %v688, 0
  %v734 = vsel %vm129, %v691, 0
  %v737 = vsel %vm129, %v725, 0
  %v740 = vsel %vm129, %v728, 0
  %742 = vmatpush.xpose.msra.mxu0 0.0
  %743 = vmatpush.xpose.msra.mxu0 0.0
  %744 = vmatpush.xpose.msra.mxu0 0.0
  %745 = vmatpush.xpose.msra.mxu0 0.0
  %746 = vmatpush.xpose.msra.mxu0 0.0
  %747 = vmatpush.xpose.msra.mxu0 0.0
  %748 = vmatpush.xpose.msra.mxu0 0.0
  %749 = vmatpush.xpose.msra.mxu0 0.0
  %750 = vmatpush.xpose.msra.mxu0 0.0
  %751 = vmatpush.xpose.msra.mxu0 0.0
  %752 = vmatpush.xpose.msra.mxu0 0.0
  %753 = vmatpush.xpose.msra.mxu0 0.0
  %754 = vmatpush.xpose.msra.mxu0 0.0
  %755 = vmatpush.xpose.msra.mxu0 0.0
  %756 = vmatpush.xpose.msra.mxu0 %v740
  %757 = vmatpush.xpose.msra.mxu0 %v737
  %758 = vmatmul.f32.gmra.mxu0 %v731
  %v759 = vpop.f32.mrf.mxu0
  %v760 = vadd.f32 0.0, %v759
  %761 = vmatmul.f32.gmra.mxu0 %v734
  %v762 = vpop.f32.mrf.mxu0
  %v763 = vadd.f32 0.0, %v762
  %764 = vdwg.mxu0
  %v765 = vmul.f32 %v760, 0.35355338
  %v766 = vmul.f32 %v763, 0.35355338
  %v767 = vadd.f32 %v765, %v83
  %v768 = vadd.f32 %v766, %v84
  %v769 = vsel %vm165, %v767, -inf
  %770 = vmax.xlane.f32.xlu0 %v769
  %v771 = vpop.xlane.xlu0 %770
  %v772 = vsel %vm165, %v768, -inf
  %773 = vmax.xlane.f32.xlu0 %v772
  %v774 = vpop.xlane.xlu0 %773
  %v775 = vsub.f32 %v767, %v771
  %v776 = vsub.f32 %v768, %v774
  %v777 = vmul.f32 %v775, 1.442695
  %v778 = vpow.pop %v777
  %v779 = vmul.f32 %v776, 1.442695
  %v780 = vpow.pop %v779
  %v781 = vsel %vm165, %v778, 0.0
  %782 = vadd.xlane.f32.xlu0 %v781
  %v783 = vpop.xlane.xlu0 %782
  %v784 = vsel %vm165, %v780, 0.0
  %785 = vadd.xlane.f32.xlu0 %v784
  %v786 = vpop.xlane.xlu0 %785
  %v787 = vrcp.pop %v783
  %v788 = vrcp.pop %v786
  %v789 = vmul.f32 %v778, %v787
  %v790 = vmul.f32 %v780, %v788
  %791 = vrot.lane.b32.xlu0 %v725, 96
  %v792 = vpop.permute.xlu0 %791
  %793 = vrot.lane.b32.xlu0 %v728, 96
  %v794 = vpop.permute.xlu0 %793
  %v798 = vsel %vm165, %v789, 0
  %v801 = vsel %vm165, %v790, 0
  %803 = vmatpush.msra.mxu0 0.0
  %804 = vmatpush.msra.mxu0 0.0
  %805 = vmatpush.msra.mxu0 0.0
  %806 = vmatpush.msra.mxu0 0.0
  %807 = vmatpush.msra.mxu0 0.0
  %808 = vmatpush.msra.mxu0 0.0
  %809 = vmatpush.msra.mxu0 0.0
  %810 = vmatpush.msra.mxu0 0.0
  %811 = vmatpush.msra.mxu0 0.0
  %812 = vmatpush.msra.mxu0 0.0
  %813 = vmatpush.msra.mxu0 0.0
  %814 = vmatpush.msra.mxu0 0.0
  %815 = vmatpush.msra.mxu0 0.0
  %816 = vmatpush.msra.mxu0 0.0
  %817 = vmatpush.msra.mxu0 %v794
  %818 = vmatpush.msra.mxu0 %v792
  %819 = vmatmul.f32.gmra.mxu0 %v798
  %v820 = vpop.f32.mrf.mxu0
  %v821 = vadd.f32 0.0, %v820
  %822 = vmatmul.f32.gmra.mxu0 %v801
  %v823 = vpop.f32.mrf.mxu0
  %v824 = vadd.f32 0.0, %v823
  %825 = vdwg.mxu0
  %826 = vrot.lane.b32.xlu0 %v688, 120
  %v827 = vpop.permute.xlu0 %826
  %828 = vrot.lane.b32.xlu0 %v691, 120
  %v829 = vpop.permute.xlu0 %828
  %830 = vrot.lane.b32.xlu0 %v725, 120
  %v831 = vpop.permute.xlu0 %830
  %832 = vrot.lane.b32.xlu0 %v728, 120
  %v833 = vpop.permute.xlu0 %832
  %v834 = vsel %vm129, %v827, 0
  %v836 = vsel %vm129, %v829, 0
  %v838 = vsel %vm129, %v831, 0
  %v840 = vsel %vm129, %v833, 0
  %842 = vmatpush.xpose.msra.mxu0 0.0
  %843 = vmatpush.xpose.msra.mxu0 0.0
  %844 = vmatpush.xpose.msra.mxu0 0.0
  %845 = vmatpush.xpose.msra.mxu0 0.0
  %846 = vmatpush.xpose.msra.mxu0 0.0
  %847 = vmatpush.xpose.msra.mxu0 0.0
  %848 = vmatpush.xpose.msra.mxu0 0.0
  %849 = vmatpush.xpose.msra.mxu0 0.0
  %850 = vmatpush.xpose.msra.mxu0 0.0
  %851 = vmatpush.xpose.msra.mxu0 0.0
  %852 = vmatpush.xpose.msra.mxu0 0.0
  %853 = vmatpush.xpose.msra.mxu0 0.0
  %854 = vmatpush.xpose.msra.mxu0 0.0
  %855 = vmatpush.xpose.msra.mxu0 0.0
  %856 = vmatpush.xpose.msra.mxu0 %v840
  %857 = vmatpush.xpose.msra.mxu0 %v838
  %858 = vmatmul.f32.gmra.mxu0 %v834
  %v859 = vpop.f32.mrf.mxu0
  %v860 = vadd.f32 0.0, %v859
  %861 = vmatmul.f32.gmra.mxu0 %v836
  %v862 = vpop.f32.mrf.mxu0
  %v863 = vadd.f32 0.0, %v862
  %864 = vdwg.mxu0
  %v865 = vmul.f32 %v860, 0.35355338
  %v866 = vmul.f32 %v863, 0.35355338
  %v867 = vadd.f32 %v865, %v83
  %v868 = vadd.f32 %v866, %v84
  %v869 = vsel %vm165, %v867, -inf
  %870 = vmax.xlane.f32.xlu0 %v869
  %v871 = vpop.xlane.xlu0 %870
  %v872 = vsel %vm165, %v868, -inf
  %873 = vmax.xlane.f32.xlu0 %v872
  %v874 = vpop.xlane.xlu0 %873
  %v875 = vsub.f32 %v867, %v871
  %v876 = vsub.f32 %v868, %v874
  %v877 = vmul.f32 %v875, 1.442695
  %v878 = vpow.pop %v877
  %v879 = vmul.f32 %v876, 1.442695
  %v880 = vpow.pop %v879
  %v881 = vsel %vm165, %v878, 0.0
  %882 = vadd.xlane.f32.xlu0 %v881
  %v883 = vpop.xlane.xlu0 %882
  %v884 = vsel %vm165, %v880, 0.0
  %885 = vadd.xlane.f32.xlu0 %v884
  %v886 = vpop.xlane.xlu0 %885
  %v887 = vrcp.pop %v883
  %v888 = vrcp.pop %v886
  %v889 = vmul.f32 %v878, %v887
  %v890 = vmul.f32 %v880, %v888
  %891 = vrot.lane.b32.xlu0 %v725, 88
  %v892 = vpop.permute.xlu0 %891
  %893 = vrot.lane.b32.xlu0 %v728, 88
  %v894 = vpop.permute.xlu0 %893
  %v898 = vsel %vm165, %v889, 0
  %v901 = vsel %vm165, %v890, 0
  %903 = vmatpush.msra.mxu0 0.0
  %904 = vmatpush.msra.mxu0 0.0
  %905 = vmatpush.msra.mxu0 0.0
  %906 = vmatpush.msra.mxu0 0.0
  %907 = vmatpush.msra.mxu0 0.0
  %908 = vmatpush.msra.mxu0 0.0
  %909 = vmatpush.msra.mxu0 0.0
  %910 = vmatpush.msra.mxu0 0.0
  %911 = vmatpush.msra.mxu0 0.0
  %912 = vmatpush.msra.mxu0 0.0
  %913 = vmatpush.msra.mxu0 0.0
  %914 = vmatpush.msra.mxu0 0.0
  %915 = vmatpush.msra.mxu0 0.0
  %916 = vmatpush.msra.mxu0 0.0
  %917 = vmatpush.msra.mxu0 %v894
  %918 = vmatpush.msra.mxu0 %v892
  %919 = vmatmul.f32.gmra.mxu0 %v898
  %v920 = vpop.f32.mrf.mxu0
  %v921 = vadd.f32 0.0, %v920
  %922 = vmatmul.f32.gmra.mxu0 %v901
  %v923 = vpop.f32.mrf.mxu0
  %v924 = vadd.f32 0.0, %v923
  %925 = vdwg.mxu0
  %926 = vrot.lane.b32.xlu0 %v688, 112
  %v927 = vpop.permute.xlu0 %926
  %928 = vrot.lane.b32.xlu0 %v691, 112
  %v929 = vpop.permute.xlu0 %928
  %930 = vrot.lane.b32.xlu0 %v725, 112
  %v931 = vpop.permute.xlu0 %930
  %932 = vrot.lane.b32.xlu0 %v728, 112
  %v933 = vpop.permute.xlu0 %932
  %v934 = vsel %vm129, %v927, 0
  %v936 = vsel %vm129, %v929, 0
  %v938 = vsel %vm129, %v931, 0
  %v940 = vsel %vm129, %v933, 0
  %942 = vmatpush.xpose.msra.mxu0 0.0
  %943 = vmatpush.xpose.msra.mxu0 0.0
  %944 = vmatpush.xpose.msra.mxu0 0.0
  %945 = vmatpush.xpose.msra.mxu0 0.0
  %946 = vmatpush.xpose.msra.mxu0 0.0
  %947 = vmatpush.xpose.msra.mxu0 0.0
  %948 = vmatpush.xpose.msra.mxu0 0.0
  %949 = vmatpush.xpose.msra.mxu0 0.0
  %950 = vmatpush.xpose.msra.mxu0 0.0
  %951 = vmatpush.xpose.msra.mxu0 0.0
  %952 = vmatpush.xpose.msra.mxu0 0.0
  %953 = vmatpush.xpose.msra.mxu0 0.0
  %954 = vmatpush.xpose.msra.mxu0 0.0
  %955 = vmatpush.xpose.msra.mxu0 0.0
  %956 = vmatpush.xpose.msra.mxu0 %v940
  %957 = vmatpush.xpose.msra.mxu0 %v938
  %958 = vmatmul.f32.gmra.mxu0 %v934
  %v959 = vpop.f32.mrf.mxu0
  %v960 = vadd.f32 0.0, %v959
  %961 = vmatmul.f32.gmra.mxu0 %v936
  %v962 = vpop.f32.mrf.mxu0
  %v963 = vadd.f32 0.0, %v962
  %964 = vdwg.mxu0
  %v965 = vmul.f32 %v960, 0.35355338
  %v966 = vmul.f32 %v963, 0.35355338
  %v967 = vadd.f32 %v965, %v83
  %v968 = vadd.f32 %v966, %v84
  %v969 = vsel %vm165, %v967, -inf
  %970 = vmax.xlane.f32.xlu0 %v969
  %v971 = vpop.xlane.xlu0 %970
  %v972 = vsel %vm165, %v968, -inf
  %973 = vmax.xlane.f32.xlu0 %v972
  %v974 = vpop.xlane.xlu0 %973
  %v975 = vsub.f32 %v967, %v971
  %v976 = vsub.f32 %v968, %v974
  %v977 = vmul.f32 %v975, 1.442695
  %v978 = vpow.pop %v977
  %v979 = vmul.f32 %v976, 1.442695
  %v980 = vpow.pop %v979
  %v981 = vsel %vm165, %v978, 0.0
  %982 = vadd.xlane.f32.xlu0 %v981
  %v983 = vpop.xlane.xlu0 %982
  %v984 = vsel %vm165, %v980, 0.0
  %985 = vadd.xlane.f32.xlu0 %v984
  %v986 = vpop.xlane.xlu0 %985
  %v987 = vrcp.pop %v983
  %v988 = vrcp.pop %v986
  %v989 = vmul.f32 %v978, %v987
  %v990 = vmul.f32 %v980, %v988
  %991 = vrot.lane.b32.xlu0 %v725, 80
  %v992 = vpop.permute.xlu0 %991
  %993 = vrot.lane.b32.xlu0 %v728, 80
  %v994 = vpop.permute.xlu0 %993
  %v998 = vsel %vm165, %v989, 0
  %v1001 = vsel %vm165, %v990, 0
  %1003 = vmatpush.msra.mxu0 0.0
  %1004 = vmatpush.msra.mxu0 0.0
  %1005 = vmatpush.msra.mxu0 0.0
  %1006 = vmatpush.msra.mxu0 0.0
  %1007 = vmatpush.msra.mxu0 0.0
  %1008 = vmatpush.msra.mxu0 0.0
  %1009 = vmatpush.msra.mxu0 0.0
  %1010 = vmatpush.msra.mxu0 0.0
  %1011 = vmatpush.msra.mxu0 0.0
  %1012 = vmatpush.msra.mxu0 0.0
  %1013 = vmatpush.msra.mxu0 0.0
  %1014 = vmatpush.msra.mxu0 0.0
  %1015 = vmatpush.msra.mxu0 0.0
  %1016 = vmatpush.msra.mxu0 0.0
  %1017 = vmatpush.msra.mxu0 %v994
  %1018 = vmatpush.msra.mxu0 %v992
  %1019 = vmatmul.f32.gmra.mxu0 %v998
  %v1020 = vpop.f32.mrf.mxu0
  %v1021 = vadd.f32 0.0, %v1020
  %1022 = vmatmul.f32.gmra.mxu0 %v1001
  %v1023 = vpop.f32.mrf.mxu0
  %v1024 = vadd.f32 0.0, %v1023
  %1025 = vdwg.mxu0
  %1026 = vrot.lane.b32.xlu0 %v688, 104
  %v1027 = vpop.permute.xlu0 %1026
  %1028 = vrot.lane.b32.xlu0 %v691, 104
  %v1029 = vpop.permute.xlu0 %1028
  %1030 = vrot.lane.b32.xlu0 %v725, 104
  %v1031 = vpop.permute.xlu0 %1030
  %1032 = vrot.lane.b32.xlu0 %v728, 104
  %v1033 = vpop.permute.xlu0 %1032
  %v1034 = vsel %vm129, %v1027, 0
  %v1036 = vsel %vm129, %v1029, 0
  %v1038 = vsel %vm129, %v1031, 0
  %v1040 = vsel %vm129, %v1033, 0
  %1042 = vmatpush.xpose.msra.mxu0 0.0
  %1043 = vmatpush.xpose.msra.mxu0 0.0
  %1044 = vmatpush.xpose.msra.mxu0 0.0
  %1045 = vmatpush.xpose.msra.mxu0 0.0
  %1046 = vmatpush.xpose.msra.mxu0 0.0
  %1047 = vmatpush.xpose.msra.mxu0 0.0
  %1048 = vmatpush.xpose.msra.mxu0 0.0
  %1049 = vmatpush.xpose.msra.mxu0 0.0
  %1050 = vmatpush.xpose.msra.mxu0 0.0
  %1051 = vmatpush.xpose.msra.mxu0 0.0
  %1052 = vmatpush.xpose.msra.mxu0 0.0
  %1053 = vmatpush.xpose.msra.mxu0 0.0
  %1054 = vmatpush.xpose.msra.mxu0 0.0
  %1055 = vmatpush.xpose.msra.mxu0 0.0
  %1056 = vmatpush.xpose.msra.mxu0 %v1040
  %1057 = vmatpush.xpose.msra.mxu0 %v1038
  %1058 = vmatmul.f32.gmra.mxu0 %v1034
  %v1059 = vpop.f32.mrf.mxu0
  %v1060 = vadd.f32 0.0, %v1059
  %1061 = vmatmul.f32.gmra.mxu0 %v1036
  %v1062 = vpop.f32.mrf.mxu0
  %v1063 = vadd.f32 0.0, %v1062
  %1064 = vdwg.mxu0
  %v1065 = vmul.f32 %v1060, 0.35355338
  %v1066 = vmul.f32 %v1063, 0.35355338
  %v1067 = vadd.f32 %v1065, %v83
  %v1068 = vadd.f32 %v1066, %v84
  %v1069 = vsel %vm165, %v1067, -inf
  %1070 = vmax.xlane.f32.xlu0 %v1069
  %v1071 = vpop.xlane.xlu0 %1070
  %v1072 = vsel %vm165, %v1068, -inf
  %1073 = vmax.xlane.f32.xlu0 %v1072
  %v1074 = vpop.xlane.xlu0 %1073
  %v1075 = vsub.f32 %v1067, %v1071
  %v1076 = vsub.f32 %v1068, %v1074
  %v1077 = vmul.f32 %v1075, 1.442695
  %v1078 = vpow.pop %v1077
  %v1079 = vmul.f32 %v1076, 1.442695
  %v1080 = vpow.pop %v1079
  %v1081 = vsel %vm165, %v1078, 0.0
  %1082 = vadd.xlane.f32.xlu0 %v1081
  %v1083 = vpop.xlane.xlu0 %1082
  %v1084 = vsel %vm165, %v1080, 0.0
  %1085 = vadd.xlane.f32.xlu0 %v1084
  %v1086 = vpop.xlane.xlu0 %1085
  %v1087 = vrcp.pop %v1083
  %v1088 = vrcp.pop %v1086
  %v1089 = vmul.f32 %v1078, %v1087
  %v1090 = vmul.f32 %v1080, %v1088
  %1091 = vrot.lane.b32.xlu0 %v725, 72
  %v1092 = vpop.permute.xlu0 %1091
  %1093 = vrot.lane.b32.xlu0 %v728, 72
  %v1094 = vpop.permute.xlu0 %1093
  %v1098 = vsel %vm165, %v1089, 0
  %v1101 = vsel %vm165, %v1090, 0
  %1103 = vmatpush.msra.mxu0 0.0
  %1104 = vmatpush.msra.mxu0 0.0
  %1105 = vmatpush.msra.mxu0 0.0
  %1106 = vmatpush.msra.mxu0 0.0
  %1107 = vmatpush.msra.mxu0 0.0
  %1108 = vmatpush.msra.mxu0 0.0
  %1109 = vmatpush.msra.mxu0 0.0
  %1110 = vmatpush.msra.mxu0 0.0
  %1111 = vmatpush.msra.mxu0 0.0
  %1112 = vmatpush.msra.mxu0 0.0
  %1113 = vmatpush.msra.mxu0 0.0
  %1114 = vmatpush.msra.mxu0 0.0
  %1115 = vmatpush.msra.mxu0 0.0
  %1116 = vmatpush.msra.mxu0 0.0
  %1117 = vmatpush.msra.mxu0 %v1094
  %1118 = vmatpush.msra.mxu0 %v1092
  %1119 = vmatmul.f32.gmra.mxu0 %v1098
  %v1120 = vpop.f32.mrf.mxu0
  %v1121 = vadd.f32 0.0, %v1120
  %1122 = vmatmul.f32.gmra.mxu0 %v1101
  %v1123 = vpop.f32.mrf.mxu0
  %v1124 = vadd.f32 0.0, %v1123
  %1125 = vdwg.mxu0
  %1128 = vrot.lane.b32.xlu0 %v921, 8
  %v1129 = vpop.permute.xlu0 %1128
  %1130 = vrot.lane.b32.xlu0 %v924, 8
  %v1131 = vpop.permute.xlu0 %1130
  %1136 = vrot.lane.b32.xlu0 %v1021, 16
  %v1137 = vpop.permute.xlu0 %1136
  %1138 = vrot.lane.b32.xlu0 %v1024, 16
  %v1139 = vpop.permute.xlu0 %1138
  %1144 = vrot.lane.b32.xlu0 %v1121, 24
  %v1145 = vpop.permute.xlu0 %1144
  %1146 = vrot.lane.b32.xlu0 %v1124, 24
  %v1147 = vpop.permute.xlu0 %1146
  %v1150 = vsel %vm129, %v821, %v1129
  %v1151 = vsel %vm129, %v824, %v1131
  %v1152 = vsel %vm165, %v1150, %v1137
  %v1153 = vsel %vm165, %v1151, %v1139
  %v1154 = vsel %vm551, %v1152, %v1145
  %v1155 = vsel %vm551, %v1153, %v1147
  %v1156 = vld [vmem:[%s12] sm:$0xff]
  %v1157 = vld [vmem:[%s12 + $0x8] sm:$0xff]
  %v1158 = vld [vmem:[%s12 + $0x10] sm:$0xff]
  %v1159 = vld [vmem:[%s12 + $0x18] sm:$0xff]
  %v1160 = vld [vmem:[%s13] sm:$0x1]
  %v1162 = vperm.slane %v1160, 0
  %v1165 = vsel %vm93, %v1154, 0
  %v1168 = vsel %vm93, %v1155, 0
  %1170 = vmatpush.msra.mxu0 0.0
  %1171 = vmatpush.msra.mxu0 0.0
  %1172 = vmatpush.msra.mxu0 0.0
  %1173 = vmatpush.msra.mxu0 0.0
  %1174 = vmatpush.msra.mxu0 0.0
  %1175 = vmatpush.msra.mxu0 0.0
  %1176 = vmatpush.msra.mxu0 0.0
  %1177 = vmatpush.msra.mxu0 0.0
  %1178 = vmatpush.msra.mxu0 0.0
  %1179 = vmatpush.msra.mxu0 0.0
  %1180 = vmatpush.msra.mxu0 0.0
  %1181 = vmatpush.msra.mxu0 0.0
  %1182 = vmatpush.msra.mxu0 %v1159
  %1183 = vmatpush.msra.mxu0 %v1158
  %1184 = vmatpush.msra.mxu0 %v1157
  %1185 = vmatpush.msra.mxu0 %v1156
  %1186 = vmatmul.f32.gmra.mxu0 %v1165
  %v1187 = vpop.f32.mrf.mxu0
  %v1188 = vadd.f32 %v1162, %v1187
  %1189 = vmatmul.f32.gmra.mxu0 %v1168
  %v1190 = vpop.f32.mrf.mxu0
  %v1191 = vadd.f32 %v1162, %v1190
  %1192 = vdwg.mxu0
  %v1193 = vadd.f32 %v654, %v1188
  %v1194 = vadd.f32 %v655, %v1191
  %v1195 = vsel %vm93, %v1193, 0.0
  %1196 = vadd.xlane.f32.xlu0 %v1195
  %v1197 = vpop.xlane.xlu0 %1196
  %v1198 = vsel %vm93, %v1194, 0.0
  %1199 = vadd.xlane.f32.xlu0 %v1198
  %v1200 = vpop.xlane.xlu0 %1199
  %v1201 = vmul.f32 %v1197, %v605
  %v1202 = vmul.f32 %v1200, %v605
  %v1203 = vsub.f32 %v1193, %v1201
  %v1204 = vsub.f32 %v1194, %v1202
  %v1205 = vmul.f32 %v1203, %v1203
  %v1206 = vmul.f32 %v1204, %v1204
  %v1207 = vsel %vm93, %v1205, 0.0
  %1208 = vadd.xlane.f32.xlu0 %v1207
  %v1209 = vpop.xlane.xlu0 %1208
  %v1210 = vsel %vm93, %v1206, 0.0
  %1211 = vadd.xlane.f32.xlu0 %v1210
  %v1212 = vpop.xlane.xlu0 %1211
  %v1213 = vmul.f32 %v1209, %v605
  %v1214 = vmul.f32 %v1212, %v605
  %v1215 = vadd.f32 %v1213, 1e-05
  %v1216 = vadd.f32 %v1214, 1e-05
  %v1217 = vrsqrt.pop %v1215
  %v1218 = vmul.f32 %v1217, %v1215
  %v1219 = vmul.f32 %v1218, %v1217
  %v1220 = vmul.f32 0.5, %v1219
  %v1221 = vsub.f32 1.5, %v1220
  %v1222 = vmul.f32 %v1217, %v1221
  %vm1223 = vweird.f32 %v1215
  %vm1224 = vweird.f32 %v1217
  %vm1225 = vmor %vm1223, %vm1224
  %v1226 = vsel %vm1225, %v1217, %v1222
  %v1227 = vrsqrt.pop %v1216
  %v1228 = vmul.f32 %v1227, %v1216
  %v1229 = vmul.f32 %v1228, %v1227
  %v1230 = vmul.f32 0.5, %v1229
  %v1231 = vsub.f32 1.5, %v1230
  %v1232 = vmul.f32 %v1227, %v1231
  %vm1233 = vweird.f32 %v1216
  %vm1234 = vweird.f32 %v1227
  %vm1235 = vmor %vm1233, %vm1234
  %v1236 = vsel %vm1235, %v1227, %v1232
  %v1237 = vmul.f32 %v1203, %v1226
  %v1238 = vmul.f32 %v1204, %v1236
  %v1239 = vld [vmem:[%s20] sm:$0x1]
  %v1241 = vperm.slane %v1239, 0
  %v1243 = vmul.f32 %v1237, %v1241
  %v1244 = vmul.f32 %v1238, %v1241
  %v1245 = vld [vmem:[%s21] sm:$0x1]
  %v1247 = vperm.slane %v1245, 0
  %v1249 = vadd.f32 %v1243, %v1247
  %v1250 = vadd.f32 %v1244, %v1247
  %v1251 = vld [vmem:[%s14] sm:$0xff]
  %v1252 = vld [vmem:[%s14 + $0x8] sm:$0xff]
  %v1253 = vld [vmem:[%s14 + $0x10] sm:$0xff]
  %v1254 = vld [vmem:[%s14 + $0x18] sm:$0xff]
  %v1255 = vld [vmem:[%s15] sm:$0x1]
  %v1257 = vperm.slane %v1255, 0
  %v1260 = vsel %vm93, %v1249, 0
  %v1263 = vsel %vm93, %v1250, 0
  %1265 = vmatpush.msra.mxu0 0.0
  %1266 = vmatpush.msra.mxu0 0.0
  %1267 = vmatpush.msra.mxu0 0.0
  %1268 = vmatpush.msra.mxu0 0.0
  %1269 = vmatpush.msra.mxu0 0.0
  %1270 = vmatpush.msra.mxu0 0.0
  %1271 = vmatpush.msra.mxu0 0.0
  %1272 = vmatpush.msra.mxu0 0.0
  %1273 = vmatpush.msra.mxu0 0.0
  %1274 = vmatpush.msra.mxu0 0.0
  %1275 = vmatpush.msra.mxu0 0.0
  %1276 = vmatpush.msra.mxu0 0.0
  %1277 = vmatpush.msra.mxu0 %v1254
  %1278 = vmatpush.msra.mxu0 %v1253
  %1279 = vmatpush.msra.mxu0 %v1252
  %1280 = vmatpush.msra.mxu0 %v1251
  %1281 = vmatmul.f32.gmra.mxu0 %v1260
  %v1282 = vpop.f32.mrf.mxu0
  %v1283 = vadd.f32 %v1257, %v1282
  %1284 = vmatmul.f32.gmra.mxu0 %v1263
  %v1285 = vpop.f32.mrf.mxu0
  %v1286 = vadd.f32 %v1257, %v1285
  %1287 = vdwg.mxu0
  %v1288 = vmax.f32 %v1283, 0.0
  %v1289 = vmax.f32 %v1286, 0.0
  %v1290 = vld [vmem:[%s16] sm:$0xff]
  %v1291 = vld [vmem:[%s16 + $0x8] sm:$0xff]
  %v1292 = vld [vmem:[%s16 + $0x10] sm:$0xff]
  %v1293 = vld [vmem:[%s16 + $0x18] sm:$0xff]
  %v1294 = vld [vmem:[%s16 + $0x20] sm:$0xff]
  %v1295 = vld [vmem:[%s16 + $0x28] sm:$0xff]
  %v1296 = vld [vmem:[%s16 + $0x30] sm:$0xff]
  %v1297 = vld [vmem:[%s16 + $0x38] sm:$0xff]
  %v1298 = vld [vmem:[%s17] sm:$0x1]
  %v1300 = vperm.slane %v1298, 0
  %vm1302 = vcmask 523264
  %v1304 = vsel %vm1302, %v1288, 0
  %v1307 = vsel %vm1302, %v1289, 0
  %1309 = vmatpush.msra.mxu0 0.0
  %1310 = vmatpush.msra.mxu0 0.0
  %1311 = vmatpush.msra.mxu0 0.0
  %1312 = vmatpush.msra.mxu0 0.0
  %1313 = vmatpush.msra.mxu0 0.0
  %1314 = vmatpush.msra.mxu0 0.0
  %1315 = vmatpush.msra.mxu0 0.0
  %1316 = vmatpush.msra.mxu0 0.0
  %1317 = vmatpush.msra.mxu0 %v1297
  %1318 = vmatpush.msra.mxu0 %v1296
  %1319 = vmatpush.msra.mxu0 %v1295
  %1320 = vmatpush.msra.mxu0 %v1294
  %1321 = vmatpush.msra.mxu0 %v1293
  %1322 = vmatpush.msra.mxu0 %v1292
  %1323 = vmatpush.msra.mxu0 %v1291
  %1324 = vmatpush.msra.mxu0 %v1290
  %1325 = vmatmul.f32.gmra.mxu0 %v1304
  %v1326 = vpop.f32.mrf.mxu0
  %v1327 = vadd.f32 %v1300, %v1326
  %1328 = vmatmul.f32.gmra.mxu0 %v1307
  %v1329 = vpop.f32.mrf.mxu0
  %v1330 = vadd.f32 %v1300, %v1329
  %1331 = vdwg.mxu0
  %v1332 = vadd.f32 %v1249, %v1327
  %v1333 = vadd.f32 %v1250, %v1330
  %v1334 = vsel %vm93, %v1332, 0.0
  %1335 = vadd.xlane.f32.xlu0 %v1334
  %v1336 = vpop.xlane.xlu0 %1335
  %v1337 = vsel %vm93, %v1333, 0.0
  %1338 = vadd.xlane.f32.xlu0 %v1337
  %v1339 = vpop.xlane.xlu0 %1338
  %v1340 = vmul.f32 %v1336, %v605
  %v1341 = vmul.f32 %v1339, %v605
  %v1342 = vsub.f32 %v1332, %v1340
  %v1343 = vsub.f32 %v1333, %v1341
  %v1344 = vmul.f32 %v1342, %v1342
  %v1345 = vmul.f32 %v1343, %v1343
  %v1346 = vsel %vm93, %v1344, 0.0
  %1347 = vadd.xlane.f32.xlu0 %v1346
  %v1348 = vpop.xlane.xlu0 %1347
  %v1349 = vsel %vm93, %v1345, 0.0
  %1350 = vadd.xlane.f32.xlu0 %v1349
  %v1351 = vpop.xlane.xlu0 %1350
  %v1352 = vmul.f32 %v1348, %v605
  %v1353 = vmul.f32 %v1351, %v605
  %v1354 = vadd.f32 %v1352, 1e-05
  %v1355 = vadd.f32 %v1353, 1e-05
  %v1356 = vrsqrt.pop %v1354
  %v1357 = vmul.f32 %v1356, %v1354
  %v1358 = vmul.f32 %v1357, %v1356
  %v1359 = vmul.f32 0.5, %v1358
  %v1360 = vsub.f32 1.5, %v1359
  %v1361 = vmul.f32 %v1356, %v1360
  %vm1362 = vweird.f32 %v1354
  %vm1363 = vweird.f32 %v1356
  %vm1364 = vmor %vm1362, %vm1363
  %v1365 = vsel %vm1364, %v1356, %v1361
  %v1366 = vrsqrt.pop %v1355
  %v1367 = vmul.f32 %v1366, %v1355
  %v1368 = vmul.f32 %v1367, %v1366
  %v1369 = vmul.f32 0.5, %v1368
  %v1370 = vsub.f32 1.5, %v1369
  %v1371 = vmul.f32 %v1366, %v1370
  %vm1372 = vweird.f32 %v1355
  %vm1373 = vweird.f32 %v1366
  %vm1374 = vmor %vm1372, %vm1373
  %v1375 = vsel %vm1374, %v1366, %v1371
  %v1376 = vmul.f32 %v1342, %v1365
  %v1377 = vmul.f32 %v1343, %v1375
  %v1378 = vld [vmem:[%s22] sm:$0x1]
  %v1380 = vperm.slane %v1378, 0
  %v1382 = vmul.f32 %v1376, %v1380
  %v1383 = vmul.f32 %v1377, %v1380
  %v1384 = vld [vmem:[%s23] sm:$0x1]
  %v1386 = vperm.slane %v1384, 0
  %v1388 = vadd.f32 %v1382, %v1386
  %v1389 = vadd.f32 %v1383, %v1386
  %1390 = vst.msk [vmem:[%s24] sm:$0xff] %vm93, %v1388
  %1391 = vst.msk [vmem:[%s24 + $0x8] sm:$0xff] %vm93, %v1389
  // Predicated region
  $region98: #{transformer_decoder_forward.3} parent=0 // pred_check
    _
  $region99: #{transformer_decoder_forward.3} parent=0 // pred_check_branch
    %1393 = sbr.rel (0) target = $region101
  $region100: #{transformer_decoder_forward.3} parent=0 // pred_region
    _
  $region101: #{transformer_decoder_forward.3} parent=0 // pred_fallthru
    _
  // Predicated region
  $region102: #{transformer_decoder_forward.3} parent=0 // pred_check
    _
  $region103: #{transformer_decoder_forward.3} parent=0 // pred_check_branch
    %1395 = sbr.rel (0) target = $region105
  $region104: #{transformer_decoder_forward.3} parent=0 // pred_region
    _
  $region105: #{transformer_decoder_forward.3} parent=0 // pred_fallthru
    _

// kernel: transformer_decoder_forward.4
$region0: #{transformer_decoder_forward.4}
  #allocation0 [shape = 'u32[]', space=smem, size = 0x4, offset = 0x4, fixed_abs, tag = 'smem constant byte address 0x4 - core index']
  #allocation1 [shape = 'u32[72,128]{1,0:T(1,128)}', space=vmem, size = 0x9000, scoped, tag = 'internal scratch']
  %s0 = inlined_call_operand.vmem [shape: f32[16,32], index: 0, kind: input, shape index: {}]
  %s1 = inlined_call_operand.vmem [shape: f32[16,32], index: 1, kind: input, shape index: {}]
  %s2 = inlined_call_operand.vmem [shape: f32[16,16], index: 2, kind: input, shape index: {}, may-alias: {2,3}]
  %s3 = inlined_call_operand.vmem [shape: f32[16,16], index: 3, kind: input, shape index: {}, may-alias: {2,3}]
  %s4 = inlined_call_operand.vmem [shape: f32[32,96], index: 4, kind: input, shape index: {}]
  %s5 = inlined_call_operand.vmem [shape: f32[1,96], index: 5, kind: input, shape index: {}]
  %s6 = inlined_call_operand.vmem [shape: f32[32,32], index: 6, kind: input, shape index: {}]
  %s7 = inlined_call_operand.vmem [shape: f32[1,32], index: 7, kind: input, shape index: {}]
  %s8 = inlined_call_operand.vmem [shape: f32[32,32], index: 8, kind: input, shape index: {}]
  %s9 = inlined_call_operand.vmem [shape: f32[1,32], index: 9, kind: input, shape index: {}]
  %s10 = inlined_call_operand.vmem [shape: f32[32,64], index: 10, kind: input, shape index: {}]
  %s11 = inlined_call_operand.vmem [shape: f32[1,64], index: 11, kind: input, shape index: {}]
  %s12 = inlined_call_operand.vmem [shape: f32[32,32], index: 12, kind: input, shape index: {}]
  %s13 = inlined_call_operand.vmem [shape: f32[1,32], index: 13, kind: input, shape index: {}]
  %s14 = inlined_call_operand.vmem [shape: f32[32,64], index: 14, kind: input, shape index: {}]
  %s15 = inlined_call_operand.vmem [shape: f32[1,64], index: 15, kind: input, shape index: {}]
  %s16 = inlined_call_operand.vmem [shape: f32[64,32], index: 16, kind: input, shape index: {}]
  %s17 = inlined_call_operand.vmem [shape: f32[1,32], index: 17, kind: input, shape index: {}]
  %s18 = inlined_call_operand.vmem [shape: f32[1,32], index: 18, kind: input, shape index: {}]
  %s19 = inlined_call_operand.vmem [shape: f32[1,32], index: 19, kind: input, shape index: {}]
  %s20 = inlined_call_operand.vmem [shape: f32[1,32], index: 20, kind: input, shape index: {}]
  %s21 = inlined_call_operand.hbm [shape: f32[1,32], index: 21, kind: input, shape index: {}]
  %s22 = inlined_call_operand.hbm [shape: f32[1,32], index: 22, kind: input, shape index: {}]
  %s23 = inlined_call_operand.hbm [shape: f32[1,32], index: 23, kind: input, shape index: {}]
  %s24 = inlined_call_operand.vmem [shape: f32[16,32], index: 24, kind: output, shape index: {}]
  %s25 = sld [smem:[#allocation0]]
  $region118: #{transformer_decoder_forward.4} parent=0
    _
  %s27 = ssub.s32 1, %s25
  %s28 = scalar_select 0, %s27, %s25
  $region1: #{transformer_decoder_forward.4} parent=0
    #allocation2 [shape = 'u8[512]{0}', space=vmem, size = 0x400, scoped, tag = 'input window, operand 21, single buffered']
    #allocation3 [shape = 's32[1]{0}', space=sflag, size = 0x4, scoped, tag = 'scoped memory for transformer_decoder_forward.4']
    #allocation4 [shape = 'u8[512]{0}', space=vmem, size = 0x400, scoped, tag = 'input window, operand 22, single buffered']
    #allocation5 [shape = 's32[1]{0}', space=sflag, size = 0x4, scoped, tag = 'scoped memory for transformer_decoder_forward.4']
    #allocation6 [shape = 'u8[512]{0}', space=vmem, size = 0x400, scoped, tag = 'input window, operand 23, single buffered']
    %29 = vsyncpa [#allocation3], 0
    %30 = vsyncpa [#allocation5], 0
    // Predicated region
    $region2: #{transformer_decoder_forward.4} parent=1 // pred_check
      _
    $region3: #{transformer_decoder_forward.4} parent=1 // pred_check_branch
      %32 = sbr.rel (0) target = $region5
    $region4: #{transformer_decoder_forward.4} parent=1 // pred_region
      _
    $region5: #{transformer_decoder_forward.4} parent=1 // pred_fallthru
      _
    // Predicated region
    $region6: #{transformer_decoder_forward.4} parent=1 // pred_check
      _
    $region7: #{transformer_decoder_forward.4} parent=1 // pred_check_branch
      %34 = sbr.rel (0) target = $region9
    $region8: #{transformer_decoder_forward.4} parent=1 // pred_region
      _
    $region9: #{transformer_decoder_forward.4} parent=1 // pred_fallthru
      _
    // Predicated region
    $region10: #{transformer_decoder_forward.4} parent=1 // pred_check
      _
    $region11: #{transformer_decoder_forward.4} parent=1 // pred_check_branch
      %36 = sbr.rel (0) target = $region13
    $region12: #{transformer_decoder_forward.4} parent=1 // pred_region
      _
    $region13: #{transformer_decoder_forward.4} parent=1 // pred_fallthru
      _
    // Predicated region
    $region14: #{transformer_decoder_forward.4} parent=1 // pred_check
      _
    $region15: #{transformer_decoder_forward.4} parent=1 // pred_check_branch
      %38 = sbr.rel (0) target = $region17
    $region16: #{transformer_decoder_forward.4} parent=1 // pred_region
      _
    $region17: #{transformer_decoder_forward.4} parent=1 // pred_fallthru
      _
    // Predicated region
    $region18: #{transformer_decoder_forward.4} parent=1 // pred_check
      _
    $region19: #{transformer_decoder_forward.4} parent=1 // pred_check_branch
      %40 = sbr.rel (0) target = $region21
    $region20: #{transformer_decoder_forward.4} parent=1 // pred_region
      _
    $region21: #{transformer_decoder_forward.4} parent=1 // pred_fallthru
      _
    // Predicated region
    $region22: #{transformer_decoder_forward.4} parent=1 // pred_check
      _
    $region23: #{transformer_decoder_forward.4} parent=1 // pred_check_branch
      %42 = sbr.rel (0) target = $region25
    $region24: #{transformer_decoder_forward.4} parent=1 // pred_region
      _
    $region25: #{transformer_decoder_forward.4} parent=1 // pred_fallthru
      _
    // Predicated region
    $region26: #{transformer_decoder_forward.4} parent=1 // pred_check
      _
    $region27: #{transformer_decoder_forward.4} parent=1 // pred_check_branch
      %44 = sbr.rel (0) target = $region29
    $region28: #{transformer_decoder_forward.4} parent=1 // pred_region
      _
    $region29: #{transformer_decoder_forward.4} parent=1 // pred_fallthru
      _
    // Predicated region
    $region30: #{transformer_decoder_forward.4} parent=1 // pred_check
      _
    $region31: #{transformer_decoder_forward.4} parent=1 // pred_check_branch
      %46 = sbr.rel (0) target = $region33
    $region32: #{transformer_decoder_forward.4} parent=1 // pred_region
      _
    $region33: #{transformer_decoder_forward.4} parent=1 // pred_fallthru
      _
    // Predicated region
    $region34: #{transformer_decoder_forward.4} parent=1 // pred_check
      _
    $region35: #{transformer_decoder_forward.4} parent=1 // pred_check_branch
      %48 = sbr.rel (0) target = $region37
    $region36: #{transformer_decoder_forward.4} parent=1 // pred_region
      _
    $region37: #{transformer_decoder_forward.4} parent=1 // pred_fallthru
      _
    // Predicated region
    $region38: #{transformer_decoder_forward.4} parent=1 // pred_check
      _
    $region39: #{transformer_decoder_forward.4} parent=1 // pred_check_branch
      %50 = sbr.rel (0) target = $region41
    $region40: #{transformer_decoder_forward.4} parent=1 // pred_region
      _
    $region41: #{transformer_decoder_forward.4} parent=1 // pred_fallthru
      _
    // Predicated region
    $region42: #{transformer_decoder_forward.4} parent=1 // pred_check
      _
    $region43: #{transformer_decoder_forward.4} parent=1 // pred_check_branch
      %52 = sbr.rel (0) target = $region45
    $region44: #{transformer_decoder_forward.4} parent=1 // pred_region
      _
    $region45: #{transformer_decoder_forward.4} parent=1 // pred_fallthru
      _
    // Predicated region
    $region46: #{transformer_decoder_forward.4} parent=1 // pred_check
      _
    $region47: #{transformer_decoder_forward.4} parent=1 // pred_check_branch
      %54 = sbr.rel (0) target = $region49
    $region48: #{transformer_decoder_forward.4} parent=1 // pred_region
      _
    $region49: #{transformer_decoder_forward.4} parent=1 // pred_fallthru
      _
    // Predicated region
    $region50: #{transformer_decoder_forward.4} parent=1 // pred_check
      _
    $region51: #{transformer_decoder_forward.4} parent=1 // pred_check_branch
      %56 = sbr.rel (0) target = $region53
    $region52: #{transformer_decoder_forward.4} parent=1 // pred_region
      _
    $region53: #{transformer_decoder_forward.4} parent=1 // pred_fallthru
      _
    // Predicated region
    $region54: #{transformer_decoder_forward.4} parent=1 // pred_check
      _
    $region55: #{transformer_decoder_forward.4} parent=1 // pred_check_branch
      %58 = sbr.rel (0) target = $region57
    $region56: #{transformer_decoder_forward.4} parent=1 // pred_region
      _
    $region57: #{transformer_decoder_forward.4} parent=1 // pred_fallthru
      _
    // Predicated region
    $region58: #{transformer_decoder_forward.4} parent=1 // pred_check
      _
    $region59: #{transformer_decoder_forward.4} parent=1 // pred_check_branch
      %60 = sbr.rel (0) target = $region61
    $region60: #{transformer_decoder_forward.4} parent=1 // pred_region
      _
    $region61: #{transformer_decoder_forward.4} parent=1 // pred_fallthru
      _
    // Predicated region
    $region62: #{transformer_decoder_forward.4} parent=1 // pred_check
      _
    $region63: #{transformer_decoder_forward.4} parent=1 // pred_check_branch
      %62 = sbr.rel (0) target = $region65
    $region64: #{transformer_decoder_forward.4} parent=1 // pred_region
      _
    $region65: #{transformer_decoder_forward.4} parent=1 // pred_fallthru
      _
    // Predicated region
    $region66: #{transformer_decoder_forward.4} parent=1 // pred_check
      _
    $region67: #{transformer_decoder_forward.4} parent=1 // pred_check_branch
      %64 = sbr.rel (0) target = $region69
    $region68: #{transformer_decoder_forward.4} parent=1 // pred_region
      _
    $region69: #{transformer_decoder_forward.4} parent=1 // pred_fallthru
      _
    // Predicated region
    $region70: #{transformer_decoder_forward.4} parent=1 // pred_check
      _
    $region71: #{transformer_decoder_forward.4} parent=1 // pred_check_branch
      %66 = sbr.rel (0) target = $region73
    $region72: #{transformer_decoder_forward.4} parent=1 // pred_region
      _
    $region73: #{transformer_decoder_forward.4} parent=1 // pred_fallthru
      _
    // Predicated region
    $region74: #{transformer_decoder_forward.4} parent=1 // pred_check
      _
    $region75: #{transformer_decoder_forward.4} parent=1 // pred_check_branch
      %68 = sbr.rel (0) target = $region77
    $region76: #{transformer_decoder_forward.4} parent=1 // pred_region
      _
    $region77: #{transformer_decoder_forward.4} parent=1 // pred_fallthru
      _
    // Predicated region
    $region78: #{transformer_decoder_forward.4} parent=1 // pred_check
      _
    $region79: #{transformer_decoder_forward.4} parent=1 // pred_check_branch
      %70 = sbr.rel (0) target = $region81
    $region80: #{transformer_decoder_forward.4} parent=1 // pred_region
      _
    $region81: #{transformer_decoder_forward.4} parent=1 // pred_fallthru
      _
    // Predicated region
    $region82: #{transformer_decoder_forward.4} parent=1 // pred_check
      _
    $region83: #{transformer_decoder_forward.4} parent=1 // pred_check_branch
      %72 = sbr.rel (0) target = $region85
    $region84: #{transformer_decoder_forward.4} parent=1 // pred_region
      _
    $region85: #{transformer_decoder_forward.4} parent=1 // pred_fallthru
      _
    // Predicated region
    $region86: #{transformer_decoder_forward.4} parent=1 // pred_check
      _
    $region87: #{transformer_decoder_forward.4} parent=1 // pred_check_branch
      %74 = sbr.rel (0) target = $region89
    $region88: #{transformer_decoder_forward.4} parent=1 // pred_region
      %76 = vsyncadd [#allocation3], 0
      %s78 = sshll.u32 %s21, 4
      %s79 = int_to_ptr.hbm [resolvable:$true] %s78
      %s80 = sshll.u32 [#allocation2], 4
      %s81 = int_to_ptr.vmem [resolvable:$true] %s80
      %83 = dma.hbm_to_vmem [thread:$0]  %s79, 16, %s81, [#allocation3]
    $region89: #{transformer_decoder_forward.4} parent=1 // pred_fallthru
      _
    // Predicated region
    $region90: #{transformer_decoder_forward.4} parent=1 // pred_check
      _
    $region91: #{transformer_decoder_forward.4} parent=1 // pred_check_branch
      %85 = sbr.rel (0) target = $region93
    $region92: #{transformer_decoder_forward.4} parent=1 // pred_region
      %87 = vsyncadd [#allocation5], 0
      %s89 = sshll.u32 %s22, 4
      %s90 = int_to_ptr.hbm [resolvable:$true] %s89
      %s91 = sshll.u32 [#allocation4], 4
      %s92 = int_to_ptr.vmem [resolvable:$true] %s91
      %94 = dma.hbm_to_vmem [thread:$0]  %s90, 16, %s92, [#allocation5]
    $region93: #{transformer_decoder_forward.4} parent=1 // pred_fallthru
      _
    // Predicated region
    $region94: #{transformer_decoder_forward.4} parent=1 // pred_check
      _
    $region95: #{transformer_decoder_forward.4} parent=1 // pred_check_branch
      %96 = sbr.rel (0) target = $region97
    $region96: #{transformer_decoder_forward.4} parent=1 // pred_region
      %98 = vsyncadd [#allocation5], 0
      %s100 = sshll.u32 %s23, 4
      %s101 = int_to_ptr.hbm [resolvable:$true] %s100
      %s102 = sshll.u32 [#allocation6], 4
      %s103 = int_to_ptr.vmem [resolvable:$true] %s102
      %105 = dma.hbm_to_vmem [thread:$0]  %s101, 16, %s103, [#allocation5]
    $region97: #{transformer_decoder_forward.4} parent=1 // pred_fallthru
      _
    // Predicated region
    $region98: #{transformer_decoder_forward.4} parent=1 // pred_check
      _
    $region99: #{transformer_decoder_forward.4} parent=1 // pred_check_branch
      %107 = sbr.rel (0) target = $region101
    $region100: #{transformer_decoder_forward.4} parent=1 // pred_region
      %109 = dma.done [#allocation3], 16
    $region101: #{transformer_decoder_forward.4} parent=1 // pred_fallthru
      _
    // Predicated region
    $region102: #{transformer_decoder_forward.4} parent=1 // pred_check
      _
    $region103: #{transformer_decoder_forward.4} parent=1 // pred_check_branch
      %111 = sbr.rel (0) target = $region105
    $region104: #{transformer_decoder_forward.4} parent=1 // pred_region
      %113 = dma.done [#allocation5], 16
    $region105: #{transformer_decoder_forward.4} parent=1 // pred_fallthru
      _
    // Predicated region
    $region106: #{transformer_decoder_forward.4} parent=1 // pred_check
      _
    $region107: #{transformer_decoder_forward.4} parent=1 // pred_check_branch
      %115 = sbr.rel (0) target = $region109
    $region108: #{transformer_decoder_forward.4} parent=1 // pred_region
      %117 = dma.done [#allocation5], 16
    $region109: #{transformer_decoder_forward.4} parent=1 // pred_fallthru
      _
    %v118 = vld [vmem:[%s0] sm:$0xff]
    %v119 = vld [vmem:[%s0 + $0x8] sm:$0xff]
    %v120 = vld [vmem:[%s1] sm:$0xff]
    %v121 = vld [vmem:[%s1 + $0x8] sm:$0xff]
    %v122 = vld [vmem:[%s2] sm:$0xff]
    %v123 = vld [vmem:[%s2 + $0x8] sm:$0xff]
    %v124 = vld [vmem:[%s3] sm:$0xff]
    %v125 = vld [vmem:[%s3 + $0x8] sm:$0xff]
    %v126 = vld [vmem:[%s4] sm:$0xff]
    %v127 = vld [vmem:[%s4 + $0x8] sm:$0xff]
    %v128 = vld [vmem:[%s4 + $0x10] sm:$0xff]
    %v129 = vld [vmem:[%s4 + $0x18] sm:$0xff]
    %v130 = vld [vmem:[%s5] sm:$0x1]
    %v132 = vperm.slane %v130, 0
    %vm134 = vcmask 261120
    %v136 = vsel %vm134, %v118, 0
    %v139 = vsel %vm134, %v119, 0
    %141 = vmatpush.msra.mxu0 0.0
    %142 = vmatpush.msra.mxu0 0.0
    %143 = vmatpush.msra.mxu0 0.0
    %144 = vmatpush.msra.mxu0 0.0
    %145 = vmatpush.msra.mxu0 0.0
    %146 = vmatpush.msra.mxu0 0.0
    %147 = vmatpush.msra.mxu0 0.0
    %148 = vmatpush.msra.mxu0 0.0
    %149 = vmatpush.msra.mxu0 0.0
    %150 = vmatpush.msra.mxu0 0.0
    %151 = vmatpush.msra.mxu0 0.0
    %152 = vmatpush.msra.mxu0 0.0
    %153 = vmatpush.msra.mxu0 %v129
    %154 = vmatpush.msra.mxu0 %v128
    %155 = vmatpush.msra.mxu0 %v127
    %156 = vmatpush.msra.mxu0 %v126
    %157 = vmatmul.f32.gmra.mxu0 %v136
    %v158 = vpop.f32.mrf.mxu0
    %v159 = vadd.f32 %v132, %v158
    %160 = vmatmul.f32.gmra.mxu0 %v139
    %v161 = vpop.f32.mrf.mxu0
    %v162 = vadd.f32 %v132, %v161
    %163 = vdwg.mxu0
    %166 = vrot.lane.b32.xlu0 %v159, 96
    %v167 = vpop.permute.xlu0 %166
    %168 = vrot.lane.b32.xlu0 %v162, 96
    %v169 = vpop.permute.xlu0 %168
    %vm170 = vcmask 64512
    %v171 = vsel %vm170, %v159, 0
    %v173 = vsel %vm170, %v162, 0
    %v175 = vsel %vm170, %v167, 0
    %v177 = vsel %vm170, %v169, 0
    %179 = vmatpush.xpose.msra.mxu0 0.0
    %180 = vmatpush.xpose.msra.mxu0 0.0
    %181 = vmatpush.xpose.msra.mxu0 0.0
    %182 = vmatpush.xpose.msra.mxu0 0.0
    %183 = vmatpush.xpose.msra.mxu0 0.0
    %184 = vmatpush.xpose.msra.mxu0 0.0
    %185 = vmatpush.xpose.msra.mxu0 0.0
    %186 = vmatpush.xpose.msra.mxu0 0.0
    %187 = vmatpush.xpose.msra.mxu0 0.0
    %188 = vmatpush.xpose.msra.mxu0 0.0
    %189 = vmatpush.xpose.msra.mxu0 0.0
    %190 = vmatpush.xpose.msra.mxu0 0.0
    %191 = vmatpush.xpose.msra.mxu0 0.0
    %192 = vmatpush.xpose.msra.mxu0 0.0
    %193 = vmatpush.xpose.msra.mxu0 %v177
    %194 = vmatpush.xpose.msra.mxu0 %v175
    %195 = vmatmul.f32.gmra.mxu0 %v171
    %v196 = vpop.f32.mrf.mxu0
    %v197 = vadd.f32 0.0, %v196
    %198 = vmatmul.f32.gmra.mxu0 %v173
    %v199 = vpop.f32.mrf.mxu0
    %v200 = vadd.f32 0.0, %v199
    %201 = vdwg.mxu0
    %v202 = vmul.f32 %v197, 0.35355338
    %v203 = vmul.f32 %v200, 0.35355338
    %v204 = vadd.f32 %v202, %v122
    %v205 = vadd.f32 %v203, %v123
    %vm206 = vcmask 130048
    %v207 = vsel %vm206, %v204, -inf
    %208 = vmax.xlane.f32.xlu0 %v207
    %v209 = vpop.xlane.xlu0 %208
    %v210 = vsel %vm206, %v205, -inf
    %211 = vmax.xlane.f32.xlu0 %v210
    %v212 = vpop.xlane.xlu0 %211
    %v213 = vsub.f32 %v204, %v209
    %v214 = vsub.f32 %v205, %v212
    %v215 = vmul.f32 %v213, 1.442695
    %v216 = vpow.pop %v215
    %v217 = vmul.f32 %v214, 1.442695
    %v218 = vpow.pop %v217
    %v219 = vsel %vm206, %v216, 0.0
    %220 = vadd.xlane.f32.xlu0 %v219
    %v221 = vpop.xlane.xlu0 %220
    %v222 = vsel %vm206, %v218, 0.0
    %223 = vadd.xlane.f32.xlu0 %v222
    %v224 = vpop.xlane.xlu0 %223
    %v225 = vrcp.pop %v221
    %v226 = vrcp.pop %v224
    %v227 = vmul.f32 %v216, %v225
    %v228 = vmul.f32 %v218, %v226
    %229 = vrot.lane.b32.xlu0 %v159, 64
    %v230 = vpop.permute.xlu0 %229
    %231 = vrot.lane.b32.xlu0 %v162, 64
    %v232 = vpop.permute.xlu0 %231
    %v236 = vsel %vm206, %v227, 0
    %v239 = vsel %vm206, %v228, 0
    %241 = vmatpush.msra.mxu0 0.0
    %242 = vmatpush.msra.mxu0 0.0
    %243 = vmatpush.msra.mxu0 0.0
    %244 = vmatpush.msra.mxu0 0.0
    %245 = vmatpush.msra.mxu0 0.0
    %246 = vmatpush.msra.mxu0 0.0
    %247 = vmatpush.msra.mxu0 0.0
    %248 = vmatpush.msra.mxu0 0.0
    %249 = vmatpush.msra.mxu0 0.0
    %250 = vmatpush.msra.mxu0 0.0
    %251 = vmatpush.msra.mxu0 0.0
    %252 = vmatpush.msra.mxu0 0.0
    %253 = vmatpush.msra.mxu0 0.0
    %254 = vmatpush.msra.mxu0 0.0
    %255 = vmatpush.msra.mxu0 %v232
    %256 = vmatpush.msra.mxu0 %v230
    %257 = vmatmul.f32.gmra.mxu0 %v236
    %v258 = vpop.f32.mrf.mxu0
    %v259 = vadd.f32 0.0, %v258
    %260 = vmatmul.f32.gmra.mxu0 %v239
    %v261 = vpop.f32.mrf.mxu0
    %v262 = vadd.f32 0.0, %v261
    %263 = vdwg.mxu0
    %264 = vrot.lane.b32.xlu0 %v159, 120
    %v265 = vpop.permute.xlu0 %264
    %266 = vrot.lane.b32.xlu0 %v162, 120
    %v267 = vpop.permute.xlu0 %266
    %268 = vrot.lane.b32.xlu0 %v159, 88
    %v269 = vpop.permute.xlu0 %268
    %270 = vrot.lane.b32.xlu0 %v162, 88
    %v271 = vpop.permute.xlu0 %270
    %v272 = vsel %vm170, %v265, 0
    %v274 = vsel %vm170, %v267, 0
    %v276 = vsel %vm170, %v269, 0
    %v278 = vsel %vm170, %v271, 0
    %280 = vmatpush.xpose.msra.mxu0 0.0
    %281 = vmatpush.xpose.msra.mxu0 0.0
    %282 = vmatpush.xpose.msra.mxu0 0.0
    %283 = vmatpush.xpose.msra.mxu0 0.0
    %284 = vmatpush.xpose.msra.mxu0 0.0
    %285 = vmatpush.xpose.msra.mxu0 0.0
    %286 = vmatpush.xpose.msra.mxu0 0.0
    %287 = vmatpush.xpose.msra.mxu0 0.0
    %288 = vmatpush.xpose.msra.mxu0 0.0
    %289 = vmatpush.xpose.msra.mxu0 0.0
    %290 = vmatpush.xpose.msra.mxu0 0.0
    %291 = vmatpush.xpose.msra.mxu0 0.0
    %292 = vmatpush.xpose.msra.mxu0 0.0
    %293 = vmatpush.xpose.msra.mxu0 0.0
    %294 = vmatpush.xpose.msra.mxu0 %v278
    %295 = vmatpush.xpose.msra.mxu0 %v276
    %296 = vmatmul.f32.gmra.mxu0 %v272
    %v297 = vpop.f32.mrf.mxu0
    %v298 = vadd.f32 0.0, %v297
    %299 = vmatmul.f32.gmra.mxu0 %v274
    %v300 = vpop.f32.mrf.mxu0
    %v301 = vadd.f32 0.0, %v300
    %302 = vdwg.mxu0
    %v303 = vmul.f32 %v298, 0.35355338
    %v304 = vmul.f32 %v301, 0.35355338
    %v305 = vadd.f32 %v303, %v122
    %v306 = vadd.f32 %v304, %v123
    %v307 = vsel %vm206, %v305, -inf
    %308 = vmax.xlane.f32.xlu0 %v307
    %v309 = vpop.xlane.xlu0 %308
    %v310 = vsel %vm206, %v306, -inf
    %311 = vmax.xlane.f32.xlu0 %v310
    %v312 = vpop.xlane.xlu0 %311
    %v313 = vsub.f32 %v305, %v309
    %v314 = vsub.f32 %v306, %v312
    %v315 = vmul.f32 %v313, 1.442695
    %v316 = vpow.pop %v315
    %v317 = vmul.f32 %v314, 1.442695
    %v318 = vpow.pop %v317
    %v319 = vsel %vm206, %v316, 0.0
    %320 = vadd.xlane.f32.xlu0 %v319
    %v321 = vpop.xlane.xlu0 %320
    %v322 = vsel %vm206, %v318, 0.0
    %323 = vadd.xlane.f32.xlu0 %v322
    %v324 = vpop.xlane.xlu0 %323
    %v325 = vrcp.pop %v321
    %v326 = vrcp.pop %v324
    %v327 = vmul.f32 %v316, %v325
    %v328 = vmul.f32 %v318, %v326
    %329 = vrot.lane.b32.xlu0 %v159, 56
    %v330 = vpop.permute.xlu0 %329
    %331 = vrot.lane.b32.xlu0 %v162, 56
    %v332 = vpop.permute.xlu0 %331
    %v336 = vsel %vm206, %v327, 0
    %v339 = vsel %vm206, %v328, 0
    %341 = vmatpush.msra.mxu0 0.0
    %342 = vmatpush.msra.mxu0 0.0
    %343 = vmatpush.msra.mxu0 0.0
    %344 = vmatpush.msra.mxu0 0.0
    %345 = vmatpush.msra.mxu0 0.0
    %346 = vmatpush.msra.mxu0 0.0
    %347 = vmatpush.msra.mxu0 0.0
    %348 = vmatpush.msra.mxu0 0.0
    %349 = vmatpush.msra.mxu0 0.0
    %350 = vmatpush.msra.mxu0 0.0
    %351 = vmatpush.msra.mxu0 0.0
    %352 = vmatpush.msra.mxu0 0.0
    %353 = vmatpush.msra.mxu0 0.0
    %354 = vmatpush.msra.mxu0 0.0
    %355 = vmatpush.msra.mxu0 %v332
    %356 = vmatpush.msra.mxu0 %v330
    %357 = vmatmul.f32.gmra.mxu0 %v336
    %v358 = vpop.f32.mrf.mxu0
    %v359 = vadd.f32 0.0, %v358
    %360 = vmatmul.f32.gmra.mxu0 %v339
    %v361 = vpop.f32.mrf.mxu0
    %v362 = vadd.f32 0.0, %v361
    %363 = vdwg.mxu0
    %364 = vrot.lane.b32.xlu0 %v159, 112
    %v365 = vpop.permute.xlu0 %364
    %366 = vrot.lane.b32.xlu0 %v162, 112
    %v367 = vpop.permute.xlu0 %366
    %368 = vrot.lane.b32.xlu0 %v159, 80
    %v369 = vpop.permute.xlu0 %368
    %370 = vrot.lane.b32.xlu0 %v162, 80
    %v371 = vpop.permute.xlu0 %370
    %v372 = vsel %vm170, %v365, 0
    %v374 = vsel %vm170, %v367, 0
    %v376 = vsel %vm170, %v369, 0
    %v378 = vsel %vm170, %v371, 0
    %380 = vmatpush.xpose.msra.mxu0 0.0
    %381 = vmatpush.xpose.msra.mxu0 0.0
    %382 = vmatpush.xpose.msra.mxu0 0.0
    %383 = vmatpush.xpose.msra.mxu0 0.0
    %384 = vmatpush.xpose.msra.mxu0 0.0
    %385 = vmatpush.xpose.msra.mxu0 0.0
    %386 = vmatpush.xpose.msra.mxu0 0.0
    %387 = vmatpush.xpose.msra.mxu0 0.0
    %388 = vmatpush.xpose.msra.mxu0 0.0
    %389 = vmatpush.xpose.msra.mxu0 0.0
    %390 = vmatpush.xpose.msra.mxu0 0.0
    %391 = vmatpush.xpose.msra.mxu0 0.0
    %392 = vmatpush.xpose.msra.mxu0 0.0
    %393 = vmatpush.xpose.msra.mxu0 0.0
    %394 = vmatpush.xpose.msra.mxu0 %v378
    %395 = vmatpush.xpose.msra.mxu0 %v376
    %396 = vmatmul.f32.gmra.mxu0 %v372
    %v397 = vpop.f32.mrf.mxu0
    %v398 = vadd.f32 0.0, %v397
    %399 = vmatmul.f32.gmra.mxu0 %v374
    %v400 = vpop.f32.mrf.mxu0
    %v401 = vadd.f32 0.0, %v400
    %402 = vdwg.mxu0
    %v403 = vmul.f32 %v398, 0.35355338
    %v404 = vmul.f32 %v401, 0.35355338
    %v405 = vadd.f32 %v403, %v122
    %v406 = vadd.f32 %v404, %v123
    %v407 = vsel %vm206, %v405, -inf
    %408 = vmax.xlane.f32.xlu0 %v407
    %v409 = vpop.xlane.xlu0 %408
    %v410 = vsel %vm206, %v406, -inf
    %411 = vmax.xlane.f32.xlu0 %v410
    %v412 = vpop.xlane.xlu0 %411
    %v413 = vsub.f32 %v405, %v409
    %v414 = vsub.f32 %v406, %v412
    %v415 = vmul.f32 %v413, 1.442695
    %v416 = vpow.pop %v415
    %v417 = vmul.f32 %v414, 1.442695
    %v418 = vpow.pop %v417
    %v419 = vsel %vm206, %v416, 0.0
    %420 = vadd.xlane.f32.xlu0 %v419
    %v421 = vpop.xlane.xlu0 %420
    %v422 = vsel %vm206, %v418, 0.0
    %423 = vadd.xlane.f32.xlu0 %v422
    %v424 = vpop.xlane.xlu0 %423
    %v425 = vrcp.pop %v421
    %v426 = vrcp.pop %v424
    %v427 = vmul.f32 %v416, %v425
    %v428 = vmul.f32 %v418, %v426
    %429 = vrot.lane.b32.xlu0 %v159, 48
    %v430 = vpop.permute.xlu0 %429
    %431 = vrot.lane.b32.xlu0 %v162, 48
    %v432 = vpop.permute.xlu0 %431
    %v436 = vsel %vm206, %v427, 0
    %v439 = vsel %vm206, %v428, 0
    %441 = vmatpush.msra.mxu0 0.0
    %442 = vmatpush.msra.mxu0 0.0
    %443 = vmatpush.msra.mxu0 0.0
    %444 = vmatpush.msra.mxu0 0.0
    %445 = vmatpush.msra.mxu0 0.0
    %446 = vmatpush.msra.mxu0 0.0
    %447 = vmatpush.msra.mxu0 0.0
    %448 = vmatpush.msra.mxu0 0.0
    %449 = vmatpush.msra.mxu0 0.0
    %450 = vmatpush.msra.mxu0 0.0
    %451 = vmatpush.msra.mxu0 0.0
    %452 = vmatpush.msra.mxu0 0.0
    %453 = vmatpush.msra.mxu0 0.0
    %454 = vmatpush.msra.mxu0 0.0
    %455 = vmatpush.msra.mxu0 %v432
    %456 = vmatpush.msra.mxu0 %v430
    %457 = vmatmul.f32.gmra.mxu0 %v436
    %v458 = vpop.f32.mrf.mxu0
    %v459 = vadd.f32 0.0, %v458
    %460 = vmatmul.f32.gmra.mxu0 %v439
    %v461 = vpop.f32.mrf.mxu0
    %v462 = vadd.f32 0.0, %v461
    %463 = vdwg.mxu0
    %464 = vrot.lane.b32.xlu0 %v159, 104
    %v465 = vpop.permute.xlu0 %464
    %466 = vrot.lane.b32.xlu0 %v162, 104
    %v467 = vpop.permute.xlu0 %466
    %468 = vrot.lane.b32.xlu0 %v159, 72
    %v469 = vpop.permute.xlu0 %468
    %470 = vrot.lane.b32.xlu0 %v162, 72
    %v471 = vpop.permute.xlu0 %470
    %v472 = vsel %vm170, %v465, 0
    %v474 = vsel %vm170, %v467, 0
    %v476 = vsel %vm170, %v469, 0
    %v478 = vsel %vm170, %v471, 0
    %480 = vmatpush.xpose.msra.mxu0 0.0
    %481 = vmatpush.xpose.msra.mxu0 0.0
    %482 = vmatpush.xpose.msra.mxu0 0.0
    %483 = vmatpush.xpose.msra.mxu0 0.0
    %484 = vmatpush.xpose.msra.mxu0 0.0
    %485 = vmatpush.xpose.msra.mxu0 0.0
    %486 = vmatpush.xpose.msra.mxu0 0.0
    %487 = vmatpush.xpose.msra.mxu0 0.0
    %488 = vmatpush.xpose.msra.mxu0 0.0
    %489 = vmatpush.xpose.msra.mxu0 0.0
    %490 = vmatpush.xpose.msra.mxu0 0.0
    %491 = vmatpush.xpose.msra.mxu0 0.0
    %492 = vmatpush.xpose.msra.mxu0 0.0
    %493 = vmatpush.xpose.msra.mxu0 0.0
    %494 = vmatpush.xpose.msra.mxu0 %v478
    %495 = vmatpush.xpose.msra.mxu0 %v476
    %496 = vmatmul.f32.gmra.mxu0 %v472
    %v497 = vpop.f32.mrf.mxu0
    %v498 = vadd.f32 0.0, %v497
    %499 = vmatmul.f32.gmra.mxu0 %v474
    %v500 = vpop.f32.mrf.mxu0
    %v501 = vadd.f32 0.0, %v500
    %502 = vdwg.mxu0
    %v503 = vmul.f32 %v498, 0.35355338
    %v504 = vmul.f32 %v501, 0.35355338
    %v505 = vadd.f32 %v503, %v122
    %v506 = vadd.f32 %v504, %v123
    %v507 = vsel %vm206, %v505, -inf
    %508 = vmax.xlane.f32.xlu0 %v507
    %v509 = vpop.xlane.xlu0 %508
    %v510 = vsel %vm206, %v506, -inf
    %511 = vmax.xlane.f32.xlu0 %v510
    %v512 = vpop.xlane.xlu0 %511
    %v513 = vsub.f32 %v505, %v509
    %v514 = vsub.f32 %v506, %v512
    %v515 = vmul.f32 %v513, 1.442695
    %v516 = vpow.pop %v515
    %v517 = vmul.f32 %v514, 1.442695
    %v518 = vpow.pop %v517
    %v519 = vsel %vm206, %v516, 0.0
    %520 = vadd.xlane.f32.xlu0 %v519
    %v521 = vpop.xlane.xlu0 %520
    %v522 = vsel %vm206, %v518, 0.0
    %523 = vadd.xlane.f32.xlu0 %v522
    %v524 = vpop.xlane.xlu0 %523
    %v525 = vrcp.pop %v521
    %v526 = vrcp.pop %v524
    %v527 = vmul.f32 %v516, %v525
    %v528 = vmul.f32 %v518, %v526
    %529 = vrot.lane.b32.xlu0 %v159, 40
    %v530 = vpop.permute.xlu0 %529
    %531 = vrot.lane.b32.xlu0 %v162, 40
    %v532 = vpop.permute.xlu0 %531
    %v536 = vsel %vm206, %v527, 0
    %v539 = vsel %vm206, %v528, 0
    %541 = vmatpush.msra.mxu0 0.0
    %542 = vmatpush.msra.mxu0 0.0
    %543 = vmatpush.msra.mxu0 0.0
    %544 = vmatpush.msra.mxu0 0.0
    %545 = vmatpush.msra.mxu0 0.0
    %546 = vmatpush.msra.mxu0 0.0
    %547 = vmatpush.msra.mxu0 0.0
    %548 = vmatpush.msra.mxu0 0.0
    %549 = vmatpush.msra.mxu0 0.0
    %550 = vmatpush.msra.mxu0 0.0
    %551 = vmatpush.msra.mxu0 0.0
    %552 = vmatpush.msra.mxu0 0.0
    %553 = vmatpush.msra.mxu0 0.0
    %554 = vmatpush.msra.mxu0 0.0
    %555 = vmatpush.msra.mxu0 %v532
    %556 = vmatpush.msra.mxu0 %v530
    %557 = vmatmul.f32.gmra.mxu0 %v536
    %v558 = vpop.f32.mrf.mxu0
    %v559 = vadd.f32 0.0, %v558
    %560 = vmatmul.f32.gmra.mxu0 %v539
    %v561 = vpop.f32.mrf.mxu0
    %v562 = vadd.f32 0.0, %v561
    %563 = vdwg.mxu0
    %566 = vrot.lane.b32.xlu0 %v359, 8
    %v567 = vpop.permute.xlu0 %566
    %568 = vrot.lane.b32.xlu0 %v362, 8
    %v569 = vpop.permute.xlu0 %568
    %574 = vrot.lane.b32.xlu0 %v459, 16
    %v575 = vpop.permute.xlu0 %574
    %576 = vrot.lane.b32.xlu0 %v462, 16
    %v577 = vpop.permute.xlu0 %576
    %582 = vrot.lane.b32.xlu0 %v559, 24
    %v583 = vpop.permute.xlu0 %582
    %584 = vrot.lane.b32.xlu0 %v562, 24
    %v585 = vpop.permute.xlu0 %584
    %v588 = vsel %vm170, %v259, %v567
    %v589 = vsel %vm170, %v262, %v569
    %v590 = vsel %vm206, %v588, %v575
    %v591 = vsel %vm206, %v589, %v577
    %vm592 = vcmask 195584
    %v593 = vsel %vm592, %v590, %v583
    %v594 = vsel %vm592, %v591, %v585
    %v595 = vld [vmem:[%s6] sm:$0xff]
    %v596 = vld [vmem:[%s6 + $0x8] sm:$0xff]
    %v597 = vld [vmem:[%s6 + $0x10] sm:$0xff]
    %v598 = vld [vmem:[%s6 + $0x18] sm:$0xff]
    %v599 = vld [vmem:[%s7] sm:$0x1]
    %v601 = vperm.slane %v599, 0
    %v604 = vsel %vm134, %v593, 0
    %v607 = vsel %vm134, %v594, 0
    %609 = vmatpush.msra.mxu0 0.0
    %610 = vmatpush.msra.mxu0 0.0
    %611 = vmatpush.msra.mxu0 0.0
    %612 = vmatpush.msra.mxu0 0.0
    %613 = vmatpush.msra.mxu0 0.0
    %614 = vmatpush.msra.mxu0 0.0
    %615 = vmatpush.msra.mxu0 0.0
    %616 = vmatpush.msra.mxu0 0.0
    %617 = vmatpush.msra.mxu0 0.0
    %618 = vmatpush.msra.mxu0 0.0
    %619 = vmatpush.msra.mxu0 0.0
    %620 = vmatpush.msra.mxu0 0.0
    %621 = vmatpush.msra.mxu0 %v598
    %622 = vmatpush.msra.mxu0 %v597
    %623 = vmatpush.msra.mxu0 %v596
    %624 = vmatpush.msra.mxu0 %v595
    %625 = vmatmul.f32.gmra.mxu0 %v604
    %v626 = vpop.f32.mrf.mxu0
    %v627 = vadd.f32 %v601, %v626
    %628 = vmatmul.f32.gmra.mxu0 %v607
    %v629 = vpop.f32.mrf.mxu0
    %v630 = vadd.f32 %v601, %v629
    %631 = vdwg.mxu0
    %v632 = vadd.f32 %v118, %v627
    %v633 = vadd.f32 %v119, %v630
    %v634 = vsel %vm134, %v632, 0.0
    %635 = vadd.xlane.f32.xlu0 %v634
    %v636 = vpop.xlane.xlu0 %635
    %v637 = vsel %vm134, %v633, 0.0
    %638 = vadd.xlane.f32.xlu0 %v637
    %v639 = vpop.xlane.xlu0 %638
    %v640 = vrcp.pop 32.0
    %v641 = vmul.f32 32.0, %v640
    %v642 = vsub.f32 1.0, %v641
    %v643 = vmul.f32 %v640, %v642
    %v644 = vadd.f32 %v640, %v643
    %vm645 = vweird.f32 %v640
    %v646 = vsel %vm645, %v640, %v644
    %v647 = vmul.f32 %v636, %v646
    %v648 = vmul.f32 %v639, %v646
    %v649 = vsub.f32 %v632, %v647
    %v650 = vsub.f32 %v633, %v648
    %v651 = vmul.f32 %v649, %v649
    %v652 = vmul.f32 %v650, %v650
    %v653 = vsel %vm134, %v651, 0.0
    %654 = vadd.xlane.f32.xlu0 %v653
    %v655 = vpop.xlane.xlu0 %654
    %v656 = vsel %vm134, %v652, 0.0
    %657 = vadd.xlane.f32.xlu0 %v656
    %v658 = vpop.xlane.xlu0 %657
    %v659 = vmul.f32 %v655, %v646
    %v660 = vmul.f32 %v658, %v646
    %v661 = vadd.f32 %v659, 1e-05
    %v662 = vadd.f32 %v660, 1e-05
    %v663 = vrsqrt.pop %v661
    %v664 = vmul.f32 %v663, %v661
    %v665 = vmul.f32 %v664, %v663
    %v666 = vmul.f32 0.5, %v665
    %v667 = vsub.f32 1.5, %v666
    %v668 = vmul.f32 %v663, %v667
    %vm669 = vweird.f32 %v661
    %vm670 = vweird.f32 %v663
    %vm671 = vmor %vm669, %vm670
    %v672 = vsel %vm671, %v663, %v668
    %v673 = vrsqrt.pop %v662
    %v674 = vmul.f32 %v673, %v662
    %v675 = vmul.f32 %v674, %v673
    %v676 = vmul.f32 0.5, %v675
    %v677 = vsub.f32 1.5, %v676
    %v678 = vmul.f32 %v673, %v677
    %vm679 = vweird.f32 %v662
    %vm680 = vweird.f32 %v673
    %vm681 = vmor %vm679, %vm680
    %v682 = vsel %vm681, %v673, %v678
    %v683 = vmul.f32 %v649, %v672
    %v684 = vmul.f32 %v650, %v682
    %v685 = vld [vmem:[%s18] sm:$0x1]
    %v687 = vperm.slane %v685, 0
    %v689 = vmul.f32 %v683, %v687
    %v690 = vmul.f32 %v684, %v687
    %v691 = vld [vmem:[%s19] sm:$0x1]
    %v693 = vperm.slane %v691, 0
    %v695 = vadd.f32 %v689, %v693
    %v696 = vadd.f32 %v690, %v693
    %v697 = vld [vmem:[%s8] sm:$0xff]
    %v698 = vld [vmem:[%s8 + $0x8] sm:$0xff]
    %v699 = vld [vmem:[%s8 + $0x10] sm:$0xff]
    %v700 = vld [vmem:[%s8 + $0x18] sm:$0xff]
    %v701 = vld [vmem:[%s9] sm:$0x1]
    %v703 = vperm.slane %v701, 0
    %v706 = vsel %vm134, %v695, 0
    %v709 = vsel %vm134, %v696, 0
    %711 = vmatpush.msra.mxu0 0.0
    %712 = vmatpush.msra.mxu0 0.0
    %713 = vmatpush.msra.mxu0 0.0
    %714 = vmatpush.msra.mxu0 0.0
    %715 = vmatpush.msra.mxu0 0.0
    %716 = vmatpush.msra.mxu0 0.0
    %717 = vmatpush.msra.mxu0 0.0
    %718 = vmatpush.msra.mxu0 0.0
    %719 = vmatpush.msra.mxu0 0.0
    %720 = vmatpush.msra.mxu0 0.0
    %721 = vmatpush.msra.mxu0 0.0
    %722 = vmatpush.msra.mxu0 0.0
    %723 = vmatpush.msra.mxu0 %v700
    %724 = vmatpush.msra.mxu0 %v699
    %725 = vmatpush.msra.mxu0 %v698
    %726 = vmatpush.msra.mxu0 %v697
    %727 = vmatmul.f32.gmra.mxu0 %v706
    %v728 = vpop.f32.mrf.mxu0
    %v729 = vadd.f32 %v703, %v728
    %730 = vmatmul.f32.gmra.mxu0 %v709
    %v731 = vpop.f32.mrf.mxu0
    %v732 = vadd.f32 %v703, %v731
    %733 = vdwg.mxu0
    %v734 = vld [vmem:[%s10] sm:$0xff]
    %v735 = vld [vmem:[%s10 + $0x8] sm:$0xff]
    %v736 = vld [vmem:[%s10 + $0x10] sm:$0xff]
    %v737 = vld [vmem:[%s10 + $0x18] sm:$0xff]
    %v738 = vld [vmem:[%s11] sm:$0x1]
    %v740 = vperm.slane %v738, 0
    %v743 = vsel %vm134, %v120, 0
    %v746 = vsel %vm134, %v121, 0
    %748 = vmatpush.msra.mxu0 0.0
    %749 = vmatpush.msra.mxu0 0.0
    %750 = vmatpush.msra.mxu0 0.0
    %751 = vmatpush.msra.mxu0 0.0
    %752 = vmatpush.msra.mxu0 0.0
    %753 = vmatpush.msra.mxu0 0.0
    %754 = vmatpush.msra.mxu0 0.0
    %755 = vmatpush.msra.mxu0 0.0
    %756 = vmatpush.msra.mxu0 0.0
    %757 = vmatpush.msra.mxu0 0.0
    %758 = vmatpush.msra.mxu0 0.0
    %759 = vmatpush.msra.mxu0 0.0
    %760 = vmatpush.msra.mxu0 %v737
    %761 = vmatpush.msra.mxu0 %v736
    %762 = vmatpush.msra.mxu0 %v735
    %763 = vmatpush.msra.mxu0 %v734
    %764 = vmatmul.f32.gmra.mxu0 %v743
    %v765 = vpop.f32.mrf.mxu0
    %v766 = vadd.f32 %v740, %v765
    %767 = vmatmul.f32.gmra.mxu0 %v746
    %v768 = vpop.f32.mrf.mxu0
    %v769 = vadd.f32 %v740, %v768
    %770 = vdwg.mxu0
    %v772 = vsel %vm170, %v729, 0
    %v775 = vsel %vm170, %v732, 0
    %v778 = vsel %vm170, %v766, 0
    %v781 = vsel %vm170, %v769, 0
    %783 = vmatpush.xpose.msra.mxu0 0.0
    %784 = vmatpush.xpose.msra.mxu0 0.0
    %785 = vmatpush.xpose.msra.mxu0 0.0
    %786 = vmatpush.xpose.msra.mxu0 0.0
    %787 = vmatpush.xpose.msra.mxu0 0.0
    %788 = vmatpush.xpose.msra.mxu0 0.0
    %789 = vmatpush.xpose.msra.mxu0 0.0
    %790 = vmatpush.xpose.msra.mxu0 0.0
    %791 = vmatpush.xpose.msra.mxu0 0.0
    %792 = vmatpush.xpose.msra.mxu0 0.0
    %793 = vmatpush.xpose.msra.mxu0 0.0
    %794 = vmatpush.xpose.msra.mxu0 0.0
    %795 = vmatpush.xpose.msra.mxu0 0.0
    %796 = vmatpush.xpose.msra.mxu0 0.0
    %797 = vmatpush.xpose.msra.mxu0 %v781
    %798 = vmatpush.xpose.msra.mxu0 %v778
    %799 = vmatmul.f32.gmra.mxu0 %v772
    %v800 = vpop.f32.mrf.mxu0
    %v801 = vadd.f32 0.0, %v800
    %802 = vmatmul.f32.gmra.mxu0 %v775
    %v803 = vpop.f32.mrf.mxu0
    %v804 = vadd.f32 0.0, %v803
    %805 = vdwg.mxu0
    %v806 = vmul.f32 %v801, 0.35355338
    %v807 = vmul.f32 %v804, 0.35355338
    %v808 = vadd.f32 %v806, %v124
    %v809 = vadd.f32 %v807, %v125
    %v810 = vsel %vm206, %v808, -inf
    %811 = vmax.xlane.f32.xlu0 %v810
    %v812 = vpop.xlane.xlu0 %811
    %v813 = vsel %vm206, %v809, -inf
    %814 = vmax.xlane.f32.xlu0 %v813
    %v815 = vpop.xlane.xlu0 %814
    %v816 = vsub.f32 %v808, %v812
    %v817 = vsub.f32 %v809, %v815
    %v818 = vmul.f32 %v816, 1.442695
    %v819 = vpow.pop %v818
    %v820 = vmul.f32 %v817, 1.442695
    %v821 = vpow.pop %v820
    %v822 = vsel %vm206, %v819, 0.0
    %823 = vadd.xlane.f32.xlu0 %v822
    %v824 = vpop.xlane.xlu0 %823
    %v825 = vsel %vm206, %v821, 0.0
    %826 = vadd.xlane.f32.xlu0 %v825
    %v827 = vpop.xlane.xlu0 %826
    %v828 = vrcp.pop %v824
    %v829 = vrcp.pop %v827
    %v830 = vmul.f32 %v819, %v828
    %v831 = vmul.f32 %v821, %v829
    %832 = vrot.lane.b32.xlu0 %v766, 96
    %v833 = vpop.permute.xlu0 %832
    %834 = vrot.lane.b32.xlu0 %v769, 96
    %v835 = vpop.permute.xlu0 %834
    %v839 = vsel %vm206, %v830, 0
    %v842 = vsel %vm206, %v831, 0
    %844 = vmatpush.msra.mxu0 0.0
    %845 = vmatpush.msra.mxu0 0.0
    %846 = vmatpush.msra.mxu0 0.0
    %847 = vmatpush.msra.mxu0 0.0
    %848 = vmatpush.msra.mxu0 0.0
    %849 = vmatpush.msra.mxu0 0.0
    %850 = vmatpush.msra.mxu0 0.0
    %851 = vmatpush.msra.mxu0 0.0
    %852 = vmatpush.msra.mxu0 0.0
    %853 = vmatpush.msra.mxu0 0.0
    %854 = vmatpush.msra.mxu0 0.0
    %855 = vmatpush.msra.mxu0 0.0
    %856 = vmatpush.msra.mxu0 0.0
    %857 = vmatpush.msra.mxu0 0.0
    %858 = vmatpush.msra.mxu0 %v835
    %859 = vmatpush.msra.mxu0 %v833
    %860 = vmatmul.f32.gmra.mxu0 %v839
    %v861 = vpop.f32.mrf.mxu0
    %v862 = vadd.f32 0.0, %v861
    %863 = vmatmul.f32.gmra.mxu0 %v842
    %v864 = vpop.f32.mrf.mxu0
    %v865 = vadd.f32 0.0, %v864
    %866 = vdwg.mxu0
    %867 = vrot.lane.b32.xlu0 %v729, 120
    %v868 = vpop.permute.xlu0 %867
    %869 = vrot.lane.b32.xlu0 %v732, 120
    %v870 = vpop.permute.xlu0 %869
    %871 = vrot.lane.b32.xlu0 %v766, 120
    %v872 = vpop.permute.xlu0 %871
    %873 = vrot.lane.b32.xlu0 %v769, 120
    %v874 = vpop.permute.xlu0 %873
    %v875 = vsel %vm170, %v868, 0
    %v877 = vsel %vm170, %v870, 0
    %v879 = vsel %vm170, %v872, 0
    %v881 = vsel %vm170, %v874, 0
    %883 = vmatpush.xpose.msra.mxu0 0.0
    %884 = vmatpush.xpose.msra.mxu0 0.0
    %885 = vmatpush.xpose.msra.mxu0 0.0
    %886 = vmatpush.xpose.msra.mxu0 0.0
    %887 = vmatpush.xpose.msra.mxu0 0.0
    %888 = vmatpush.xpose.msra.mxu0 0.0
    %889 = vmatpush.xpose.msra.mxu0 0.0
    %890 = vmatpush.xpose.msra.mxu0 0.0
    %891 = vmatpush.xpose.msra.mxu0 0.0
    %892 = vmatpush.xpose.msra.mxu0 0.0
    %893 = vmatpush.xpose.msra.mxu0 0.0
    %894 = vmatpush.xpose.msra.mxu0 0.0
    %895 = vmatpush.xpose.msra.mxu0 0.0
    %896 = vmatpush.xpose.msra.mxu0 0.0
    %897 = vmatpush.xpose.msra.mxu0 %v881
    %898 = vmatpush.xpose.msra.mxu0 %v879
    %899 = vmatmul.f32.gmra.mxu0 %v875
    %v900 = vpop.f32.mrf.mxu0
    %v901 = vadd.f32 0.0, %v900
    %902 = vmatmul.f32.gmra.mxu0 %v877
    %v903 = vpop.f32.mrf.mxu0
    %v904 = vadd.f32 0.0, %v903
    %905 = vdwg.mxu0
    %v906 = vmul.f32 %v901, 0.35355338
    %v907 = vmul.f32 %v904, 0.35355338
    %v908 = vadd.f32 %v906, %v124
    %v909 = vadd.f32 %v907, %v125
    %v910 = vsel %vm206, %v908, -inf
    %911 = vmax.xlane.f32.xlu0 %v910
    %v912 = vpop.xlane.xlu0 %911
    %v913 = vsel %vm206, %v909, -inf
    %914 = vmax.xlane.f32.xlu0 %v913
    %v915 = vpop.xlane.xlu0 %914
    %v916 = vsub.f32 %v908, %v912
    %v917 = vsub.f32 %v909, %v915
    %v918 = vmul.f32 %v916, 1.442695
    %v919 = vpow.pop %v918
    %v920 = vmul.f32 %v917, 1.442695
    %v921 = vpow.pop %v920
    %v922 = vsel %vm206, %v919, 0.0
    %923 = vadd.xlane.f32.xlu0 %v922
    %v924 = vpop.xlane.xlu0 %923
    %v925 = vsel %vm206, %v921, 0.0
    %926 = vadd.xlane.f32.xlu0 %v925
    %v927 = vpop.xlane.xlu0 %926
    %v928 = vrcp.pop %v924
    %v929 = vrcp.pop %v927
    %v930 = vmul.f32 %v919, %v928
    %v931 = vmul.f32 %v921, %v929
    %932 = vrot.lane.b32.xlu0 %v766, 88
    %v933 = vpop.permute.xlu0 %932
    %934 = vrot.lane.b32.xlu0 %v769, 88
    %v935 = vpop.permute.xlu0 %934
    %v939 = vsel %vm206, %v930, 0
    %v942 = vsel %vm206, %v931, 0
    %944 = vmatpush.msra.mxu0 0.0
    %945 = vmatpush.msra.mxu0 0.0
    %946 = vmatpush.msra.mxu0 0.0
    %947 = vmatpush.msra.mxu0 0.0
    %948 = vmatpush.msra.mxu0 0.0
    %949 = vmatpush.msra.mxu0 0.0
    %950 = vmatpush.msra.mxu0 0.0
    %951 = vmatpush.msra.mxu0 0.0
    %952 = vmatpush.msra.mxu0 0.0
    %953 = vmatpush.msra.mxu0 0.0
    %954 = vmatpush.msra.mxu0 0.0
    %955 = vmatpush.msra.mxu0 0.0
    %956 = vmatpush.msra.mxu0 0.0
    %957 = vmatpush.msra.mxu0 0.0
    %958 = vmatpush.msra.mxu0 %v935
    %959 = vmatpush.msra.mxu0 %v933
    %960 = vmatmul.f32.gmra.mxu0 %v939
    %v961 = vpop.f32.mrf.mxu0
    %v962 = vadd.f32 0.0, %v961
    %963 = vmatmul.f32.gmra.mxu0 %v942
    %v964 = vpop.f32.mrf.mxu0
    %v965 = vadd.f32 0.0, %v964
    %966 = vdwg.mxu0
    %967 = vrot.lane.b32.xlu0 %v729, 112
    %v968 = vpop.permute.xlu0 %967
    %969 = vrot.lane.b32.xlu0 %v732, 112
    %v970 = vpop.permute.xlu0 %969
    %971 = vrot.lane.b32.xlu0 %v766, 112
    %v972 = vpop.permute.xlu0 %971
    %973 = vrot.lane.b32.xlu0 %v769, 112
    %v974 = vpop.permute.xlu0 %973
    %v975 = vsel %vm170, %v968, 0
    %v977 = vsel %vm170, %v970, 0
    %v979 = vsel %vm170, %v972, 0
    %v981 = vsel %vm170, %v974, 0
    %983 = vmatpush.xpose.msra.mxu0 0.0
    %984 = vmatpush.xpose.msra.mxu0 0.0
    %985 = vmatpush.xpose.msra.mxu0 0.0
    %986 = vmatpush.xpose.msra.mxu0 0.0
    %987 = vmatpush.xpose.msra.mxu0 0.0
    %988 = vmatpush.xpose.msra.mxu0 0.0
    %989 = vmatpush.xpose.msra.mxu0 0.0
    %990 = vmatpush.xpose.msra.mxu0 0.0
    %991 = vmatpush.xpose.msra.mxu0 0.0
    %992 = vmatpush.xpose.msra.mxu0 0.0
    %993 = vmatpush.xpose.msra.mxu0 0.0
    %994 = vmatpush.xpose.msra.mxu0 0.0
    %995 = vmatpush.xpose.msra.mxu0 0.0
    %996 = vmatpush.xpose.msra.mxu0 0.0
    %997 = vmatpush.xpose.msra.mxu0 %v981
    %998 = vmatpush.xpose.msra.mxu0 %v979
    %999 = vmatmul.f32.gmra.mxu0 %v975
    %v1000 = vpop.f32.mrf.mxu0
    %v1001 = vadd.f32 0.0, %v1000
    %1002 = vmatmul.f32.gmra.mxu0 %v977
    %v1003 = vpop.f32.mrf.mxu0
    %v1004 = vadd.f32 0.0, %v1003
    %1005 = vdwg.mxu0
    %v1006 = vmul.f32 %v1001, 0.35355338
    %v1007 = vmul.f32 %v1004, 0.35355338
    %v1008 = vadd.f32 %v1006, %v124
    %v1009 = vadd.f32 %v1007, %v125
    %v1010 = vsel %vm206, %v1008, -inf
    %1011 = vmax.xlane.f32.xlu0 %v1010
    %v1012 = vpop.xlane.xlu0 %1011
    %v1013 = vsel %vm206, %v1009, -inf
    %1014 = vmax.xlane.f32.xlu0 %v1013
    %v1015 = vpop.xlane.xlu0 %1014
    %v1016 = vsub.f32 %v1008, %v1012
    %v1017 = vsub.f32 %v1009, %v1015
    %v1018 = vmul.f32 %v1016, 1.442695
    %v1019 = vpow.pop %v1018
    %v1020 = vmul.f32 %v1017, 1.442695
    %v1021 = vpow.pop %v1020
    %v1022 = vsel %vm206, %v1019, 0.0
    %1023 = vadd.xlane.f32.xlu0 %v1022
    %v1024 = vpop.xlane.xlu0 %1023
    %v1025 = vsel %vm206, %v1021, 0.0
    %1026 = vadd.xlane.f32.xlu0 %v1025
    %v1027 = vpop.xlane.xlu0 %1026
    %v1028 = vrcp.pop %v1024
    %v1029 = vrcp.pop %v1027
    %v1030 = vmul.f32 %v1019, %v1028
    %v1031 = vmul.f32 %v1021, %v1029
    %1032 = vrot.lane.b32.xlu0 %v766, 80
    %v1033 = vpop.permute.xlu0 %1032
    %1034 = vrot.lane.b32.xlu0 %v769, 80
    %v1035 = vpop.permute.xlu0 %1034
    %v1039 = vsel %vm206, %v1030, 0
    %v1042 = vsel %vm206, %v1031, 0
    %1044 = vmatpush.msra.mxu0 0.0
    %1045 = vmatpush.msra.mxu0 0.0
    %1046 = vmatpush.msra.mxu0 0.0
    %1047 = vmatpush.msra.mxu0 0.0
    %1048 = vmatpush.msra.mxu0 0.0
    %1049 = vmatpush.msra.mxu0 0.0
    %1050 = vmatpush.msra.mxu0 0.0
    %1051 = vmatpush.msra.mxu0 0.0
    %1052 = vmatpush.msra.mxu0 0.0
    %1053 = vmatpush.msra.mxu0 0.0
    %1054 = vmatpush.msra.mxu0 0.0
    %1055 = vmatpush.msra.mxu0 0.0
    %1056 = vmatpush.msra.mxu0 0.0
    %1057 = vmatpush.msra.mxu0 0.0
    %1058 = vmatpush.msra.mxu0 %v1035
    %1059 = vmatpush.msra.mxu0 %v1033
    %1060 = vmatmul.f32.gmra.mxu0 %v1039
    %v1061 = vpop.f32.mrf.mxu0
    %v1062 = vadd.f32 0.0, %v1061
    %1063 = vmatmul.f32.gmra.mxu0 %v1042
    %v1064 = vpop.f32.mrf.mxu0
    %v1065 = vadd.f32 0.0, %v1064
    %1066 = vdwg.mxu0
    %1067 = vrot.lane.b32.xlu0 %v729, 104
    %v1068 = vpop.permute.xlu0 %1067
    %1069 = vrot.lane.b32.xlu0 %v732, 104
    %v1070 = vpop.permute.xlu0 %1069
    %1071 = vrot.lane.b32.xlu0 %v766, 104
    %v1072 = vpop.permute.xlu0 %1071
    %1073 = vrot.lane.b32.xlu0 %v769, 104
    %v1074 = vpop.permute.xlu0 %1073
    %v1075 = vsel %vm170, %v1068, 0
    %v1077 = vsel %vm170, %v1070, 0
    %v1079 = vsel %vm170, %v1072, 0
    %v1081 = vsel %vm170, %v1074, 0
    %1083 = vmatpush.xpose.msra.mxu0 0.0
    %1084 = vmatpush.xpose.msra.mxu0 0.0
    %1085 = vmatpush.xpose.msra.mxu0 0.0
    %1086 = vmatpush.xpose.msra.mxu0 0.0
    %1087 = vmatpush.xpose.msra.mxu0 0.0
    %1088 = vmatpush.xpose.msra.mxu0 0.0
    %1089 = vmatpush.xpose.msra.mxu0 0.0
    %1090 = vmatpush.xpose.msra.mxu0 0.0
    %1091 = vmatpush.xpose.msra.mxu0 0.0
    %1092 = vmatpush.xpose.msra.mxu0 0.0
    %1093 = vmatpush.xpose.msra.mxu0 0.0
    %1094 = vmatpush.xpose.msra.mxu0 0.0
    %1095 = vmatpush.xpose.msra.mxu0 0.0
    %1096 = vmatpush.xpose.msra.mxu0 0.0
    %1097 = vmatpush.xpose.msra.mxu0 %v1081
    %1098 = vmatpush.xpose.msra.mxu0 %v1079
    %1099 = vmatmul.f32.gmra.mxu0 %v1075
    %v1100 = vpop.f32.mrf.mxu0
    %v1101 = vadd.f32 0.0, %v1100
    %1102 = vmatmul.f32.gmra.mxu0 %v1077
    %v1103 = vpop.f32.mrf.mxu0
    %v1104 = vadd.f32 0.0, %v1103
    %1105 = vdwg.mxu0
    %v1106 = vmul.f32 %v1101, 0.35355338
    %v1107 = vmul.f32 %v1104, 0.35355338
    %v1108 = vadd.f32 %v1106, %v124
    %v1109 = vadd.f32 %v1107, %v125
    %v1110 = vsel %vm206, %v1108, -inf
    %1111 = vmax.xlane.f32.xlu0 %v1110
    %v1112 = vpop.xlane.xlu0 %1111
    %v1113 = vsel %vm206, %v1109, -inf
    %1114 = vmax.xlane.f32.xlu0 %v1113
    %v1115 = vpop.xlane.xlu0 %1114
    %v1116 = vsub.f32 %v1108, %v1112
    %v1117 = vsub.f32 %v1109, %v1115
    %v1118 = vmul.f32 %v1116, 1.442695
    %v1119 = vpow.pop %v1118
    %v1120 = vmul.f32 %v1117, 1.442695
    %v1121 = vpow.pop %v1120
    %v1122 = vsel %vm206, %v1119, 0.0
    %1123 = vadd.xlane.f32.xlu0 %v1122
    %v1124 = vpop.xlane.xlu0 %1123
    %v1125 = vsel %vm206, %v1121, 0.0
    %1126 = vadd.xlane.f32.xlu0 %v1125
    %v1127 = vpop.xlane.xlu0 %1126
    %v1128 = vrcp.pop %v1124
    %v1129 = vrcp.pop %v1127
    %v1130 = vmul.f32 %v1119, %v1128
    %v1131 = vmul.f32 %v1121, %v1129
    %1132 = vrot.lane.b32.xlu0 %v766, 72
    %v1133 = vpop.permute.xlu0 %1132
    %1134 = vrot.lane.b32.xlu0 %v769, 72
    %v1135 = vpop.permute.xlu0 %1134
    %v1139 = vsel %vm206, %v1130, 0
    %v1142 = vsel %vm206, %v1131, 0
    %1144 = vmatpush.msra.mxu0 0.0
    %1145 = vmatpush.msra.mxu0 0.0
    %1146 = vmatpush.msra.mxu0 0.0
    %1147 = vmatpush.msra.mxu0 0.0
    %1148 = vmatpush.msra.mxu0 0.0
    %1149 = vmatpush.msra.mxu0 0.0
    %1150 = vmatpush.msra.mxu0 0.0
    %1151 = vmatpush.msra.mxu0 0.0
    %1152 = vmatpush.msra.mxu0 0.0
    %1153 = vmatpush.msra.mxu0 0.0
    %1154 = vmatpush.msra.mxu0 0.0
    %1155 = vmatpush.msra.mxu0 0.0
    %1156 = vmatpush.msra.mxu0 0.0
    %1157 = vmatpush.msra.mxu0 0.0
    %1158 = vmatpush.msra.mxu0 %v1135
    %1159 = vmatpush.msra.mxu0 %v1133
    %1160 = vmatmul.f32.gmra.mxu0 %v1139
    %v1161 = vpop.f32.mrf.mxu0
    %v1162 = vadd.f32 0.0, %v1161
    %1163 = vmatmul.f32.gmra.mxu0 %v1142
    %v1164 = vpop.f32.mrf.mxu0
    %v1165 = vadd.f32 0.0, %v1164
    %1166 = vdwg.mxu0
    %1169 = vrot.lane.b32.xlu0 %v962, 8
    %v1170 = vpop.permute.xlu0 %1169
    %1171 = vrot.lane.b32.xlu0 %v965, 8
    %v1172 = vpop.permute.xlu0 %1171
    %1177 = vrot.lane.b32.xlu0 %v1062, 16
    %v1178 = vpop.permute.xlu0 %1177
    %1179 = vrot.lane.b32.xlu0 %v1065, 16
    %v1180 = vpop.permute.xlu0 %1179
    %1185 = vrot.lane.b32.xlu0 %v1162, 24
    %v1186 = vpop.permute.xlu0 %1185
    %1187 = vrot.lane.b32.xlu0 %v1165, 24
    %v1188 = vpop.permute.xlu0 %1187
    %v1191 = vsel %vm170, %v862, %v1170
    %v1192 = vsel %vm170, %v865, %v1172
    %v1193 = vsel %vm206, %v1191, %v1178
    %v1194 = vsel %vm206, %v1192, %v1180
    %v1195 = vsel %vm592, %v1193, %v1186
    %v1196 = vsel %vm592, %v1194, %v1188
    %v1197 = vld [vmem:[%s12] sm:$0xff]
    %v1198 = vld [vmem:[%s12 + $0x8] sm:$0xff]
    %v1199 = vld [vmem:[%s12 + $0x10] sm:$0xff]
    %v1200 = vld [vmem:[%s12 + $0x18] sm:$0xff]
    %v1201 = vld [vmem:[%s13] sm:$0x1]
    %v1203 = vperm.slane %v1201, 0
    %v1206 = vsel %vm134, %v1195, 0
    %v1209 = vsel %vm134, %v1196, 0
    %1211 = vmatpush.msra.mxu0 0.0
    %1212 = vmatpush.msra.mxu0 0.0
    %1213 = vmatpush.msra.mxu0 0.0
    %1214 = vmatpush.msra.mxu0 0.0
    %1215 = vmatpush.msra.mxu0 0.0
    %1216 = vmatpush.msra.mxu0 0.0
    %1217 = vmatpush.msra.mxu0 0.0
    %1218 = vmatpush.msra.mxu0 0.0
    %1219 = vmatpush.msra.mxu0 0.0
    %1220 = vmatpush.msra.mxu0 0.0
    %1221 = vmatpush.msra.mxu0 0.0
    %1222 = vmatpush.msra.mxu0 0.0
    %1223 = vmatpush.msra.mxu0 %v1200
    %1224 = vmatpush.msra.mxu0 %v1199
    %1225 = vmatpush.msra.mxu0 %v1198
    %1226 = vmatpush.msra.mxu0 %v1197
    %1227 = vmatmul.f32.gmra.mxu0 %v1206
    %v1228 = vpop.f32.mrf.mxu0
    %v1229 = vadd.f32 %v1203, %v1228
    %1230 = vmatmul.f32.gmra.mxu0 %v1209
    %v1231 = vpop.f32.mrf.mxu0
    %v1232 = vadd.f32 %v1203, %v1231
    %1233 = vdwg.mxu0
    %v1234 = vadd.f32 %v695, %v1229
    %v1235 = vadd.f32 %v696, %v1232
    %v1236 = vsel %vm134, %v1234, 0.0
    %1237 = vadd.xlane.f32.xlu0 %v1236
    %v1238 = vpop.xlane.xlu0 %1237
    %v1239 = vsel %vm134, %v1235, 0.0
    %1240 = vadd.xlane.f32.xlu0 %v1239
    %v1241 = vpop.xlane.xlu0 %1240
    %v1242 = vmul.f32 %v1238, %v646
    %v1243 = vmul.f32 %v1241, %v646
    %v1244 = vsub.f32 %v1234, %v1242
    %v1245 = vsub.f32 %v1235, %v1243
    %v1246 = vmul.f32 %v1244, %v1244
    %v1247 = vmul.f32 %v1245, %v1245
    %v1248 = vsel %vm134, %v1246, 0.0
    %1249 = vadd.xlane.f32.xlu0 %v1248
    %v1250 = vpop.xlane.xlu0 %1249
    %v1251 = vsel %vm134, %v1247, 0.0
    %1252 = vadd.xlane.f32.xlu0 %v1251
    %v1253 = vpop.xlane.xlu0 %1252
    %v1254 = vmul.f32 %v1250, %v646
    %v1255 = vmul.f32 %v1253, %v646
    %v1256 = vadd.f32 %v1254, 1e-05
    %v1257 = vadd.f32 %v1255, 1e-05
    %v1258 = vrsqrt.pop %v1256
    %v1259 = vmul.f32 %v1258, %v1256
    %v1260 = vmul.f32 %v1259, %v1258
    %v1261 = vmul.f32 0.5, %v1260
    %v1262 = vsub.f32 1.5, %v1261
    %v1263 = vmul.f32 %v1258, %v1262
    %vm1264 = vweird.f32 %v1256
    %vm1265 = vweird.f32 %v1258
    %vm1266 = vmor %vm1264, %vm1265
    %v1267 = vsel %vm1266, %v1258, %v1263
    %v1268 = vrsqrt.pop %v1257
    %v1269 = vmul.f32 %v1268, %v1257
    %v1270 = vmul.f32 %v1269, %v1268
    %v1271 = vmul.f32 0.5, %v1270
    %v1272 = vsub.f32 1.5, %v1271
    %v1273 = vmul.f32 %v1268, %v1272
    %vm1274 = vweird.f32 %v1257
    %vm1275 = vweird.f32 %v1268
    %vm1276 = vmor %vm1274, %vm1275
    %v1277 = vsel %vm1276, %v1268, %v1273
    %v1278 = vmul.f32 %v1244, %v1267
    %v1279 = vmul.f32 %v1245, %v1277
    %v1280 = vld [vmem:[%s20] sm:$0x1]
    %v1282 = vperm.slane %v1280, 0
    %v1284 = vmul.f32 %v1278, %v1282
    %v1285 = vmul.f32 %v1279, %v1282
    %v1286 = vld [vmem:[#allocation2] sm:$0x1]
    %v1288 = vperm.slane %v1286, 0
    %v1290 = vadd.f32 %v1284, %v1288
    %v1291 = vadd.f32 %v1285, %v1288
    %v1292 = vld [vmem:[%s14] sm:$0xff]
    %v1293 = vld [vmem:[%s14 + $0x8] sm:$0xff]
    %v1294 = vld [vmem:[%s14 + $0x10] sm:$0xff]
    %v1295 = vld [vmem:[%s14 + $0x18] sm:$0xff]
    %v1296 = vld [vmem:[%s15] sm:$0x1]
    %v1298 = vperm.slane %v1296, 0
    %v1301 = vsel %vm134, %v1290, 0
    %v1304 = vsel %vm134, %v1291, 0
    %1306 = vmatpush.msra.mxu0 0.0
    %1307 = vmatpush.msra.mxu0 0.0
    %1308 = vmatpush.msra.mxu0 0.0
    %1309 = vmatpush.msra.mxu0 0.0
    %1310 = vmatpush.msra.mxu0 0.0
    %1311 = vmatpush.msra.mxu0 0.0
    %1312 = vmatpush.msra.mxu0 0.0
    %1313 = vmatpush.msra.mxu0 0.0
    %1314 = vmatpush.msra.mxu0 0.0
    %1315 = vmatpush.msra.mxu0 0.0
    %1316 = vmatpush.msra.mxu0 0.0
    %1317 = vmatpush.msra.mxu0 0.0
    %1318 = vmatpush.msra.mxu0 %v1295
    %1319 = vmatpush.msra.mxu0 %v1294
    %1320 = vmatpush.msra.mxu0 %v1293
    %1321 = vmatpush.msra.mxu0 %v1292
    %1322 = vmatmul.f32.gmra.mxu0 %v1301
    %v1323 = vpop.f32.mrf.mxu0
    %v1324 = vadd.f32 %v1298, %v1323
    %1325 = vmatmul.f32.gmra.mxu0 %v1304
    %v1326 = vpop.f32.mrf.mxu0
    %v1327 = vadd.f32 %v1298, %v1326
    %1328 = vdwg.mxu0
    %v1329 = vmax.f32 %v1324, 0.0
    %v1330 = vmax.f32 %v1327, 0.0
    %v1331 = vld [vmem:[%s16] sm:$0xff]
    %v1332 = vld [vmem:[%s16 + $0x8] sm:$0xff]
    %v1333 = vld [vmem:[%s16 + $0x10] sm:$0xff]
    %v1334 = vld [vmem:[%s16 + $0x18] sm:$0xff]
    %v1335 = vld [vmem:[%s16 + $0x20] sm:$0xff]
    %v1336 = vld [vmem:[%s16 + $0x28] sm:$0xff]
    %v1337 = vld [vmem:[%s16 + $0x30] sm:$0xff]
    %v1338 = vld [vmem:[%s16 + $0x38] sm:$0xff]
    %v1339 = vld [vmem:[%s17] sm:$0x1]
    %v1341 = vperm.slane %v1339, 0
    %vm1343 = vcmask 523264
    %v1345 = vsel %vm1343, %v1329, 0
    %v1348 = vsel %vm1343, %v1330, 0
    %1350 = vmatpush.msra.mxu0 0.0
    %1351 = vmatpush.msra.mxu0 0.0
    %1352 = vmatpush.msra.mxu0 0.0
    %1353 = vmatpush.msra.mxu0 0.0
    %1354 = vmatpush.msra.mxu0 0.0
    %1355 = vmatpush.msra.mxu0 0.0
    %1356 = vmatpush.msra.mxu0 0.0
    %1357 = vmatpush.msra.mxu0 0.0
    %1358 = vmatpush.msra.mxu0 %v1338
    %1359 = vmatpush.msra.mxu0 %v1337
    %1360 = vmatpush.msra.mxu0 %v1336
    %1361 = vmatpush.msra.mxu0 %v1335
    %1362 = vmatpush.msra.mxu0 %v1334
    %1363 = vmatpush.msra.mxu0 %v1333
    %1364 = vmatpush.msra.mxu0 %v1332
    %1365 = vmatpush.msra.mxu0 %v1331
    %1366 = vmatmul.f32.gmra.mxu0 %v1345
    %v1367 = vpop.f32.mrf.mxu0
    %v1368 = vadd.f32 %v1341, %v1367
    %1369 = vmatmul.f32.gmra.mxu0 %v1348
    %v1370 = vpop.f32.mrf.mxu0
    %v1371 = vadd.f32 %v1341, %v1370
    %1372 = vdwg.mxu0
    %v1373 = vadd.f32 %v1290, %v1368
    %v1374 = vadd.f32 %v1291, %v1371
    %v1375 = vsel %vm134, %v1373, 0.0
    %1376 = vadd.xlane.f32.xlu0 %v1375
    %v1377 = vpop.xlane.xlu0 %1376
    %v1378 = vsel %vm134, %v1374, 0.0
    %1379 = vadd.xlane.f32.xlu0 %v1378
    %v1380 = vpop.xlane.xlu0 %1379
    %v1381 = vmul.f32 %v1377, %v646
    %v1382 = vmul.f32 %v1380, %v646
    %v1383 = vsub.f32 %v1373, %v1381
    %v1384 = vsub.f32 %v1374, %v1382
    %v1385 = vmul.f32 %v1383, %v1383
    %v1386 = vmul.f32 %v1384, %v1384
    %v1387 = vsel %vm134, %v1385, 0.0
    %1388 = vadd.xlane.f32.xlu0 %v1387
    %v1389 = vpop.xlane.xlu0 %1388
    %v1390 = vsel %vm134, %v1386, 0.0
    %1391 = vadd.xlane.f32.xlu0 %v1390
    %v1392 = vpop.xlane.xlu0 %1391
    %v1393 = vmul.f32 %v1389, %v646
    %v1394 = vmul.f32 %v1392, %v646
    %v1395 = vadd.f32 %v1393, 1e-05
    %v1396 = vadd.f32 %v1394, 1e-05
    %v1397 = vrsqrt.pop %v1395
    %v1398 = vmul.f32 %v1397, %v1395
    %v1399 = vmul.f32 %v1398, %v1397
    %v1400 = vmul.f32 0.5, %v1399
    %v1401 = vsub.f32 1.5, %v1400
    %v1402 = vmul.f32 %v1397, %v1401
    %vm1403 = vweird.f32 %v1395
    %vm1404 = vweird.f32 %v1397
    %vm1405 = vmor %vm1403, %vm1404
    %v1406 = vsel %vm1405, %v1397, %v1402
    %v1407 = vrsqrt.pop %v1396
    %v1408 = vmul.f32 %v1407, %v1396
    %v1409 = vmul.f32 %v1408, %v1407
    %v1410 = vmul.f32 0.5, %v1409
    %v1411 = vsub.f32 1.5, %v1410
    %v1412 = vmul.f32 %v1407, %v1411
    %vm1413 = vweird.f32 %v1396
    %vm1414 = vweird.f32 %v1407
    %vm1415 = vmor %vm1413, %vm1414
    %v1416 = vsel %vm1415, %v1407, %v1412
    %v1417 = vmul.f32 %v1383, %v1406
    %v1418 = vmul.f32 %v1384, %v1416
    %v1419 = vld [vmem:[#allocation4] sm:$0x1]
    %v1421 = vperm.slane %v1419, 0
    %v1423 = vmul.f32 %v1417, %v1421
    %v1424 = vmul.f32 %v1418, %v1421
    %v1425 = vld [vmem:[#allocation6] sm:$0x1]
    %v1427 = vperm.slane %v1425, 0
    %v1429 = vadd.f32 %v1423, %v1427
    %v1430 = vadd.f32 %v1424, %v1427
    %1431 = vst.msk [vmem:[%s24] sm:$0xff] %vm134, %v1429
    %1432 = vst.msk [vmem:[%s24 + $0x8] sm:$0xff] %vm134, %v1430
    // Predicated region
    $region110: #{transformer_decoder_forward.4} parent=1 // pred_check
      _
    $region111: #{transformer_decoder_forward.4} parent=1 // pred_check_branch
      %1434 = sbr.rel (0) target = $region113
    $region112: #{transformer_decoder_forward.4} parent=1 // pred_region
      _
    $region113: #{transformer_decoder_forward.4} parent=1 // pred_fallthru
      _
    // Predicated region
    $region114: #{transformer_decoder_forward.4} parent=1 // pred_check
      _
    $region115: #{transformer_decoder_forward.4} parent=1 // pred_check_branch
      %1436 = sbr.rel (0) target = $region117
    $region116: #{transformer_decoder_forward.4} parent=1 // pred_region
      _
    $region117: #{transformer_decoder_forward.4} parent=1 // pred_fallthru
      _
    %1437 = vsyncpa [#allocation3], 1
    %1438 = vsyncpa [#allocation5], 1

</llo_original>
